<compile_context>
chip_gen: v7x
topology: tpu7x:2x2x1
jax: 0.10.0
libtpu: 0.0.40
codegen_flags: <defaults>
</compile_context>

<pallas_src>
import functools
import math

import jax
import jax.numpy as jnp
from jax.experimental import pallas as pl
from jax.experimental.pallas import tpu as pltpu


# --------------------------------------------------------------------------- host-side constants
def _interp_matrix(out_size, in_size):
    """Bilinear (align_corners=True) interpolation matrix, shape (out_size, in_size)."""
    ratio = (in_size - 1) / (out_size - 1) if out_size > 1 else 0.0   # guard: out_size == 1
    src = jnp.arange(out_size, dtype=jnp.float32) * ratio
    j = jnp.arange(in_size, dtype=jnp.float32)
    return jnp.maximum(0.0, 1.0 - jnp.abs(src[:, None] - j[None, :]))


def _pool_matrix(n):
    """2x average-pool matrix, shape (n//2, n) with two 0.5 entries per row."""
    rows = jnp.arange(n // 2)
    cols = jnp.arange(n)
    return ((cols[None, :] // 2) == rows[:, None]).astype(jnp.float32) * 0.5


# --------------------------------------------------------------------------- fused Pallas kernel
def _fused_kernel(x_ref, a_ref, v_ref, b_ref, gs_ref, gst0_ref, gc0_ref,
                  gst1_ref, gc1_ref, pr_ref, pc_ref,
                  c0_ref, c1_ref, ct_ref, sc_ref,
                  f0_ref, f1_ref, s0_ref, s1_ref, tr_ref, pb_ref,
                  *, hf, wf, cdim, ks):
    """Fused resize + patchify-conv + bias + L2-normalize + 2x2 pool + point sampling + head.

    x: (3*H, W) f32 frame (rows = (ci, h)); a: (ks*hf, 3*H) bf16 permuted/block-diag vertical
    resize; v: (ks, W, wf*cdim) bf16 folding horizontal resize * conv weights * 2/255;
    b: (1, wf*cdim) bias (with the "-1" offset folded in); gs/gst0: grouped-lane sum / broadcast
    matrices (level 0); gst1: grouped-lane broadcast (level 1); gc0/gc1: strided grouped-lane
    reduce matrices (sum over w keeping c); pr/pc: row / grouped-lane pool matrices;
    c0/c1: (P*N, 2) sample coordinates in level-0 / level-1 feature-pixel scale;
    ct: (N, 2) query coords at feature scale; sc: (1, 2) stride*scale_to_orig.
    Outputs: f0 (hf, wf*cdim) normalized fmap, f1 (hf/2, (wf/2)*cdim) pooled fmap,
    s0/s1 (P*N, cdim) sampled support features, tr (N, 2) tracks, pb (N, 1) visibility prob.
    """
    # ---------------- encode: resize + conv + bias + L2-normalize + pool ----------------
    xb = x_ref[...].astype(jnp.bfloat16)
    t1 = jnp.dot(a_ref[...], xb, preferred_element_type=jnp.float32)        # (ks*hf, W)

    acc = jnp.zeros((hf, wf * cdim), jnp.float32)
    for k in range(ks):                                                      # unrolled, ks dots
        tk = t1[k * hf:(k + 1) * hf, :].astype(jnp.bfloat16)
        acc = acc + jnp.dot(tk, v_ref[k], preferred_element_type=jnp.float32)

    f = acc + b_ref[...]                                                     # (hf, wf*cdim)
    # channel-wise L2 normalize (F.normalize, eps=1e-12); grouped-lane reduce via 0/1 matmul
    sq = f * f
    ss = jnp.dot(sq, gs_ref[...], preferred_element_type=jnp.float32)        # (hf, wf)
    inv = 1.0 / jnp.maximum(jnp.sqrt(ss), 1e-12)
    invb = jnp.dot(inv, gst0_ref[...], preferred_element_type=jnp.float32)   # (hf, wf*cdim)
    y0 = f * invb
    f0_ref[...] = y0

    # 2x2 average pool: rows via pr, grouped lanes via pc
    p = jnp.dot(pr_ref[...], y0, preferred_element_type=jnp.float32)         # (hf/2, wf*cdim)
    y1 = jnp.dot(p, pc_ref[...], preferred_element_type=jnp.float32)         # (hf/2, (wf/2)*cdim)
    f1_ref[...] = y1

    # ---------------- bilinear point sampling (align_corners, border padding) ----------------
    def samp(c_ref, fmap, gst_ref, gc_ref, wdim, hdim):
        # clamp == padding_mode="border" of CoTracker's bilinear_sampler
        x = jnp.clip(c_ref[:, 0:1], 0.0, float(wdim - 1))                    # (PN, 1)
        yy = jnp.clip(c_ref[:, 1:2], 0.0, float(hdim - 1))
        gx = jax.lax.broadcasted_iota(jnp.int32, (1, wdim), 1).astype(jnp.float32)
        gy = jax.lax.broadcasted_iota(jnp.int32, (1, hdim), 1).astype(jnp.float32)
        wx = jnp.maximum(0.0, 1.0 - jnp.abs(x - gx))                         # (PN, wdim)
        wy = jnp.maximum(0.0, 1.0 - jnp.abs(yy - gy))                        # (PN, hdim)
        # row reduce:   z[p, w*C + c] = sum_h wy[p, h] * fmap[h, w*C + c]
        z = jnp.dot(wy.astype(jnp.bfloat16), fmap.astype(jnp.bfloat16),
                    preferred_element_type=jnp.float32)                      # (PN, wdim*C)
        # column weights broadcast over the C-group lanes (0/1 matrix -> exact)
        wxb = jnp.dot(wx, gst_ref[...], preferred_element_type=jnp.float32)  # (PN, wdim*C)
        # strided grouped-lane reduce: sum over w keeping c (0/1 matrix)
        return jnp.dot((z * wxb).astype(jnp.bfloat16), gc_ref[...],
                       preferred_element_type=jnp.float32)                   # (PN, C)

    s0_ref[...] = samp(c0_ref, y0, gst0_ref, gc0_ref, wf, hf)
    s1_ref[...] = samp(c1_ref, y1, gst1_ref, gc1_ref, wf // 2, hf // 2)

    # ---------------- head ----------------
    # tracks = coords * (stride * scale_to_orig)
    tr_ref[...] = ct_ref[...] * sc_ref[...]
    # first frame: vis = conf = 10  =>  prob = sigmoid(10)^2 (compile-time constant)
    sig10 = 1.0 / (1.0 + math.exp(-10.0))
    pb_ref[...] = jnp.full(pb_ref.shape, sig10 * sig10, jnp.float32)


# --------------------------------------------------------------------------- pallas_call wrapper
def _fused_call(x2d, samp0, samp1, ct, out_scale, consts, *, hf, wf, cdim):
    B, h3, w = x2d.shape
    PN = samp0.shape[1]
    N = ct.shape[1]
    ks = consts["v"].shape[0]
    kern = functools.partial(_fused_kernel, hf=hf, wf=wf, cdim=cdim, ks=ks)
    return pl.pallas_call(
        kern,
        out_shape=(
            jax.ShapeDtypeStruct((B, hf, wf * cdim), jnp.float32),
            jax.ShapeDtypeStruct((B, hf // 2, (wf // 2) * cdim), jnp.float32),
            jax.ShapeDtypeStruct((B, PN, cdim), jnp.float32),
            jax.ShapeDtypeStruct((B, PN, cdim), jnp.float32),
            jax.ShapeDtypeStruct((B, N, 2), jnp.float32),
            jax.ShapeDtypeStruct((B, N, 1), jnp.float32),
        ),
        grid=(B,),
        in_specs=[
            pl.BlockSpec((None, h3, w), lambda b: (b, 0, 0)),
            pl.BlockSpec(consts["a"].shape, lambda b: (0, 0)),
            pl.BlockSpec(consts["v"].shape, lambda b: (0, 0, 0)),
            pl.BlockSpec(consts["bias"].shape, lambda b: (0, 0)),
            pl.BlockSpec(consts["gs"].shape, lambda b: (0, 0)),
            pl.BlockSpec(consts["gst0"].shape, lambda b: (0, 0)),
            pl.BlockSpec(consts["gc0"].shape, lambda b: (0, 0)),
            pl.BlockSpec(consts["gst1"].shape, lambda b: (0, 0)),
            pl.BlockSpec(consts["gc1"].shape, lambda b: (0, 0)),
            pl.BlockSpec(consts["pr"].shape, lambda b: (0, 0)),
            pl.BlockSpec(consts["pc"].shape, lambda b: (0, 0)),
            pl.BlockSpec((None, PN, 2), lambda b: (b, 0, 0)),
            pl.BlockSpec((None, PN, 2), lambda b: (b, 0, 0)),
            pl.BlockSpec((None, N, 2), lambda b: (b, 0, 0)),
            pl.BlockSpec((1, 2), lambda b: (0, 0)),
        ],
        out_specs=(
            pl.BlockSpec((None, hf, wf * cdim), lambda b: (b, 0, 0)),
            pl.BlockSpec((None, hf // 2, (wf // 2) * cdim), lambda b: (b, 0, 0)),
            pl.BlockSpec((None, PN, cdim), lambda b: (b, 0, 0)),
            pl.BlockSpec((None, PN, cdim), lambda b: (b, 0, 0)),
            pl.BlockSpec((None, N, 2), lambda b: (b, 0, 0)),
            pl.BlockSpec((None, N, 1), lambda b: (b, 0, 0)),
        ),
        compiler_params=pltpu.CompilerParams(dimension_semantics=("parallel",)),
    )(x2d, consts["a"], consts["v"], consts["bias"], consts["gs"], consts["gst0"],
      consts["gc0"], consts["gst1"], consts["gc1"], consts["pr"], consts["pc"],
      samp0, samp1, ct, out_scale)


# --------------------------------------------------------------------------- jitted pipeline
def _first_frame_pipeline(frame, queries, consts, *, stride, interp_shape,
                          latent_dim, window_len, visibility_threshold):
    B, Cin, H, W = frame.shape
    mh, mw = interp_shape
    s = stride
    hf, wf = mh // s, mw // s
    N = queries.shape[1]
    P = consts["deltas"].shape[0]

    x2d = frame.reshape(B, Cin * H, W)

    scale_to_model = jnp.array([(mw - 1) / max(W - 1, 1), (mh - 1) / max(H - 1, 1)], jnp.float32)
    scale_to_orig = jnp.array([(W - 1) / max(mw - 1, 1), (H - 1) / max(mh - 1, 1)], jnp.float32)
    q_feat = queries.astype(jnp.float32) * scale_to_model / s            # level-0 feature scale

    deltas = consts["deltas"]
    samp0 = (q_feat[:, None, :, :] + deltas[None, :, None, :]).reshape(B, P * N, 2)
    samp1 = (0.5 * q_feat[:, None, :, :] + deltas[None, :, None, :]).reshape(B, P * N, 2)
    out_scale = (s * scale_to_orig).reshape(1, 2)

    # ---- single fused kernel: encode + both pyramid-level samplings + head ----
    f0, f1, sup0, sup1, tracks, prob = _fused_call(
        x2d, samp0, samp1, q_feat, out_scale, consts, hf=hf, wf=wf, cdim=latent_dim)
    visibles = prob > visibility_threshold

    # NCHW copies kept only as tracker state (matches the reference fmaps_pyramid layout)
    fmap0_chw = f0.reshape(B, hf, wf, latent_dim).transpose(0, 3, 1, 2)
    fmap1_chw = f1.reshape(B, hf // 2, wf // 2, latent_dim).transpose(0, 3, 1, 2)

    # ---- first-frame tracker state (shapes follow the reference module) ----
    coords = jnp.broadcast_to(q_feat[:, None], (B, window_len, N, 2))
    vis = jnp.full((B, window_len, N, 1), 10.0, jnp.float32)
    conf = jnp.full((B, window_len, N, 1), 10.0, jnp.float32)
    pyr0 = jnp.broadcast_to(fmap0_chw[:, None], (B, window_len, latent_dim, hf, wf))
    pyr1 = jnp.broadcast_to(fmap1_chw[:, None], (B, window_len, latent_dim, hf // 2, wf // 2))
    sup0 = sup0.reshape(B, 1, P, N, latent_dim)
    sup1 = sup1.reshape(B, 1, P, N, latent_dim)
    return tracks, visibles, coords, vis, conf, pyr0, pyr1, sup0, sup1


# --------------------------------------------------------------------------- predictor
class CoTrackerRealTimePredictorPallas:
    """JAX/Pallas port of CoTrackerRealTimePredictor (first-frame tracking path)."""

    def __init__(self, window_len=4, stride=4, corr_radius=3, corr_levels=2,
                 latent_dim=32, model_resolution=(32, 32), seed=42):
        assert window_len >= 2
        assert corr_levels == 2, "the fused kernel assumes a 2-level feature pyramid"
        assert model_resolution[0] % (2 * stride) == 0 and model_resolution[1] % (2 * stride) == 0
        self.window_len = window_len
        self.stride = stride
        self.corr_radius = corr_radius
        self.corr_levels = corr_levels
        self.latent_dim = latent_dim
        self.interp_shape = tuple(model_resolution)
        self.visibility_threshold = 0.6

        # TODO(synk): the real fnet is a deep BasicEncoder CNN (source not provided); stand-in is a
        # single stride-4 (= model stride) patchify conv with deterministic weights, followed by the
        # same channel-wise L2 normalization as the reference forward.
        kw, kb = jax.random.split(jax.random.PRNGKey(seed))
        kdim = 3 * stride * stride
        self.fnet_w = jax.random.normal(kw, (kdim, latent_dim), jnp.float32) * (kdim ** -0.5)
        self.fnet_b = jax.random.normal(kb, (1, latent_dim), jnp.float32) * 0.01

        # (H, W)-independent constants
        r = corr_radius
        offs = jnp.arange(-r, r + 1, dtype=jnp.float32)
        oy, ox = jnp.meshgrid(offs, offs, indexing="ij")
        self._deltas = jnp.stack([ox.reshape(-1), oy.reshape(-1)], axis=-1)   # (P, 2) = (dx, dy)

        self._const_cache = {}
        self._pipeline = jax.jit(functools.partial(
            _first_frame_pipeline,
            stride=self.stride, interp_shape=self.interp_shape, latent_dim=self.latent_dim,
            window_len=self.window_len, visibility_threshold=self.visibility_threshold))
        self.reset()

    def reset(self):
        self.is_first_frame = True
        self.fmaps_pyramid = []
        self.track_feat_support_pyramid = []
        self.coords = None
        self.vis = None
        self.conf = None

    def _constants(self, H, W):
        key = (H, W)
        if key in self._const_cache:
            return self._const_cache[key]
        mh, mw = self.interp_shape
        s = self.stride
        hf, wf = mh // s, mw // s
        C = self.latent_dim
        scale = 2.0 / 255.0

        A = _interp_matrix(mh, H)                       # (mh, H)  vertical resize
        Bt = _interp_matrix(mw, W).T                    # (W, mw)  horizontal resize
        # block-diagonal vertical resize with rows ordered (dy, ci, hf)
        A_r = A.reshape(hf, s, H)                       # (hf, dy, h)
        a_perm = jnp.einsum('fyh,cd->ycfdh', A_r, jnp.eye(3, dtype=jnp.float32))
        a_perm = a_perm.reshape(s * 3 * hf, 3 * H)
        # V[(dy, ci)] folds horizontal resize, the 2/255 scaling and the conv weights
        Wc = self.fnet_w.reshape(3, s, s, C)            # (ci, dy, dx, c_out)
        Bt_r = Bt.reshape(W, wf, s)                     # (w, wf, dx)
        v = scale * jnp.einsum('wfx,cyxo->ycwfo', Bt_r, Wc)          # (dy, ci, w, wf, c_out)
        v = v.reshape(s * 3, W, wf * C)
        # bias with the "-1" offset of 2*(x/255)-1 folded in (interp rows sum to 1 -> exact)
        bias = self.fnet_b - self.fnet_w.sum(axis=0, keepdims=True)  # (1, C)
        bias = jnp.tile(bias, (1, wf))                               # (1, wf*C)
        # grouped-lane sum / broadcast, grouped-lane strided reduce and pooling matrices
        gs = jnp.repeat(jnp.eye(wf, dtype=jnp.float32), C, axis=0)        # (wf*C, wf)
        gst0 = gs.T                                                       # (wf, wf*C)
        gc0 = jnp.tile(jnp.eye(C, dtype=jnp.float32), (wf, 1))            # (wf*C, C)
        gs1 = jnp.repeat(jnp.eye(wf // 2, dtype=jnp.float32), C, axis=0)  # ((wf/2)*C, wf/2)
        gst1 = gs1.T                                                      # (wf/2, (wf/2)*C)
        gc1 = jnp.tile(jnp.eye(C, dtype=jnp.float32), (wf // 2, 1))       # ((wf/2)*C, C)
        pr = _pool_matrix(hf)                                             # (hf/2, hf)
        pc = jnp.kron(_pool_matrix(wf).T, jnp.eye(C, dtype=jnp.float32))  # (wf*C, (wf/2)*C)

        consts = {
            "a": a_perm.astype(jnp.bfloat16),
            "v": v.astype(jnp.bfloat16),
            "bias": bias.astype(jnp.float32),
            "gs": gs,
            "gst0": gst0,
            "gc0": gc0.astype(jnp.bfloat16),
            "gst1": gst1,
            "gc1": gc1.astype(jnp.bfloat16),
            "pr": pr,
            "pc": pc,
            "deltas": self._deltas,
        }
        self._const_cache[key] = consts
        return consts

    def forward(self, frame, queries=None):
        if self.coords is None and queries is None:
            return None, None
        if not self.is_first_frame:
            # TODO(synk): subsequent frames need forward_window (CoTrackerThreeOnline's iterative
            # transformer updater), whose source is not provided; only the first-frame path exists.
            raise NotImplementedError("only the first-frame tracking path is implemented")

        B, Cin, H, W = frame.shape
        assert Cin == 3
        consts = self._constants(H, W)
        (tracks, visibles, coords, vis, conf, pyr0, pyr1, sup0, sup1) = self._pipeline(
            frame, queries, consts)

        self.coords, self.vis, self.conf = coords, vis, conf
        self.fmaps_pyramid = [pyr0, pyr1]
        self.track_feat_support_pyramid = [sup0, sup1]
        self.is_first_frame = False
        return tracks, visibles


# --------------------------------------------------------------------------- demo
if __name__ == "__main__":
    key = jax.random.PRNGKey(0)
    k_frame, k_query = jax.random.split(key)

    B, H, W = 1, 48, 64          # original frame resolution (small synthetic shapes)
    N = 5                        # number of query points
    frame = jax.random.uniform(k_frame, (B, 3, H, W), jnp.float32, 0.0, 255.0)
    queries = jax.random.uniform(k_query, (B, N, 2), jnp.float32) * jnp.array(
        [W - 1, H - 1], jnp.float32)

    predictor = CoTrackerRealTimePredictorPallas(
        window_len=4, stride=4, corr_radius=3, corr_levels=2,
        latent_dim=32, model_resolution=(32, 32))

    tracks, visibles = predictor.forward(frame, queries)
    (tracks, visibles) = jax.block_until_ready((tracks, visibles))

    assert tracks.shape == (B, N, 2)
    assert visibles.shape == (B, N, 1)
    # First-frame semantics: returned tracks equal the query coordinates; vis*conf = sigmoid(10)^2.
    assert jnp.allclose(tracks, queries, atol=1e-3)
    assert bool(jnp.all(visibles))
    # internal state sanity (shapes follow the reference module)
    assert predictor.coords.shape == (B, 4, N, 2)
    assert predictor.track_feat_support_pyramid[0].shape == (B, 1, 49, N, 32)
    assert predictor.track_feat_support_pyramid[1].shape == (B, 1, 49, N, 32)
    assert predictor.fmaps_pyramid[0].shape == (B, 4, 32, 8, 8)
    assert predictor.fmaps_pyramid[1].shape == (B, 4, 32, 4, 4)

    print("KERNEL_OK")
</pallas_src>

<mosaic_0001>
module attributes {stable_mosaic.version = 11 : i64} {
  func.func @_fused_kernel(%arg0: i32, %arg1: memref<1x144x64xf32, #tpu.memory_space<vmem>>, %arg2: memref<96x144xbf16, #tpu.memory_space<vmem>>, %arg3: memref<12x64x256xbf16, #tpu.memory_space<vmem>>, %arg4: memref<1x256xf32, #tpu.memory_space<vmem>>, %arg5: memref<256x8xf32, #tpu.memory_space<vmem>>, %arg6: memref<8x256xf32, #tpu.memory_space<vmem>>, %arg7: memref<256x32xbf16, #tpu.memory_space<vmem>>, %arg8: memref<4x128xf32, #tpu.memory_space<vmem>>, %arg9: memref<128x32xbf16, #tpu.memory_space<vmem>>, %arg10: memref<4x8xf32, #tpu.memory_space<vmem>>, %arg11: memref<256x128xf32, #tpu.memory_space<vmem>>, %arg12: memref<1x245x2xf32, #tpu.memory_space<vmem>>, %arg13: memref<1x245x2xf32, #tpu.memory_space<vmem>>, %arg14: memref<1x5x2xf32, #tpu.memory_space<vmem>>, %arg15: memref<1x2xf32, #tpu.memory_space<vmem>>, %arg16: memref<1x8x256xf32, #tpu.memory_space<vmem>>, %arg17: memref<1x4x128xf32, #tpu.memory_space<vmem>>, %arg18: memref<1x245x32xf32, #tpu.memory_space<vmem>>, %arg19: memref<1x245x32xf32, #tpu.memory_space<vmem>>, %arg20: memref<1x5x2xf32, #tpu.memory_space<vmem>>, %arg21: memref<1x5x1xf32, #tpu.memory_space<vmem>>) attributes {dimension_semantics = [#tpu.dimension_semantics<parallel>], iteration_bounds = array<i64: 1>, scalar_prefetch = 0 : i64, scratch_operands = 0 : i64, tpu.core_type = #tpu.core_type<tc>, window_params = [{transform_indices = @transform_0, window_bounds = array<i64: 1, 144, 64>}, {pipeline_mode = #tpu.pipeline_mode<synchronous>, transform_indices = @transform_1, window_bounds = array<i64: 96, 144>}, {pipeline_mode = #tpu.pipeline_mode<synchronous>, transform_indices = @transform_2, window_bounds = array<i64: 12, 64, 256>}, {pipeline_mode = #tpu.pipeline_mode<synchronous>, transform_indices = @transform_3, window_bounds = array<i64: 1, 256>}, {pipeline_mode = #tpu.pipeline_mode<synchronous>, transform_indices = @transform_4, window_bounds = array<i64: 256, 8>}, {pipeline_mode = #tpu.pipeline_mode<synchronous>, transform_indices = @transform_5, window_bounds = array<i64: 8, 256>}, {pipeline_mode = #tpu.pipeline_mode<synchronous>, transform_indices = @transform_6, window_bounds = array<i64: 256, 32>}, {pipeline_mode = #tpu.pipeline_mode<synchronous>, transform_indices = @transform_7, window_bounds = array<i64: 4, 128>}, {pipeline_mode = #tpu.pipeline_mode<synchronous>, transform_indices = @transform_8, window_bounds = array<i64: 128, 32>}, {pipeline_mode = #tpu.pipeline_mode<synchronous>, transform_indices = @transform_9, window_bounds = array<i64: 4, 8>}, {pipeline_mode = #tpu.pipeline_mode<synchronous>, transform_indices = @transform_10, window_bounds = array<i64: 256, 128>}, {transform_indices = @transform_11, window_bounds = array<i64: 1, 245, 2>}, {transform_indices = @transform_12, window_bounds = array<i64: 1, 245, 2>}, {transform_indices = @transform_13, window_bounds = array<i64: 1, 5, 2>}, {pipeline_mode = #tpu.pipeline_mode<synchronous>, transform_indices = @transform_14, window_bounds = array<i64: 1, 2>}, {transform_indices = @transform_15, window_bounds = array<i64: 1, 8, 256>}, {transform_indices = @transform_16, window_bounds = array<i64: 1, 4, 128>}, {transform_indices = @transform_17, window_bounds = array<i64: 1, 245, 32>}, {transform_indices = @transform_18, window_bounds = array<i64: 1, 245, 32>}, {transform_indices = @transform_19, window_bounds = array<i64: 1, 5, 2>}, {transform_indices = @transform_20, window_bounds = array<i64: 1, 5, 1>}]} {
    %c0 = arith.constant 0 : index
    %c0_0 = arith.constant 0 : index
    %c0_1 = arith.constant 0 : index
    %0 = vector.load %arg1[%c0, %c0_0, %c0_1] : memref<1x144x64xf32, #tpu.memory_space<vmem>>, vector<1x144x64xf32>
    %1 = vector.shape_cast %0 : vector<1x144x64xf32> to vector<144x64xf32>
    %2 = arith.truncf %1 : vector<144x64xf32> to vector<144x64xbf16>
    %c0_2 = arith.constant 0 : index
    %c0_3 = arith.constant 0 : index
    %3 = vector.load %arg2[%c0_2, %c0_3] : memref<96x144xbf16, #tpu.memory_space<vmem>>, vector<96x144xbf16>
    %cst = arith.constant dense<0.000000e+00> : vector<96x64xf32>
    %4 = tpu.matmul %3, %2, %cst {dimension_numbers = #tpu.dot_dimension_numbers<[1], [0], [0], [1], [0, 0, 1, 1], [], []>} : vector<96x144xbf16>, vector<144x64xbf16>, vector<96x64xf32> -> vector<96x64xf32>
    %cst_4 = arith.constant 0.000000e+00 : f32
    %5 = vector.broadcast %cst_4 : f32 to vector<8x256xf32>
    %6 = vector.extract_strided_slice %4 {offsets = [0, 0], sizes = [8, 64], strides = [1, 1]} : vector<96x64xf32> to vector<8x64xf32>
    %7 = arith.truncf %6 : vector<8x64xf32> to vector<8x64xbf16>
    %c0_5 = arith.constant 0 : index
    %c0_6 = arith.constant 0 : index
    %c0_7 = arith.constant 0 : index
    %8 = vector.load %arg3[%c0_5, %c0_6, %c0_7] : memref<12x64x256xbf16, #tpu.memory_space<vmem>>, vector<1x64x256xbf16>
    %9 = vector.shape_cast %8 : vector<1x64x256xbf16> to vector<64x256xbf16>
    %cst_8 = arith.constant dense<0.000000e+00> : vector<8x256xf32>
    %10 = tpu.matmul %7, %9, %cst_8 {dimension_numbers = #tpu.dot_dimension_numbers<[1], [0], [0], [1], [0, 0, 1, 1], [], []>} : vector<8x64xbf16>, vector<64x256xbf16>, vector<8x256xf32> -> vector<8x256xf32>
    %11 = arith.addf %5, %10 : vector<8x256xf32>
    %12 = vector.extract_strided_slice %4 {offsets = [8, 0], sizes = [8, 64], strides = [1, 1]} : vector<96x64xf32> to vector<8x64xf32>
    %13 = arith.truncf %12 : vector<8x64xf32> to vector<8x64xbf16>
    %c1 = arith.constant 1 : index
    %c0_9 = arith.constant 0 : index
    %c0_10 = arith.constant 0 : index
    %14 = vector.load %arg3[%c1, %c0_9, %c0_10] : memref<12x64x256xbf16, #tpu.memory_space<vmem>>, vector<1x64x256xbf16>
    %15 = vector.shape_cast %14 : vector<1x64x256xbf16> to vector<64x256xbf16>
    %cst_11 = arith.constant dense<0.000000e+00> : vector<8x256xf32>
    %16 = tpu.matmul %13, %15, %cst_11 {dimension_numbers = #tpu.dot_dimension_numbers<[1], [0], [0], [1], [0, 0, 1, 1], [], []>} : vector<8x64xbf16>, vector<64x256xbf16>, vector<8x256xf32> -> vector<8x256xf32>
    %17 = arith.addf %11, %16 : vector<8x256xf32>
    %18 = vector.extract_strided_slice %4 {offsets = [16, 0], sizes = [8, 64], strides = [1, 1]} : vector<96x64xf32> to vector<8x64xf32>
    %19 = arith.truncf %18 : vector<8x64xf32> to vector<8x64xbf16>
    %c2 = arith.constant 2 : index
    %c0_12 = arith.constant 0 : index
    %c0_13 = arith.constant 0 : index
    %20 = vector.load %arg3[%c2, %c0_12, %c0_13] : memref<12x64x256xbf16, #tpu.memory_space<vmem>>, vector<1x64x256xbf16>
    %21 = vector.shape_cast %20 : vector<1x64x256xbf16> to vector<64x256xbf16>
    %cst_14 = arith.constant dense<0.000000e+00> : vector<8x256xf32>
    %22 = tpu.matmul %19, %21, %cst_14 {dimension_numbers = #tpu.dot_dimension_numbers<[1], [0], [0], [1], [0, 0, 1, 1], [], []>} : vector<8x64xbf16>, vector<64x256xbf16>, vector<8x256xf32> -> vector<8x256xf32>
    %23 = arith.addf %17, %22 : vector<8x256xf32>
    %24 = vector.extract_strided_slice %4 {offsets = [24, 0], sizes = [8, 64], strides = [1, 1]} : vector<96x64xf32> to vector<8x64xf32>
    %25 = arith.truncf %24 : vector<8x64xf32> to vector<8x64xbf16>
    %c3 = arith.constant 3 : index
    %c0_15 = arith.constant 0 : index
    %c0_16 = arith.constant 0 : index
    %26 = vector.load %arg3[%c3, %c0_15, %c0_16] : memref<12x64x256xbf16, #tpu.memory_space<vmem>>, vector<1x64x256xbf16>
    %27 = vector.shape_cast %26 : vector<1x64x256xbf16> to vector<64x256xbf16>
    %cst_17 = arith.constant dense<0.000000e+00> : vector<8x256xf32>
    %28 = tpu.matmul %25, %27, %cst_17 {dimension_numbers = #tpu.dot_dimension_numbers<[1], [0], [0], [1], [0, 0, 1, 1], [], []>} : vector<8x64xbf16>, vector<64x256xbf16>, vector<8x256xf32> -> vector<8x256xf32>
    %29 = arith.addf %23, %28 : vector<8x256xf32>
    %30 = vector.extract_strided_slice %4 {offsets = [32, 0], sizes = [8, 64], strides = [1, 1]} : vector<96x64xf32> to vector<8x64xf32>
    %31 = arith.truncf %30 : vector<8x64xf32> to vector<8x64xbf16>
    %c4 = arith.constant 4 : index
    %c0_18 = arith.constant 0 : index
    %c0_19 = arith.constant 0 : index
    %32 = vector.load %arg3[%c4, %c0_18, %c0_19] : memref<12x64x256xbf16, #tpu.memory_space<vmem>>, vector<1x64x256xbf16>
    %33 = vector.shape_cast %32 : vector<1x64x256xbf16> to vector<64x256xbf16>
    %cst_20 = arith.constant dense<0.000000e+00> : vector<8x256xf32>
    %34 = tpu.matmul %31, %33, %cst_20 {dimension_numbers = #tpu.dot_dimension_numbers<[1], [0], [0], [1], [0, 0, 1, 1], [], []>} : vector<8x64xbf16>, vector<64x256xbf16>, vector<8x256xf32> -> vector<8x256xf32>
    %35 = arith.addf %29, %34 : vector<8x256xf32>
    %36 = vector.extract_strided_slice %4 {offsets = [40, 0], sizes = [8, 64], strides = [1, 1]} : vector<96x64xf32> to vector<8x64xf32>
    %37 = arith.truncf %36 : vector<8x64xf32> to vector<8x64xbf16>
    %c5 = arith.constant 5 : index
    %c0_21 = arith.constant 0 : index
    %c0_22 = arith.constant 0 : index
    %38 = vector.load %arg3[%c5, %c0_21, %c0_22] : memref<12x64x256xbf16, #tpu.memory_space<vmem>>, vector<1x64x256xbf16>
    %39 = vector.shape_cast %38 : vector<1x64x256xbf16> to vector<64x256xbf16>
    %cst_23 = arith.constant dense<0.000000e+00> : vector<8x256xf32>
    %40 = tpu.matmul %37, %39, %cst_23 {dimension_numbers = #tpu.dot_dimension_numbers<[1], [0], [0], [1], [0, 0, 1, 1], [], []>} : vector<8x64xbf16>, vector<64x256xbf16>, vector<8x256xf32> -> vector<8x256xf32>
    %41 = arith.addf %35, %40 : vector<8x256xf32>
    %42 = vector.extract_strided_slice %4 {offsets = [48, 0], sizes = [8, 64], strides = [1, 1]} : vector<96x64xf32> to vector<8x64xf32>
    %43 = arith.truncf %42 : vector<8x64xf32> to vector<8x64xbf16>
    %c6 = arith.constant 6 : index
    %c0_24 = arith.constant 0 : index
    %c0_25 = arith.constant 0 : index
    %44 = vector.load %arg3[%c6, %c0_24, %c0_25] : memref<12x64x256xbf16, #tpu.memory_space<vmem>>, vector<1x64x256xbf16>
    %45 = vector.shape_cast %44 : vector<1x64x256xbf16> to vector<64x256xbf16>
    %cst_26 = arith.constant dense<0.000000e+00> : vector<8x256xf32>
    %46 = tpu.matmul %43, %45, %cst_26 {dimension_numbers = #tpu.dot_dimension_numbers<[1], [0], [0], [1], [0, 0, 1, 1], [], []>} : vector<8x64xbf16>, vector<64x256xbf16>, vector<8x256xf32> -> vector<8x256xf32>
    %47 = arith.addf %41, %46 : vector<8x256xf32>
    %48 = vector.extract_strided_slice %4 {offsets = [56, 0], sizes = [8, 64], strides = [1, 1]} : vector<96x64xf32> to vector<8x64xf32>
    %49 = arith.truncf %48 : vector<8x64xf32> to vector<8x64xbf16>
    %c7 = arith.constant 7 : index
    %c0_27 = arith.constant 0 : index
    %c0_28 = arith.constant 0 : index
    %50 = vector.load %arg3[%c7, %c0_27, %c0_28] : memref<12x64x256xbf16, #tpu.memory_space<vmem>>, vector<1x64x256xbf16>
    %51 = vector.shape_cast %50 : vector<1x64x256xbf16> to vector<64x256xbf16>
    %cst_29 = arith.constant dense<0.000000e+00> : vector<8x256xf32>
    %52 = tpu.matmul %49, %51, %cst_29 {dimension_numbers = #tpu.dot_dimension_numbers<[1], [0], [0], [1], [0, 0, 1, 1], [], []>} : vector<8x64xbf16>, vector<64x256xbf16>, vector<8x256xf32> -> vector<8x256xf32>
    %53 = arith.addf %47, %52 : vector<8x256xf32>
    %54 = vector.extract_strided_slice %4 {offsets = [64, 0], sizes = [8, 64], strides = [1, 1]} : vector<96x64xf32> to vector<8x64xf32>
    %55 = arith.truncf %54 : vector<8x64xf32> to vector<8x64xbf16>
    %c8 = arith.constant 8 : index
    %c0_30 = arith.constant 0 : index
    %c0_31 = arith.constant 0 : index
    %56 = vector.load %arg3[%c8, %c0_30, %c0_31] : memref<12x64x256xbf16, #tpu.memory_space<vmem>>, vector<1x64x256xbf16>
    %57 = vector.shape_cast %56 : vector<1x64x256xbf16> to vector<64x256xbf16>
    %cst_32 = arith.constant dense<0.000000e+00> : vector<8x256xf32>
    %58 = tpu.matmul %55, %57, %cst_32 {dimension_numbers = #tpu.dot_dimension_numbers<[1], [0], [0], [1], [0, 0, 1, 1], [], []>} : vector<8x64xbf16>, vector<64x256xbf16>, vector<8x256xf32> -> vector<8x256xf32>
    %59 = arith.addf %53, %58 : vector<8x256xf32>
    %60 = vector.extract_strided_slice %4 {offsets = [72, 0], sizes = [8, 64], strides = [1, 1]} : vector<96x64xf32> to vector<8x64xf32>
    %61 = arith.truncf %60 : vector<8x64xf32> to vector<8x64xbf16>
    %c9 = arith.constant 9 : index
    %c0_33 = arith.constant 0 : index
    %c0_34 = arith.constant 0 : index
    %62 = vector.load %arg3[%c9, %c0_33, %c0_34] : memref<12x64x256xbf16, #tpu.memory_space<vmem>>, vector<1x64x256xbf16>
    %63 = vector.shape_cast %62 : vector<1x64x256xbf16> to vector<64x256xbf16>
    %cst_35 = arith.constant dense<0.000000e+00> : vector<8x256xf32>
    %64 = tpu.matmul %61, %63, %cst_35 {dimension_numbers = #tpu.dot_dimension_numbers<[1], [0], [0], [1], [0, 0, 1, 1], [], []>} : vector<8x64xbf16>, vector<64x256xbf16>, vector<8x256xf32> -> vector<8x256xf32>
    %65 = arith.addf %59, %64 : vector<8x256xf32>
    %66 = vector.extract_strided_slice %4 {offsets = [80, 0], sizes = [8, 64], strides = [1, 1]} : vector<96x64xf32> to vector<8x64xf32>
    %67 = arith.truncf %66 : vector<8x64xf32> to vector<8x64xbf16>
    %c10 = arith.constant 10 : index
    %c0_36 = arith.constant 0 : index
    %c0_37 = arith.constant 0 : index
    %68 = vector.load %arg3[%c10, %c0_36, %c0_37] : memref<12x64x256xbf16, #tpu.memory_space<vmem>>, vector<1x64x256xbf16>
    %69 = vector.shape_cast %68 : vector<1x64x256xbf16> to vector<64x256xbf16>
    %cst_38 = arith.constant dense<0.000000e+00> : vector<8x256xf32>
    %70 = tpu.matmul %67, %69, %cst_38 {dimension_numbers = #tpu.dot_dimension_numbers<[1], [0], [0], [1], [0, 0, 1, 1], [], []>} : vector<8x64xbf16>, vector<64x256xbf16>, vector<8x256xf32> -> vector<8x256xf32>
    %71 = arith.addf %65, %70 : vector<8x256xf32>
    %72 = vector.extract_strided_slice %4 {offsets = [88, 0], sizes = [8, 64], strides = [1, 1]} : vector<96x64xf32> to vector<8x64xf32>
    %73 = arith.truncf %72 : vector<8x64xf32> to vector<8x64xbf16>
    %c11 = arith.constant 11 : index
    %c0_39 = arith.constant 0 : index
    %c0_40 = arith.constant 0 : index
    %74 = vector.load %arg3[%c11, %c0_39, %c0_40] : memref<12x64x256xbf16, #tpu.memory_space<vmem>>, vector<1x64x256xbf16>
    %75 = vector.shape_cast %74 : vector<1x64x256xbf16> to vector<64x256xbf16>
    %cst_41 = arith.constant dense<0.000000e+00> : vector<8x256xf32>
    %76 = tpu.matmul %73, %75, %cst_41 {dimension_numbers = #tpu.dot_dimension_numbers<[1], [0], [0], [1], [0, 0, 1, 1], [], []>} : vector<8x64xbf16>, vector<64x256xbf16>, vector<8x256xf32> -> vector<8x256xf32>
    %77 = arith.addf %71, %76 : vector<8x256xf32>
    %c0_42 = arith.constant 0 : index
    %c0_43 = arith.constant 0 : index
    %78 = vector.load %arg4[%c0_42, %c0_43] : memref<1x256xf32, #tpu.memory_space<vmem>>, vector<1x256xf32>
    %79 = vector.broadcast %78 : vector<1x256xf32> to vector<8x256xf32>
    %80 = arith.addf %77, %79 : vector<8x256xf32>
    %81 = arith.mulf %80, %80 : vector<8x256xf32>
    %c0_44 = arith.constant 0 : index
    %c0_45 = arith.constant 0 : index
    %82 = vector.load %arg5[%c0_44, %c0_45] : memref<256x8xf32, #tpu.memory_space<vmem>>, vector<256x8xf32>
    %cst_46 = arith.constant dense<0.000000e+00> : vector<8x8xf32>
    %83 = tpu.matmul %81, %82, %cst_46 {dimension_numbers = #tpu.dot_dimension_numbers<[1], [0], [0], [1], [0, 0, 1, 1], [], []>} : vector<8x256xf32>, vector<256x8xf32>, vector<8x8xf32> -> vector<8x8xf32>
    %84 = math.sqrt %83 : vector<8x8xf32>
    %cst_47 = arith.constant 9.99999996E-13 : f32
    %85 = vector.broadcast %cst_47 : f32 to vector<8x8xf32>
    %86 = arith.maximumf %84, %85 : vector<8x8xf32>
    %cst_48 = arith.constant 1.000000e+00 : f32
    %87 = vector.broadcast %cst_48 : f32 to vector<8x8xf32>
    %88 = arith.divf %87, %86 : vector<8x8xf32>
    %c0_49 = arith.constant 0 : index
    %c0_50 = arith.constant 0 : index
    %89 = vector.load %arg6[%c0_49, %c0_50] : memref<8x256xf32, #tpu.memory_space<vmem>>, vector<8x256xf32>
    %cst_51 = arith.constant dense<0.000000e+00> : vector<8x256xf32>
    %90 = tpu.matmul %88, %89, %cst_51 {dimension_numbers = #tpu.dot_dimension_numbers<[1], [0], [0], [1], [0, 0, 1, 1], [], []>} : vector<8x8xf32>, vector<8x256xf32>, vector<8x256xf32> -> vector<8x256xf32>
    %91 = arith.mulf %80, %90 : vector<8x256xf32>
    %c0_52 = arith.constant 0 : index
    %c0_53 = arith.constant 0 : index
    %c0_54 = arith.constant 0 : index
    %92 = vector.load %arg16[%c0_52, %c0_53, %c0_54] : memref<1x8x256xf32, #tpu.memory_space<vmem>>, vector<1x8x256xf32>
    %93 = vector.shape_cast %92 : vector<1x8x256xf32> to vector<8x256xf32>
    %94 = vector.shape_cast %91 : vector<8x256xf32> to vector<1x8x256xf32>
    tpu.vector_store %arg16[%c0_52, %c0_53, %c0_54], %94 {strides = array<i32>} : memref<1x8x256xf32, #tpu.memory_space<vmem>>, vector<1x8x256xf32>,
    %c0_55 = arith.constant 0 : index
    %c0_56 = arith.constant 0 : index
    %95 = vector.load %arg10[%c0_55, %c0_56] : memref<4x8xf32, #tpu.memory_space<vmem>>, vector<4x8xf32>
    %cst_57 = arith.constant dense<0.000000e+00> : vector<4x256xf32>
    %96 = tpu.matmul %95, %91, %cst_57 {dimension_numbers = #tpu.dot_dimension_numbers<[1], [0], [0], [1], [0, 0, 1, 1], [], []>} : vector<4x8xf32>, vector<8x256xf32>, vector<4x256xf32> -> vector<4x256xf32>
    %c0_58 = arith.constant 0 : index
    %c0_59 = arith.constant 0 : index
    %97 = vector.load %arg11[%c0_58, %c0_59] : memref<256x128xf32, #tpu.memory_space<vmem>>, vector<256x128xf32>
    %cst_60 = arith.constant dense<0.000000e+00> : vector<4x128xf32>
    %98 = tpu.matmul %96, %97, %cst_60 {dimension_numbers = #tpu.dot_dimension_numbers<[1], [0], [0], [1], [0, 0, 1, 1], [], []>} : vector<4x256xf32>, vector<256x128xf32>, vector<4x128xf32> -> vector<4x128xf32>
    %c0_61 = arith.constant 0 : index
    %c0_62 = arith.constant 0 : index
    %c0_63 = arith.constant 0 : index
    %99 = vector.load %arg17[%c0_61, %c0_62, %c0_63] : memref<1x4x128xf32, #tpu.memory_space<vmem>>, vector<1x4x128xf32>
    %100 = vector.shape_cast %99 : vector<1x4x128xf32> to vector<4x128xf32>
    %101 = vector.shape_cast %98 : vector<4x128xf32> to vector<1x4x128xf32>
    tpu.vector_store %arg17[%c0_61, %c0_62, %c0_63], %101 {strides = array<i32>} : memref<1x4x128xf32, #tpu.memory_space<vmem>>, vector<1x4x128xf32>,
    %c0_64 = arith.constant 0 : index
    %c0_65 = arith.constant 0 : index
    %c0_66 = arith.constant 0 : index
    %102 = vector.load %arg12[%c0_64, %c0_65, %c0_66] : memref<1x245x2xf32, #tpu.memory_space<vmem>>, vector<1x245x1xf32>
    %103 = vector.shape_cast %102 : vector<1x245x1xf32> to vector<245x1xf32>
    %cst_67 = arith.constant 0.000000e+00 : f32
    %cst_68 = arith.constant 7.000000e+00 : f32
    %104 = vector.broadcast %cst_67 : f32 to vector<245x1xf32>
    %105 = arith.maximumf %104, %103 : vector<245x1xf32>
    %106 = vector.broadcast %cst_68 : f32 to vector<245x1xf32>
    %107 = arith.minimumf %106, %105 : vector<245x1xf32>
    %c0_69 = arith.constant 0 : index
    %c0_70 = arith.constant 0 : index
    %c1_71 = arith.constant 1 : index
    %108 = vector.load %arg12[%c0_69, %c0_70, %c1_71] : memref<1x245x2xf32, #tpu.memory_space<vmem>>, vector<1x245x1xf32>
    %109 = vector.shape_cast %108 : vector<1x245x1xf32> to vector<245x1xf32>
    %cst_72 = arith.constant 0.000000e+00 : f32
    %cst_73 = arith.constant 7.000000e+00 : f32
    %110 = vector.broadcast %cst_72 : f32 to vector<245x1xf32>
    %111 = arith.maximumf %110, %109 : vector<245x1xf32>
    %112 = vector.broadcast %cst_73 : f32 to vector<245x1xf32>
    %113 = arith.minimumf %112, %111 : vector<245x1xf32>
    %114 = tpu.iota {dimensions = array<i32: 1>} : vector<1x8xi32>
    %115 = arith.sitofp %114 : vector<1x8xi32> to vector<1x8xf32>
    %116 = tpu.iota {dimensions = array<i32: 1>} : vector<1x8xi32>
    %117 = arith.sitofp %116 : vector<1x8xi32> to vector<1x8xf32>
    %118 = vector.broadcast %107 : vector<245x1xf32> to vector<245x8xf32>
    %119 = vector.broadcast %115 : vector<1x8xf32> to vector<245x8xf32>
    %120 = arith.subf %118, %119 : vector<245x8xf32>
    %121 = math.absf %120 : vector<245x8xf32>
    %cst_74 = arith.constant 1.000000e+00 : f32
    %122 = vector.broadcast %cst_74 : f32 to vector<245x8xf32>
    %123 = arith.subf %122, %121 : vector<245x8xf32>
    %cst_75 = arith.constant 0.000000e+00 : f32
    %124 = vector.broadcast %cst_75 : f32 to vector<245x8xf32>
    %125 = arith.maximumf %124, %123 : vector<245x8xf32>
    %126 = vector.broadcast %113 : vector<245x1xf32> to vector<245x8xf32>
    %127 = vector.broadcast %117 : vector<1x8xf32> to vector<245x8xf32>
    %128 = arith.subf %126, %127 : vector<245x8xf32>
    %129 = math.absf %128 : vector<245x8xf32>
    %cst_76 = arith.constant 1.000000e+00 : f32
    %130 = vector.broadcast %cst_76 : f32 to vector<245x8xf32>
    %131 = arith.subf %130, %129 : vector<245x8xf32>
    %cst_77 = arith.constant 0.000000e+00 : f32
    %132 = vector.broadcast %cst_77 : f32 to vector<245x8xf32>
    %133 = arith.maximumf %132, %131 : vector<245x8xf32>
    %134 = arith.truncf %133 : vector<245x8xf32> to vector<245x8xbf16>
    %135 = arith.truncf %91 : vector<8x256xf32> to vector<8x256xbf16>
    %cst_78 = arith.constant dense<0.000000e+00> : vector<245x256xf32>
    %136 = tpu.matmul %134, %135, %cst_78 {dimension_numbers = #tpu.dot_dimension_numbers<[1], [0], [0], [1], [0, 0, 1, 1], [], []>} : vector<245x8xbf16>, vector<8x256xbf16>, vector<245x256xf32> -> vector<245x256xf32>
    %c0_79 = arith.constant 0 : index
    %c0_80 = arith.constant 0 : index
    %137 = vector.load %arg6[%c0_79, %c0_80] : memref<8x256xf32, #tpu.memory_space<vmem>>, vector<8x256xf32>
    %cst_81 = arith.constant dense<0.000000e+00> : vector<245x256xf32>
    %138 = tpu.matmul %125, %137, %cst_81 {dimension_numbers = #tpu.dot_dimension_numbers<[1], [0], [0], [1], [0, 0, 1, 1], [], []>} : vector<245x8xf32>, vector<8x256xf32>, vector<245x256xf32> -> vector<245x256xf32>
    %139 = arith.mulf %136, %138 : vector<245x256xf32>
    %140 = arith.truncf %139 : vector<245x256xf32> to vector<245x256xbf16>
    %c0_82 = arith.constant 0 : index
    %c0_83 = arith.constant 0 : index
    %141 = vector.load %arg7[%c0_82, %c0_83] : memref<256x32xbf16, #tpu.memory_space<vmem>>, vector<256x32xbf16>
    %cst_84 = arith.constant dense<0.000000e+00> : vector<245x32xf32>
    %142 = tpu.matmul %140, %141, %cst_84 {dimension_numbers = #tpu.dot_dimension_numbers<[1], [0], [0], [1], [0, 0, 1, 1], [], []>} : vector<245x256xbf16>, vector<256x32xbf16>, vector<245x32xf32> -> vector<245x32xf32>
    %c0_85 = arith.constant 0 : index
    %c0_86 = arith.constant 0 : index
    %c0_87 = arith.constant 0 : index
    %143 = vector.load %arg18[%c0_85, %c0_86, %c0_87] : memref<1x245x32xf32, #tpu.memory_space<vmem>>, vector<1x245x32xf32>
    %144 = vector.shape_cast %143 : vector<1x245x32xf32> to vector<245x32xf32>
    %145 = vector.shape_cast %142 : vector<245x32xf32> to vector<1x245x32xf32>
    tpu.vector_store %arg18[%c0_85, %c0_86, %c0_87], %145 {strides = array<i32>} : memref<1x245x32xf32, #tpu.memory_space<vmem>>, vector<1x245x32xf32>,
    %c0_88 = arith.constant 0 : index
    %c0_89 = arith.constant 0 : index
    %c0_90 = arith.constant 0 : index
    %146 = vector.load %arg13[%c0_88, %c0_89, %c0_90] : memref<1x245x2xf32, #tpu.memory_space<vmem>>, vector<1x245x1xf32>
    %147 = vector.shape_cast %146 : vector<1x245x1xf32> to vector<245x1xf32>
    %cst_91 = arith.constant 0.000000e+00 : f32
    %cst_92 = arith.constant 3.000000e+00 : f32
    %148 = vector.broadcast %cst_91 : f32 to vector<245x1xf32>
    %149 = arith.maximumf %148, %147 : vector<245x1xf32>
    %150 = vector.broadcast %cst_92 : f32 to vector<245x1xf32>
    %151 = arith.minimumf %150, %149 : vector<245x1xf32>
    %c0_93 = arith.constant 0 : index
    %c0_94 = arith.constant 0 : index
    %c1_95 = arith.constant 1 : index
    %152 = vector.load %arg13[%c0_93, %c0_94, %c1_95] : memref<1x245x2xf32, #tpu.memory_space<vmem>>, vector<1x245x1xf32>
    %153 = vector.shape_cast %152 : vector<1x245x1xf32> to vector<245x1xf32>
    %cst_96 = arith.constant 0.000000e+00 : f32
    %cst_97 = arith.constant 3.000000e+00 : f32
    %154 = vector.broadcast %cst_96 : f32 to vector<245x1xf32>
    %155 = arith.maximumf %154, %153 : vector<245x1xf32>
    %156 = vector.broadcast %cst_97 : f32 to vector<245x1xf32>
    %157 = arith.minimumf %156, %155 : vector<245x1xf32>
    %158 = tpu.iota {dimensions = array<i32: 1>} : vector<1x4xi32>
    %159 = arith.sitofp %158 : vector<1x4xi32> to vector<1x4xf32>
    %160 = tpu.iota {dimensions = array<i32: 1>} : vector<1x4xi32>
    %161 = arith.sitofp %160 : vector<1x4xi32> to vector<1x4xf32>
    %162 = vector.broadcast %151 : vector<245x1xf32> to vector<245x4xf32>
    %163 = vector.broadcast %159 : vector<1x4xf32> to vector<245x4xf32>
    %164 = arith.subf %162, %163 : vector<245x4xf32>
    %165 = math.absf %164 : vector<245x4xf32>
    %cst_98 = arith.constant 1.000000e+00 : f32
    %166 = vector.broadcast %cst_98 : f32 to vector<245x4xf32>
    %167 = arith.subf %166, %165 : vector<245x4xf32>
    %cst_99 = arith.constant 0.000000e+00 : f32
    %168 = vector.broadcast %cst_99 : f32 to vector<245x4xf32>
    %169 = arith.maximumf %168, %167 : vector<245x4xf32>
    %170 = vector.broadcast %157 : vector<245x1xf32> to vector<245x4xf32>
    %171 = vector.broadcast %161 : vector<1x4xf32> to vector<245x4xf32>
    %172 = arith.subf %170, %171 : vector<245x4xf32>
    %173 = math.absf %172 : vector<245x4xf32>
    %cst_100 = arith.constant 1.000000e+00 : f32
    %174 = vector.broadcast %cst_100 : f32 to vector<245x4xf32>
    %175 = arith.subf %174, %173 : vector<245x4xf32>
    %cst_101 = arith.constant 0.000000e+00 : f32
    %176 = vector.broadcast %cst_101 : f32 to vector<245x4xf32>
    %177 = arith.maximumf %176, %175 : vector<245x4xf32>
    %178 = arith.truncf %177 : vector<245x4xf32> to vector<245x4xbf16>
    %179 = arith.truncf %98 : vector<4x128xf32> to vector<4x128xbf16>
    %cst_102 = arith.constant dense<0.000000e+00> : vector<245x128xf32>
    %180 = tpu.matmul %178, %179, %cst_102 {dimension_numbers = #tpu.dot_dimension_numbers<[1], [0], [0], [1], [0, 0, 1, 1], [], []>} : vector<245x4xbf16>, vector<4x128xbf16>, vector<245x128xf32> -> vector<245x128xf32>
    %c0_103 = arith.constant 0 : index
    %c0_104 = arith.constant 0 : index
    %181 = vector.load %arg8[%c0_103, %c0_104] : memref<4x128xf32, #tpu.memory_space<vmem>>, vector<4x128xf32>
    %cst_105 = arith.constant dense<0.000000e+00> : vector<245x128xf32>
    %182 = tpu.matmul %169, %181, %cst_105 {dimension_numbers = #tpu.dot_dimension_numbers<[1], [0], [0], [1], [0, 0, 1, 1], [], []>} : vector<245x4xf32>, vector<4x128xf32>, vector<245x128xf32> -> vector<245x128xf32>
    %183 = arith.mulf %180, %182 : vector<245x128xf32>
    %184 = arith.truncf %183 : vector<245x128xf32> to vector<245x128xbf16>
    %c0_106 = arith.constant 0 : index
    %c0_107 = arith.constant 0 : index
    %185 = vector.load %arg9[%c0_106, %c0_107] : memref<128x32xbf16, #tpu.memory_space<vmem>>, vector<128x32xbf16>
    %cst_108 = arith.constant dense<0.000000e+00> : vector<245x32xf32>
    %186 = tpu.matmul %184, %185, %cst_108 {dimension_numbers = #tpu.dot_dimension_numbers<[1], [0], [0], [1], [0, 0, 1, 1], [], []>} : vector<245x128xbf16>, vector<128x32xbf16>, vector<245x32xf32> -> vector<245x32xf32>
    %c0_109 = arith.constant 0 : index
    %c0_110 = arith.constant 0 : index
    %c0_111 = arith.constant 0 : index
    %187 = vector.load %arg19[%c0_109, %c0_110, %c0_111] : memref<1x245x32xf32, #tpu.memory_space<vmem>>, vector<1x245x32xf32>
    %188 = vector.shape_cast %187 : vector<1x245x32xf32> to vector<245x32xf32>
    %189 = vector.shape_cast %186 : vector<245x32xf32> to vector<1x245x32xf32>
    tpu.vector_store %arg19[%c0_109, %c0_110, %c0_111], %189 {strides = array<i32>} : memref<1x245x32xf32, #tpu.memory_space<vmem>>, vector<1x245x32xf32>,
    %c0_112 = arith.constant 0 : index
    %c0_113 = arith.constant 0 : index
    %c0_114 = arith.constant 0 : index
    %190 = vector.load %arg14[%c0_112, %c0_113, %c0_114] : memref<1x5x2xf32, #tpu.memory_space<vmem>>, vector<1x5x2xf32>
    %191 = vector.shape_cast %190 : vector<1x5x2xf32> to vector<5x2xf32>
    %c0_115 = arith.constant 0 : index
    %c0_116 = arith.constant 0 : index
    %192 = vector.load %arg15[%c0_115, %c0_116] : memref<1x2xf32, #tpu.memory_space<vmem>>, vector<1x2xf32>
    %193 = vector.broadcast %192 : vector<1x2xf32> to vector<5x2xf32>
    %194 = arith.mulf %191, %193 : vector<5x2xf32>
    %c0_117 = arith.constant 0 : index
    %c0_118 = arith.constant 0 : index
    %c0_119 = arith.constant 0 : index
    %195 = vector.load %arg20[%c0_117, %c0_118, %c0_119] : memref<1x5x2xf32, #tpu.memory_space<vmem>>, vector<1x5x2xf32>
    %196 = vector.shape_cast %195 : vector<1x5x2xf32> to vector<5x2xf32>
    %197 = vector.shape_cast %194 : vector<5x2xf32> to vector<1x5x2xf32>
    tpu.vector_store %arg20[%c0_117, %c0_118, %c0_119], %197 {strides = array<i32>} : memref<1x5x2xf32, #tpu.memory_space<vmem>>, vector<1x5x2xf32>,
    %cst_120 = arith.constant 0.999909222 : f32
    %198 = vector.broadcast %cst_120 : f32 to vector<5x1xf32>
    %c0_121 = arith.constant 0 : index
    %c0_122 = arith.constant 0 : index
    %c0_123 = arith.constant 0 : index
    %199 = vector.load %arg21[%c0_121, %c0_122, %c0_123] : memref<1x5x1xf32, #tpu.memory_space<vmem>>, vector<1x5x1xf32>
    %200 = vector.shape_cast %199 : vector<1x5x1xf32> to vector<5x1xf32>
    %201 = vector.shape_cast %198 : vector<5x1xf32> to vector<1x5x1xf32>
    tpu.vector_store %arg21[%c0_121, %c0_122, %c0_123], %201 {strides = array<i32>} : memref<1x5x1xf32, #tpu.memory_space<vmem>>, vector<1x5x1xf32>,
    return
  }
  func.func @transform_0(%arg0: i32) -> (i32, i32, i32) {
    %c0_i32 = arith.constant 0 : i32
    %c0_i32_0 = arith.constant 0 : i32
    %c0_i32_1 = arith.constant 0 : i32
    return %arg0, %c0_i32, %c0_i32_0 : i32, i32, i32
  }
  func.func @transform_1(%arg0: i32) -> (i32, i32) {
    %c0_i32 = arith.constant 0 : i32
    %c0_i32_0 = arith.constant 0 : i32
    %c0_i32_1 = arith.constant 0 : i32
    return %c0_i32, %c0_i32_0 : i32, i32
  }
  func.func @transform_2(%arg0: i32) -> (i32, i32, i32) {
    %c0_i32 = arith.constant 0 : i32
    %c0_i32_0 = arith.constant 0 : i32
    %c0_i32_1 = arith.constant 0 : i32
    %c0_i32_2 = arith.constant 0 : i32
    return %c0_i32, %c0_i32_0, %c0_i32_1 : i32, i32, i32
  }
  func.func @transform_3(%arg0: i32) -> (i32, i32) {
    %c0_i32 = arith.constant 0 : i32
    %c0_i32_0 = arith.constant 0 : i32
    %c0_i32_1 = arith.constant 0 : i32
    return %c0_i32, %c0_i32_0 : i32, i32
  }
  func.func @transform_4(%arg0: i32) -> (i32, i32) {
    %c0_i32 = arith.constant 0 : i32
    %c0_i32_0 = arith.constant 0 : i32
    %c0_i32_1 = arith.constant 0 : i32
    return %c0_i32, %c0_i32_0 : i32, i32
  }
  func.func @transform_5(%arg0: i32) -> (i32, i32) {
    %c0_i32 = arith.constant 0 : i32
    %c0_i32_0 = arith.constant 0 : i32
    %c0_i32_1 = arith.constant 0 : i32
    return %c0_i32, %c0_i32_0 : i32, i32
  }
  func.func @transform_6(%arg0: i32) -> (i32, i32) {
    %c0_i32 = arith.constant 0 : i32
    %c0_i32_0 = arith.constant 0 : i32
    %c0_i32_1 = arith.constant 0 : i32
    return %c0_i32, %c0_i32_0 : i32, i32
  }
  func.func @transform_7(%arg0: i32) -> (i32, i32) {
    %c0_i32 = arith.constant 0 : i32
    %c0_i32_0 = arith.constant 0 : i32
    %c0_i32_1 = arith.constant 0 : i32
    return %c0_i32, %c0_i32_0 : i32, i32
  }
  func.func @transform_8(%arg0: i32) -> (i32, i32) {
    %c0_i32 = arith.constant 0 : i32
    %c0_i32_0 = arith.constant 0 : i32
    %c0_i32_1 = arith.constant 0 : i32
    return %c0_i32, %c0_i32_0 : i32, i32
  }
  func.func @transform_9(%arg0: i32) -> (i32, i32) {
    %c0_i32 = arith.constant 0 : i32
    %c0_i32_0 = arith.constant 0 : i32
    %c0_i32_1 = arith.constant 0 : i32
    return %c0_i32, %c0_i32_0 : i32, i32
  }
  func.func @transform_10(%arg0: i32) -> (i32, i32) {
    %c0_i32 = arith.constant 0 : i32
    %c0_i32_0 = arith.constant 0 : i32
    %c0_i32_1 = arith.constant 0 : i32
    return %c0_i32, %c0_i32_0 : i32, i32
  }
  func.func @transform_11(%arg0: i32) -> (i32, i32, i32) {
    %c0_i32 = arith.constant 0 : i32
    %c0_i32_0 = arith.constant 0 : i32
    %c0_i32_1 = arith.constant 0 : i32
    return %arg0, %c0_i32, %c0_i32_0 : i32, i32, i32
  }
  func.func @transform_12(%arg0: i32) -> (i32, i32, i32) {
    %c0_i32 = arith.constant 0 : i32
    %c0_i32_0 = arith.constant 0 : i32
    %c0_i32_1 = arith.constant 0 : i32
    return %arg0, %c0_i32, %c0_i32_0 : i32, i32, i32
  }
  func.func @transform_13(%arg0: i32) -> (i32, i32, i32) {
    %c0_i32 = arith.constant 0 : i32
    %c0_i32_0 = arith.constant 0 : i32
    %c0_i32_1 = arith.constant 0 : i32
    return %arg0, %c0_i32, %c0_i32_0 : i32, i32, i32
  }
  func.func @transform_14(%arg0: i32) -> (i32, i32) {
    %c0_i32 = arith.constant 0 : i32
    %c0_i32_0 = arith.constant 0 : i32
    %c0_i32_1 = arith.constant 0 : i32
    return %c0_i32, %c0_i32_0 : i32, i32
  }
  func.func @transform_15(%arg0: i32) -> (i32, i32, i32) {
    %c0_i32 = arith.constant 0 : i32
    %c0_i32_0 = arith.constant 0 : i32
    %c0_i32_1 = arith.constant 0 : i32
    return %arg0, %c0_i32, %c0_i32_0 : i32, i32, i32
  }
  func.func @transform_16(%arg0: i32) -> (i32, i32, i32) {
    %c0_i32 = arith.constant 0 : i32
    %c0_i32_0 = arith.constant 0 : i32
    %c0_i32_1 = arith.constant 0 : i32
    return %arg0, %c0_i32, %c0_i32_0 : i32, i32, i32
  }
  func.func @transform_17(%arg0: i32) -> (i32, i32, i32) {
    %c0_i32 = arith.constant 0 : i32
    %c0_i32_0 = arith.constant 0 : i32
    %c0_i32_1 = arith.constant 0 : i32
    return %arg0, %c0_i32, %c0_i32_0 : i32, i32, i32
  }
  func.func @transform_18(%arg0: i32) -> (i32, i32, i32) {
    %c0_i32 = arith.constant 0 : i32
    %c0_i32_0 = arith.constant 0 : i32
    %c0_i32_1 = arith.constant 0 : i32
    return %arg0, %c0_i32, %c0_i32_0 : i32, i32, i32
  }
  func.func @transform_19(%arg0: i32) -> (i32, i32, i32) {
    %c0_i32 = arith.constant 0 : i32
    %c0_i32_0 = arith.constant 0 : i32
    %c0_i32_1 = arith.constant 0 : i32
    return %arg0, %c0_i32, %c0_i32_0 : i32, i32, i32
  }
  func.func @transform_20(%arg0: i32) -> (i32, i32, i32) {
    %c0_i32 = arith.constant 0 : i32
    %c0_i32_0 = arith.constant 0 : i32
    %c0_i32_1 = arith.constant 0 : i32
    return %arg0, %c0_i32, %c0_i32_0 : i32, i32, i32
  }
}

</mosaic_0001>

<llo_original>
// kernel: _first_frame_pipeline.1
$region0: #{_first_frame_pipeline.1}
  #allocation0 [shape = 'u32[]', space=smem, size = 0x4, offset = 0x4, fixed_abs, tag = 'smem constant byte address 0x4 - core index']
  #allocation1 [shape = 'u32[144,128]{1,0:T(1,128)}', space=vmem, size = 0x12000, scoped, tag = 'internal scratch']
  %s0 = inlined_call_operand.vmem [shape: f32[1,144,64], index: 0, kind: input, shape index: {}]
  %s1 = inlined_call_operand.vmem [shape: bf16[96,144], index: 1, kind: input, shape index: {}]
  %s2 = inlined_call_operand.vmem [shape: bf16[12,64,256], index: 2, kind: input, shape index: {}]
  %s3 = inlined_call_operand.vmem [shape: f32[1,256], index: 3, kind: input, shape index: {}]
  %s4 = inlined_call_operand.vmem [shape: f32[256,8], index: 4, kind: input, shape index: {}]
  %s5 = inlined_call_operand.vmem [shape: f32[8,256], index: 5, kind: input, shape index: {}]
  %s6 = inlined_call_operand.vmem [shape: bf16[256,32], index: 6, kind: input, shape index: {}]
  %s7 = inlined_call_operand.vmem [shape: f32[4,128], index: 7, kind: input, shape index: {}]
  %s8 = inlined_call_operand.vmem [shape: bf16[128,32], index: 8, kind: input, shape index: {}]
  %s9 = inlined_call_operand.vmem [shape: f32[4,8], index: 9, kind: input, shape index: {}]
  %s10 = inlined_call_operand.vmem [shape: f32[256,128], index: 10, kind: input, shape index: {}]
  %s11 = inlined_call_operand.vmem [shape: f32[1,245,2], index: 11, kind: input, shape index: {}]
  %s12 = inlined_call_operand.vmem [shape: f32[1,245,2], index: 12, kind: input, shape index: {}]
  %s13 = inlined_call_operand.vmem [shape: f32[1,5,2], index: 13, kind: input, shape index: {}]
  %s14 = inlined_call_operand.vmem [shape: f32[1,2], index: 14, kind: input, shape index: {}]
  %s15 = inlined_call_operand.vmem [shape: f32[1,8,256], index: 15, kind: output, shape index: {0}]
  %s16 = inlined_call_operand.vmem [shape: f32[1,4,128], index: 16, kind: output, shape index: {1}]
  %s17 = inlined_call_operand.vmem [shape: f32[1,245,32], index: 17, kind: output, shape index: {2}]
  %s18 = inlined_call_operand.vmem [shape: f32[1,245,32], index: 18, kind: output, shape index: {3}]
  %s19 = inlined_call_operand.vmem [shape: f32[1,5,2], index: 19, kind: output, shape index: {4}]
  %s20 = inlined_call_operand.vmem [shape: f32[1,5,1], index: 20, kind: output, shape index: {5}]
  %21 = xla_tuple %s15, %s16, %s17, %s18, %s19, %s20
  %s22 = sld [smem:[#allocation0]]
  $region110: #{_first_frame_pipeline.1} parent=0
    _
  %s24 = ssub.s32 1, %s22
  %s25 = scalar_select 0, %s24, %s22
  // Predicated region
  $region2: #{_first_frame_pipeline.1} parent=0 // pred_check
    _
  $region3: #{_first_frame_pipeline.1} parent=0 // pred_check_branch
    %27 = sbr.rel (0) target = $region5
  $region4: #{_first_frame_pipeline.1} parent=0 // pred_region
    _
  $region5: #{_first_frame_pipeline.1} parent=0 // pred_fallthru
    _
  // Predicated region
  $region6: #{_first_frame_pipeline.1} parent=0 // pred_check
    _
  $region7: #{_first_frame_pipeline.1} parent=0 // pred_check_branch
    %29 = sbr.rel (0) target = $region9
  $region8: #{_first_frame_pipeline.1} parent=0 // pred_region
    _
  $region9: #{_first_frame_pipeline.1} parent=0 // pred_fallthru
    _
  // Predicated region
  $region10: #{_first_frame_pipeline.1} parent=0 // pred_check
    _
  $region11: #{_first_frame_pipeline.1} parent=0 // pred_check_branch
    %31 = sbr.rel (0) target = $region13
  $region12: #{_first_frame_pipeline.1} parent=0 // pred_region
    _
  $region13: #{_first_frame_pipeline.1} parent=0 // pred_fallthru
    _
  // Predicated region
  $region14: #{_first_frame_pipeline.1} parent=0 // pred_check
    _
  $region15: #{_first_frame_pipeline.1} parent=0 // pred_check_branch
    %33 = sbr.rel (0) target = $region17
  $region16: #{_first_frame_pipeline.1} parent=0 // pred_region
    _
  $region17: #{_first_frame_pipeline.1} parent=0 // pred_fallthru
    _
  // Predicated region
  $region18: #{_first_frame_pipeline.1} parent=0 // pred_check
    _
  $region19: #{_first_frame_pipeline.1} parent=0 // pred_check_branch
    %35 = sbr.rel (0) target = $region21
  $region20: #{_first_frame_pipeline.1} parent=0 // pred_region
    _
  $region21: #{_first_frame_pipeline.1} parent=0 // pred_fallthru
    _
  // Predicated region
  $region22: #{_first_frame_pipeline.1} parent=0 // pred_check
    _
  $region23: #{_first_frame_pipeline.1} parent=0 // pred_check_branch
    %37 = sbr.rel (0) target = $region25
  $region24: #{_first_frame_pipeline.1} parent=0 // pred_region
    _
  $region25: #{_first_frame_pipeline.1} parent=0 // pred_fallthru
    _
  // Predicated region
  $region26: #{_first_frame_pipeline.1} parent=0 // pred_check
    _
  $region27: #{_first_frame_pipeline.1} parent=0 // pred_check_branch
    %39 = sbr.rel (0) target = $region29
  $region28: #{_first_frame_pipeline.1} parent=0 // pred_region
    _
  $region29: #{_first_frame_pipeline.1} parent=0 // pred_fallthru
    _
  // Predicated region
  $region30: #{_first_frame_pipeline.1} parent=0 // pred_check
    _
  $region31: #{_first_frame_pipeline.1} parent=0 // pred_check_branch
    %41 = sbr.rel (0) target = $region33
  $region32: #{_first_frame_pipeline.1} parent=0 // pred_region
    _
  $region33: #{_first_frame_pipeline.1} parent=0 // pred_fallthru
    _
  // Predicated region
  $region34: #{_first_frame_pipeline.1} parent=0 // pred_check
    _
  $region35: #{_first_frame_pipeline.1} parent=0 // pred_check_branch
    %43 = sbr.rel (0) target = $region37
  $region36: #{_first_frame_pipeline.1} parent=0 // pred_region
    _
  $region37: #{_first_frame_pipeline.1} parent=0 // pred_fallthru
    _
  // Predicated region
  $region38: #{_first_frame_pipeline.1} parent=0 // pred_check
    _
  $region39: #{_first_frame_pipeline.1} parent=0 // pred_check_branch
    %45 = sbr.rel (0) target = $region41
  $region40: #{_first_frame_pipeline.1} parent=0 // pred_region
    _
  $region41: #{_first_frame_pipeline.1} parent=0 // pred_fallthru
    _
  // Predicated region
  $region42: #{_first_frame_pipeline.1} parent=0 // pred_check
    _
  $region43: #{_first_frame_pipeline.1} parent=0 // pred_check_branch
    %47 = sbr.rel (0) target = $region45
  $region44: #{_first_frame_pipeline.1} parent=0 // pred_region
    _
  $region45: #{_first_frame_pipeline.1} parent=0 // pred_fallthru
    _
  // Predicated region
  $region46: #{_first_frame_pipeline.1} parent=0 // pred_check
    _
  $region47: #{_first_frame_pipeline.1} parent=0 // pred_check_branch
    %49 = sbr.rel (0) target = $region49
  $region48: #{_first_frame_pipeline.1} parent=0 // pred_region
    _
  $region49: #{_first_frame_pipeline.1} parent=0 // pred_fallthru
    _
  // Predicated region
  $region50: #{_first_frame_pipeline.1} parent=0 // pred_check
    _
  $region51: #{_first_frame_pipeline.1} parent=0 // pred_check_branch
    %51 = sbr.rel (0) target = $region53
  $region52: #{_first_frame_pipeline.1} parent=0 // pred_region
    _
  $region53: #{_first_frame_pipeline.1} parent=0 // pred_fallthru
    _
  // Predicated region
  $region54: #{_first_frame_pipeline.1} parent=0 // pred_check
    _
  $region55: #{_first_frame_pipeline.1} parent=0 // pred_check_branch
    %53 = sbr.rel (0) target = $region57
  $region56: #{_first_frame_pipeline.1} parent=0 // pred_region
    _
  $region57: #{_first_frame_pipeline.1} parent=0 // pred_fallthru
    _
  // Predicated region
  $region58: #{_first_frame_pipeline.1} parent=0 // pred_check
    _
  $region59: #{_first_frame_pipeline.1} parent=0 // pred_check_branch
    %55 = sbr.rel (0) target = $region61
  $region60: #{_first_frame_pipeline.1} parent=0 // pred_region
    _
  $region61: #{_first_frame_pipeline.1} parent=0 // pred_fallthru
    _
  %v57 = vld [vmem:[%s0] sm:$0xff]
  %v58 = vld [vmem:[%s0 + $0x8] sm:$0xff]
  %v59 = vld [vmem:[%s0 + $0x10] sm:$0xff]
  %v60 = vld [vmem:[%s0 + $0x18] sm:$0xff]
  %v61 = vld [vmem:[%s0 + $0x20] sm:$0xff]
  %v62 = vld [vmem:[%s0 + $0x28] sm:$0xff]
  %v63 = vld [vmem:[%s0 + $0x30] sm:$0xff]
  %v64 = vld [vmem:[%s0 + $0x38] sm:$0xff]
  %v65 = vld [vmem:[%s0 + $0x40] sm:$0xff]
  %v66 = vld [vmem:[%s0 + $0x48] sm:$0xff]
  %v67 = vld [vmem:[%s0 + $0x50] sm:$0xff]
  %v68 = vld [vmem:[%s0 + $0x58] sm:$0xff]
  %v69 = vld [vmem:[%s0 + $0x60] sm:$0xff]
  %v70 = vld [vmem:[%s0 + $0x68] sm:$0xff]
  %v71 = vld [vmem:[%s0 + $0x70] sm:$0xff]
  %v72 = vld [vmem:[%s0 + $0x78] sm:$0xff]
  %v73 = vld [vmem:[%s0 + $0x80] sm:$0xff]
  %v74 = vld [vmem:[%s0 + $0x88] sm:$0xff]
  %v75 = vpack.c.bf16 %v58, %v57
  %v76 = vpack.c.bf16 %v60, %v59
  %v77 = vpack.c.bf16 %v62, %v61
  %v78 = vpack.c.bf16 %v64, %v63
  %v79 = vpack.c.bf16 %v66, %v65
  %v80 = vpack.c.bf16 %v68, %v67
  %v81 = vpack.c.bf16 %v70, %v69
  %v82 = vpack.c.bf16 %v72, %v71
  %v83 = vpack.c.bf16 %v74, %v73
  %v84 = vld [vmem:[%s1] sm:$0xff]
  %v85 = vld [vmem:[%s1 + $0x8] sm:$0xff]
  %v86 = vld [vmem:[%s1 + $0x10] sm:$0xff]
  %v87 = vld [vmem:[%s1 + $0x18] sm:$0xff]
  %v88 = vld [vmem:[%s1 + $0x20] sm:$0xff]
  %v89 = vld [vmem:[%s1 + $0x28] sm:$0xff]
  %v90 = vld [vmem:[%s1 + $0x30] sm:$0xff]
  %v91 = vld [vmem:[%s1 + $0x38] sm:$0xff]
  %v92 = vld [vmem:[%s1 + $0x40] sm:$0xff]
  %v93 = vld [vmem:[%s1 + $0x48] sm:$0xff]
  %v94 = vld [vmem:[%s1 + $0x50] sm:$0xff]
  %v95 = vld [vmem:[%s1 + $0x58] sm:$0xff]
  %v108 = vunpack.c.l.b16 %v84
  %v109 = vunpack.c.h.b16 %v84
  %v110 = vunpack.c.l.b16 %v85
  %v111 = vunpack.c.h.b16 %v85
  %v112 = vunpack.c.l.b16 %v86
  %v113 = vunpack.c.h.b16 %v86
  %v114 = vunpack.c.l.b16 %v87
  %v115 = vunpack.c.h.b16 %v87
  %v116 = vunpack.c.l.b16 %v88
  %v117 = vunpack.c.h.b16 %v88
  %v118 = vunpack.c.l.b16 %v89
  %v119 = vunpack.c.h.b16 %v89
  %v120 = vunpack.c.l.b16 %v90
  %v121 = vunpack.c.h.b16 %v90
  %v122 = vunpack.c.l.b16 %v91
  %v123 = vunpack.c.h.b16 %v91
  %v124 = vunpack.c.l.b16 %v92
  %v125 = vunpack.c.h.b16 %v92
  %v126 = vunpack.c.l.b16 %v93
  %v127 = vunpack.c.h.b16 %v93
  %v128 = vunpack.c.l.b16 %v94
  %v129 = vunpack.c.h.b16 %v94
  %v130 = vunpack.c.l.b16 %v95
  %v131 = vunpack.c.h.b16 %v95
  %v132 = vpack.c.b16 %v110, %v108
  %v133 = vpack.c.b16 %v111, %v109
  %v134 = vpack.c.b16 %v114, %v112
  %v135 = vpack.c.b16 %v115, %v113
  %v136 = vpack.c.b16 %v118, %v116
  %v137 = vpack.c.b16 %v119, %v117
  %v138 = vpack.c.b16 %v122, %v120
  %v139 = vpack.c.b16 %v123, %v121
  %v140 = vpack.c.b16 %v126, %v124
  %v141 = vpack.c.b16 %v127, %v125
  %v142 = vpack.c.b16 %v130, %v128
  %v143 = vpack.c.b16 %v131, %v129
  %vm150 = vcmask 130048
  %v152 = vsel %vm150, %v133, 0
  %v155 = vsel %vm150, %v135, 0
  %v158 = vsel %vm150, %v137, 0
  %v161 = vsel %vm150, %v139, 0
  %v164 = vsel %vm150, %v141, 0
  %v167 = vsel %vm150, %v143, 0
  %169 = vmatprep.subr.bf16.mxu0 0
  %170 = vmatpush1.bf16.msra.mxu0 %v75
  %171 = vmatprep.subr.bf16.mxu0 0
  %172 = vmatpush1.bf16.msra.mxu0 %v76
  %173 = vmatprep.subr.bf16.mxu0 0
  %174 = vmatpush1.bf16.msra.mxu0 %v77
  %175 = vmatprep.subr.bf16.mxu0 0
  %176 = vmatpush1.bf16.msra.mxu0 %v78
  %177 = vmatprep.subr.bf16.mxu0 0
  %178 = vmatpush1.bf16.msra.mxu0 %v79
  %179 = vmatprep.subr.bf16.mxu0 0
  %180 = vmatpush1.bf16.msra.mxu0 %v80
  %181 = vmatprep.subr.bf16.mxu0 0
  %182 = vmatpush1.bf16.msra.mxu0 %v81
  %183 = vmatprep.subr.bf16.mxu0 0
  %184 = vmatpush1.bf16.msra.mxu0 %v82
  %185 = vmatprep.subr.bf16.mxu0 0
  %186 = vmatpush1.bf16.msra.mxu0 %v83
  %187 = vmatprep.subr.bf16.mxu0 0
  %188 = vmatpush1.bf16.msra.mxu0 0
  %189 = vmatprep.subr.bf16.mxu0 0
  %190 = vmatpush1.bf16.msra.mxu0 0
  %191 = vmatprep.subr.bf16.mxu0 0
  %192 = vmatpush1.bf16.msra.mxu0 0
  %193 = vmatprep.subr.bf16.mxu0 0
  %194 = vmatpush1.bf16.msra.mxu0 0
  %195 = vmatprep.subr.bf16.mxu0 0
  %196 = vmatpush1.bf16.msra.mxu0 0
  %197 = vmatprep.subr.bf16.mxu0 0
  %198 = vmatpush1.bf16.msra.mxu0 0
  %199 = vmatprep.subr.bf16.mxu0 0
  %200 = vmatpush1.bf16.msra.mxu0 0
  %201 = vmatprep.mubr.bf16.mxu0 %v152
  %202 = vmatmul.mubr.bf16.gmra.mrb[0].mxu0 %v132
  %v203 = vpop.f32.mrb[0].mxu0
  %v204 = vadd.f32 0.0, %v203
  %v205 = vpop.f32.mrb[0].mxu0
  %v206 = vpop.f32.mrb[0].mxu0
  %v207 = vadd.f32 0.0, %v206
  %v208 = vpop.f32.mrb[0].mxu0
  %209 = vmatprep.mubr.bf16.mxu0 %v155
  %210 = vmatmul.mubr.bf16.gmra.mrb[0].mxu0 %v134
  %v211 = vpop.f32.mrb[0].mxu0
  %v212 = vadd.f32 0.0, %v211
  %v213 = vpop.f32.mrb[0].mxu0
  %v214 = vpop.f32.mrb[0].mxu0
  %v215 = vadd.f32 0.0, %v214
  %v216 = vpop.f32.mrb[0].mxu0
  %217 = vmatprep.mubr.bf16.mxu0 %v158
  %218 = vmatmul.mubr.bf16.gmra.mrb[0].mxu0 %v136
  %v219 = vpop.f32.mrb[0].mxu0
  %v220 = vadd.f32 0.0, %v219
  %v221 = vpop.f32.mrb[0].mxu0
  %v222 = vpop.f32.mrb[0].mxu0
  %v223 = vadd.f32 0.0, %v222
  %v224 = vpop.f32.mrb[0].mxu0
  %225 = vmatprep.mubr.bf16.mxu0 %v161
  %226 = vmatmul.mubr.bf16.gmra.mrb[0].mxu0 %v138
  %v227 = vpop.f32.mrb[0].mxu0
  %v228 = vadd.f32 0.0, %v227
  %v229 = vpop.f32.mrb[0].mxu0
  %v230 = vpop.f32.mrb[0].mxu0
  %v231 = vadd.f32 0.0, %v230
  %v232 = vpop.f32.mrb[0].mxu0
  %233 = vmatprep.mubr.bf16.mxu0 %v164
  %234 = vmatmul.mubr.bf16.gmra.mrb[0].mxu0 %v140
  %v235 = vpop.f32.mrb[0].mxu0
  %v236 = vadd.f32 0.0, %v235
  %v237 = vpop.f32.mrb[0].mxu0
  %v238 = vpop.f32.mrb[0].mxu0
  %v239 = vadd.f32 0.0, %v238
  %v240 = vpop.f32.mrb[0].mxu0
  %241 = vmatprep.mubr.bf16.mxu0 %v167
  %242 = vmatmul.mubr.bf16.gmra.mrb[0].mxu0 %v142
  %v243 = vpop.f32.mrb[0].mxu0
  %v244 = vadd.f32 0.0, %v243
  %v245 = vpop.f32.mrb[0].mxu0
  %v246 = vpop.f32.mrb[0].mxu0
  %v247 = vadd.f32 0.0, %v246
  %v248 = vpop.f32.mrb[0].mxu0
  %249 = vdwg.mxu0
  %v250 = vpack.c.bf16 %v204, %v204
  %v251 = vld [vmem:[%s2] sm:$0xff]
  %v252 = vld [vmem:[%s2 + $0x8] sm:$0xff]
  %v253 = vld [vmem:[%s2 + $0x10] sm:$0xff]
  %v254 = vld [vmem:[%s2 + $0x18] sm:$0xff]
  %v255 = vld [vmem:[%s2 + $0x20] sm:$0xff]
  %v256 = vld [vmem:[%s2 + $0x28] sm:$0xff]
  %v257 = vld [vmem:[%s2 + $0x30] sm:$0xff]
  %v258 = vld [vmem:[%s2 + $0x38] sm:$0xff]
  %v259 = vpack.c.bf16 %v207, %v207
  %s260 = scalar_lea.vmem %s2, 64
  %v261 = vld [vmem:[%s260] sm:$0xff]
  %v262 = vld [vmem:[%s260 + $0x8] sm:$0xff]
  %v263 = vld [vmem:[%s260 + $0x10] sm:$0xff]
  %v264 = vld [vmem:[%s260 + $0x18] sm:$0xff]
  %v265 = vld [vmem:[%s260 + $0x20] sm:$0xff]
  %v266 = vld [vmem:[%s260 + $0x28] sm:$0xff]
  %v267 = vld [vmem:[%s260 + $0x30] sm:$0xff]
  %v268 = vld [vmem:[%s260 + $0x38] sm:$0xff]
  %v277 = vunpack.c.l.b16 %v261
  %v278 = vunpack.c.h.b16 %v261
  %v279 = vunpack.c.l.b16 %v262
  %v280 = vunpack.c.h.b16 %v262
  %v281 = vunpack.c.l.b16 %v263
  %v282 = vunpack.c.h.b16 %v263
  %v283 = vunpack.c.l.b16 %v264
  %v284 = vunpack.c.h.b16 %v264
  %v285 = vunpack.c.l.b16 %v265
  %v286 = vunpack.c.h.b16 %v265
  %v287 = vunpack.c.l.b16 %v266
  %v288 = vunpack.c.h.b16 %v266
  %v289 = vunpack.c.l.b16 %v267
  %v290 = vunpack.c.h.b16 %v267
  %v291 = vunpack.c.l.b16 %v268
  %v292 = vunpack.c.h.b16 %v268
  %v293 = vpack.c.b16 %v279, %v277
  %v294 = vpack.c.b16 %v280, %v278
  %v295 = vpack.c.b16 %v283, %v281
  %v296 = vpack.c.b16 %v284, %v282
  %v297 = vpack.c.b16 %v287, %v285
  %v298 = vpack.c.b16 %v288, %v286
  %v299 = vpack.c.b16 %v291, %v289
  %v300 = vpack.c.b16 %v292, %v290
  %vm309 = vcmask 523264
  %v311 = vsel %vm309, %v259, 0
  %313 = vmatprep.subr.bf16.mxu0 %v294
  %314 = vmatpush1.bf16.msra.mxu0 %v293
  %315 = vmatprep.subr.bf16.mxu0 %v296
  %316 = vmatpush1.bf16.msra.mxu0 %v295
  %317 = vmatprep.subr.bf16.mxu0 %v298
  %318 = vmatpush1.bf16.msra.mxu0 %v297
  %319 = vmatprep.subr.bf16.mxu0 %v300
  %320 = vmatpush1.bf16.msra.mxu0 %v299
  %321 = vmatprep.subr.bf16.mxu0 0
  %322 = vmatpush1.bf16.msra.mxu0 0
  %323 = vmatprep.subr.bf16.mxu0 0
  %324 = vmatpush1.bf16.msra.mxu0 0
  %325 = vmatprep.subr.bf16.mxu0 0
  %326 = vmatpush1.bf16.msra.mxu0 0
  %327 = vmatprep.subr.bf16.mxu0 0
  %328 = vmatpush1.bf16.msra.mxu0 0
  %329 = vmatprep.subr.bf16.mxu0 0
  %330 = vmatpush1.bf16.msra.mxu0 0
  %331 = vmatprep.subr.bf16.mxu0 0
  %332 = vmatpush1.bf16.msra.mxu0 0
  %333 = vmatprep.subr.bf16.mxu0 0
  %334 = vmatpush1.bf16.msra.mxu0 0
  %335 = vmatprep.subr.bf16.mxu0 0
  %336 = vmatpush1.bf16.msra.mxu0 0
  %337 = vmatprep.subr.bf16.mxu0 0
  %338 = vmatpush1.bf16.msra.mxu0 0
  %339 = vmatprep.subr.bf16.mxu0 0
  %340 = vmatpush1.bf16.msra.mxu0 0
  %341 = vmatprep.subr.bf16.mxu0 0
  %342 = vmatpush1.bf16.msra.mxu0 0
  %343 = vmatprep.subr.bf16.mxu0 0
  %344 = vmatpush1.bf16.msra.mxu0 0
  %345 = vmatprep.mubr.bf16.mxu0 0
  %346 = vmatmul.mubr.bf16.gmra.mrb[0].mxu0 %v311
  %v347 = vpop.f32.mrb[0].mxu0
  %v348 = vadd.f32 0.0, %v347
  %v349 = vpop.f32.mrb[0].mxu0
  %v350 = vadd.f32 0.0, %v349
  %v351 = vpop.f32.mrb[0].mxu0
  %v352 = vpop.f32.mrb[0].mxu0
  %353 = vdwg.mxu0
  %v362 = vunpack.c.l.b16 %v251
  %v363 = vunpack.c.h.b16 %v251
  %v364 = vunpack.c.l.b16 %v252
  %v365 = vunpack.c.h.b16 %v252
  %v366 = vunpack.c.l.b16 %v253
  %v367 = vunpack.c.h.b16 %v253
  %v368 = vunpack.c.l.b16 %v254
  %v369 = vunpack.c.h.b16 %v254
  %v370 = vunpack.c.l.b16 %v255
  %v371 = vunpack.c.h.b16 %v255
  %v372 = vunpack.c.l.b16 %v256
  %v373 = vunpack.c.h.b16 %v256
  %v374 = vunpack.c.l.b16 %v257
  %v375 = vunpack.c.h.b16 %v257
  %v376 = vunpack.c.l.b16 %v258
  %v377 = vunpack.c.h.b16 %v258
  %v378 = vpack.c.b16 %v364, %v362
  %v379 = vpack.c.b16 %v365, %v363
  %v380 = vpack.c.b16 %v368, %v366
  %v381 = vpack.c.b16 %v369, %v367
  %v382 = vpack.c.b16 %v372, %v370
  %v383 = vpack.c.b16 %v373, %v371
  %v384 = vpack.c.b16 %v376, %v374
  %v385 = vpack.c.b16 %v377, %v375
  %v395 = vsel %vm309, %v250, 0
  %397 = vmatprep.subr.bf16.mxu0 %v379
  %398 = vmatpush1.bf16.msra.mxu0 %v378
  %399 = vmatprep.subr.bf16.mxu0 %v381
  %400 = vmatpush1.bf16.msra.mxu0 %v380
  %401 = vmatprep.subr.bf16.mxu0 %v383
  %402 = vmatpush1.bf16.msra.mxu0 %v382
  %403 = vmatprep.subr.bf16.mxu0 %v385
  %404 = vmatpush1.bf16.msra.mxu0 %v384
  %405 = vmatprep.subr.bf16.mxu0 0
  %406 = vmatpush1.bf16.msra.mxu0 0
  %407 = vmatprep.subr.bf16.mxu0 0
  %408 = vmatpush1.bf16.msra.mxu0 0
  %409 = vmatprep.subr.bf16.mxu0 0
  %410 = vmatpush1.bf16.msra.mxu0 0
  %411 = vmatprep.subr.bf16.mxu0 0
  %412 = vmatpush1.bf16.msra.mxu0 0
  %413 = vmatprep.subr.bf16.mxu0 0
  %414 = vmatpush1.bf16.msra.mxu0 0
  %415 = vmatprep.subr.bf16.mxu0 0
  %416 = vmatpush1.bf16.msra.mxu0 0
  %417 = vmatprep.subr.bf16.mxu0 0
  %418 = vmatpush1.bf16.msra.mxu0 0
  %419 = vmatprep.subr.bf16.mxu0 0
  %420 = vmatpush1.bf16.msra.mxu0 0
  %421 = vmatprep.subr.bf16.mxu0 0
  %422 = vmatpush1.bf16.msra.mxu0 0
  %423 = vmatprep.subr.bf16.mxu0 0
  %424 = vmatpush1.bf16.msra.mxu0 0
  %425 = vmatprep.subr.bf16.mxu0 0
  %426 = vmatpush1.bf16.msra.mxu0 0
  %427 = vmatprep.subr.bf16.mxu0 0
  %428 = vmatpush1.bf16.msra.mxu0 0
  %429 = vmatprep.mubr.bf16.mxu0 0
  %430 = vmatmul.mubr.bf16.gmra.mrb[0].mxu0 %v395
  %v431 = vpop.f32.mrb[0].mxu0
  %v432 = vadd.f32 %v348, %v431
  %v433 = vpop.f32.mrb[0].mxu0
  %v434 = vadd.f32 %v350, %v433
  %v435 = vpop.f32.mrb[0].mxu0
  %v436 = vpop.f32.mrb[0].mxu0
  %437 = vdwg.mxu0
  %v438 = vpack.c.bf16 %v212, %v212
  %s439 = scalar_lea.vmem %s2, 128
  %v440 = vld [vmem:[%s439] sm:$0xff]
  %v441 = vld [vmem:[%s439 + $0x8] sm:$0xff]
  %v442 = vld [vmem:[%s439 + $0x10] sm:$0xff]
  %v443 = vld [vmem:[%s439 + $0x18] sm:$0xff]
  %v444 = vld [vmem:[%s439 + $0x20] sm:$0xff]
  %v445 = vld [vmem:[%s439 + $0x28] sm:$0xff]
  %v446 = vld [vmem:[%s439 + $0x30] sm:$0xff]
  %v447 = vld [vmem:[%s439 + $0x38] sm:$0xff]
  %v456 = vunpack.c.l.b16 %v440
  %v457 = vunpack.c.h.b16 %v440
  %v458 = vunpack.c.l.b16 %v441
  %v459 = vunpack.c.h.b16 %v441
  %v460 = vunpack.c.l.b16 %v442
  %v461 = vunpack.c.h.b16 %v442
  %v462 = vunpack.c.l.b16 %v443
  %v463 = vunpack.c.h.b16 %v443
  %v464 = vunpack.c.l.b16 %v444
  %v465 = vunpack.c.h.b16 %v444
  %v466 = vunpack.c.l.b16 %v445
  %v467 = vunpack.c.h.b16 %v445
  %v468 = vunpack.c.l.b16 %v446
  %v469 = vunpack.c.h.b16 %v446
  %v470 = vunpack.c.l.b16 %v447
  %v471 = vunpack.c.h.b16 %v447
  %v472 = vpack.c.b16 %v458, %v456
  %v473 = vpack.c.b16 %v459, %v457
  %v474 = vpack.c.b16 %v462, %v460
  %v475 = vpack.c.b16 %v463, %v461
  %v476 = vpack.c.b16 %v466, %v464
  %v477 = vpack.c.b16 %v467, %v465
  %v478 = vpack.c.b16 %v470, %v468
  %v479 = vpack.c.b16 %v471, %v469
  %v489 = vsel %vm309, %v438, 0
  %491 = vmatprep.subr.bf16.mxu0 %v473
  %492 = vmatpush1.bf16.msra.mxu0 %v472
  %493 = vmatprep.subr.bf16.mxu0 %v475
  %494 = vmatpush1.bf16.msra.mxu0 %v474
  %495 = vmatprep.subr.bf16.mxu0 %v477
  %496 = vmatpush1.bf16.msra.mxu0 %v476
  %497 = vmatprep.subr.bf16.mxu0 %v479
  %498 = vmatpush1.bf16.msra.mxu0 %v478
  %499 = vmatprep.subr.bf16.mxu0 0
  %500 = vmatpush1.bf16.msra.mxu0 0
  %501 = vmatprep.subr.bf16.mxu0 0
  %502 = vmatpush1.bf16.msra.mxu0 0
  %503 = vmatprep.subr.bf16.mxu0 0
  %504 = vmatpush1.bf16.msra.mxu0 0
  %505 = vmatprep.subr.bf16.mxu0 0
  %506 = vmatpush1.bf16.msra.mxu0 0
  %507 = vmatprep.subr.bf16.mxu0 0
  %508 = vmatpush1.bf16.msra.mxu0 0
  %509 = vmatprep.subr.bf16.mxu0 0
  %510 = vmatpush1.bf16.msra.mxu0 0
  %511 = vmatprep.subr.bf16.mxu0 0
  %512 = vmatpush1.bf16.msra.mxu0 0
  %513 = vmatprep.subr.bf16.mxu0 0
  %514 = vmatpush1.bf16.msra.mxu0 0
  %515 = vmatprep.subr.bf16.mxu0 0
  %516 = vmatpush1.bf16.msra.mxu0 0
  %517 = vmatprep.subr.bf16.mxu0 0
  %518 = vmatpush1.bf16.msra.mxu0 0
  %519 = vmatprep.subr.bf16.mxu0 0
  %520 = vmatpush1.bf16.msra.mxu0 0
  %521 = vmatprep.subr.bf16.mxu0 0
  %522 = vmatpush1.bf16.msra.mxu0 0
  %523 = vmatprep.mubr.bf16.mxu0 0
  %524 = vmatmul.mubr.bf16.gmra.mrb[0].mxu0 %v489
  %v525 = vpop.f32.mrb[0].mxu0
  %v526 = vadd.f32 0.0, %v525
  %v527 = vpop.f32.mrb[0].mxu0
  %v528 = vadd.f32 0.0, %v527
  %v529 = vpop.f32.mrb[0].mxu0
  %v530 = vpop.f32.mrb[0].mxu0
  %531 = vdwg.mxu0
  %v532 = vadd.f32 %v432, %v526
  %v533 = vadd.f32 %v434, %v528
  %v534 = vpack.c.bf16 %v215, %v215
  %s535 = scalar_lea.vmem %s2, 192
  %v536 = vld [vmem:[%s535] sm:$0xff]
  %v537 = vld [vmem:[%s535 + $0x8] sm:$0xff]
  %v538 = vld [vmem:[%s535 + $0x10] sm:$0xff]
  %v539 = vld [vmem:[%s535 + $0x18] sm:$0xff]
  %v540 = vld [vmem:[%s535 + $0x20] sm:$0xff]
  %v541 = vld [vmem:[%s535 + $0x28] sm:$0xff]
  %v542 = vld [vmem:[%s535 + $0x30] sm:$0xff]
  %v543 = vld [vmem:[%s535 + $0x38] sm:$0xff]
  %v552 = vunpack.c.l.b16 %v536
  %v553 = vunpack.c.h.b16 %v536
  %v554 = vunpack.c.l.b16 %v537
  %v555 = vunpack.c.h.b16 %v537
  %v556 = vunpack.c.l.b16 %v538
  %v557 = vunpack.c.h.b16 %v538
  %v558 = vunpack.c.l.b16 %v539
  %v559 = vunpack.c.h.b16 %v539
  %v560 = vunpack.c.l.b16 %v540
  %v561 = vunpack.c.h.b16 %v540
  %v562 = vunpack.c.l.b16 %v541
  %v563 = vunpack.c.h.b16 %v541
  %v564 = vunpack.c.l.b16 %v542
  %v565 = vunpack.c.h.b16 %v542
  %v566 = vunpack.c.l.b16 %v543
  %v567 = vunpack.c.h.b16 %v543
  %v568 = vpack.c.b16 %v554, %v552
  %v569 = vpack.c.b16 %v555, %v553
  %v570 = vpack.c.b16 %v558, %v556
  %v571 = vpack.c.b16 %v559, %v557
  %v572 = vpack.c.b16 %v562, %v560
  %v573 = vpack.c.b16 %v563, %v561
  %v574 = vpack.c.b16 %v566, %v564
  %v575 = vpack.c.b16 %v567, %v565
  %v585 = vsel %vm309, %v534, 0
  %587 = vmatprep.subr.bf16.mxu0 %v569
  %588 = vmatpush1.bf16.msra.mxu0 %v568
  %589 = vmatprep.subr.bf16.mxu0 %v571
  %590 = vmatpush1.bf16.msra.mxu0 %v570
  %591 = vmatprep.subr.bf16.mxu0 %v573
  %592 = vmatpush1.bf16.msra.mxu0 %v572
  %593 = vmatprep.subr.bf16.mxu0 %v575
  %594 = vmatpush1.bf16.msra.mxu0 %v574
  %595 = vmatprep.subr.bf16.mxu0 0
  %596 = vmatpush1.bf16.msra.mxu0 0
  %597 = vmatprep.subr.bf16.mxu0 0
  %598 = vmatpush1.bf16.msra.mxu0 0
  %599 = vmatprep.subr.bf16.mxu0 0
  %600 = vmatpush1.bf16.msra.mxu0 0
  %601 = vmatprep.subr.bf16.mxu0 0
  %602 = vmatpush1.bf16.msra.mxu0 0
  %603 = vmatprep.subr.bf16.mxu0 0
  %604 = vmatpush1.bf16.msra.mxu0 0
  %605 = vmatprep.subr.bf16.mxu0 0
  %606 = vmatpush1.bf16.msra.mxu0 0
  %607 = vmatprep.subr.bf16.mxu0 0
  %608 = vmatpush1.bf16.msra.mxu0 0
  %609 = vmatprep.subr.bf16.mxu0 0
  %610 = vmatpush1.bf16.msra.mxu0 0
  %611 = vmatprep.subr.bf16.mxu0 0
  %612 = vmatpush1.bf16.msra.mxu0 0
  %613 = vmatprep.subr.bf16.mxu0 0
  %614 = vmatpush1.bf16.msra.mxu0 0
  %615 = vmatprep.subr.bf16.mxu0 0
  %616 = vmatpush1.bf16.msra.mxu0 0
  %617 = vmatprep.subr.bf16.mxu0 0
  %618 = vmatpush1.bf16.msra.mxu0 0
  %619 = vmatprep.mubr.bf16.mxu0 0
  %620 = vmatmul.mubr.bf16.gmra.mrb[0].mxu0 %v585
  %v621 = vpop.f32.mrb[0].mxu0
  %v622 = vadd.f32 0.0, %v621
  %v623 = vpop.f32.mrb[0].mxu0
  %v624 = vadd.f32 0.0, %v623
  %v625 = vpop.f32.mrb[0].mxu0
  %v626 = vpop.f32.mrb[0].mxu0
  %627 = vdwg.mxu0
  %v628 = vadd.f32 %v532, %v622
  %v629 = vadd.f32 %v533, %v624
  %v630 = vpack.c.bf16 %v220, %v220
  %s631 = scalar_lea.vmem %s2, 256
  %v632 = vld [vmem:[%s631] sm:$0xff]
  %v633 = vld [vmem:[%s631 + $0x8] sm:$0xff]
  %v634 = vld [vmem:[%s631 + $0x10] sm:$0xff]
  %v635 = vld [vmem:[%s631 + $0x18] sm:$0xff]
  %v636 = vld [vmem:[%s631 + $0x20] sm:$0xff]
  %v637 = vld [vmem:[%s631 + $0x28] sm:$0xff]
  %v638 = vld [vmem:[%s631 + $0x30] sm:$0xff]
  %v639 = vld [vmem:[%s631 + $0x38] sm:$0xff]
  %v648 = vunpack.c.l.b16 %v632
  %v649 = vunpack.c.h.b16 %v632
  %v650 = vunpack.c.l.b16 %v633
  %v651 = vunpack.c.h.b16 %v633
  %v652 = vunpack.c.l.b16 %v634
  %v653 = vunpack.c.h.b16 %v634
  %v654 = vunpack.c.l.b16 %v635
  %v655 = vunpack.c.h.b16 %v635
  %v656 = vunpack.c.l.b16 %v636
  %v657 = vunpack.c.h.b16 %v636
  %v658 = vunpack.c.l.b16 %v637
  %v659 = vunpack.c.h.b16 %v637
  %v660 = vunpack.c.l.b16 %v638
  %v661 = vunpack.c.h.b16 %v638
  %v662 = vunpack.c.l.b16 %v639
  %v663 = vunpack.c.h.b16 %v639
  %v664 = vpack.c.b16 %v650, %v648
  %v665 = vpack.c.b16 %v651, %v649
  %v666 = vpack.c.b16 %v654, %v652
  %v667 = vpack.c.b16 %v655, %v653
  %v668 = vpack.c.b16 %v658, %v656
  %v669 = vpack.c.b16 %v659, %v657
  %v670 = vpack.c.b16 %v662, %v660
  %v671 = vpack.c.b16 %v663, %v661
  %v681 = vsel %vm309, %v630, 0
  %683 = vmatprep.subr.bf16.mxu0 %v665
  %684 = vmatpush1.bf16.msra.mxu0 %v664
  %685 = vmatprep.subr.bf16.mxu0 %v667
  %686 = vmatpush1.bf16.msra.mxu0 %v666
  %687 = vmatprep.subr.bf16.mxu0 %v669
  %688 = vmatpush1.bf16.msra.mxu0 %v668
  %689 = vmatprep.subr.bf16.mxu0 %v671
  %690 = vmatpush1.bf16.msra.mxu0 %v670
  %691 = vmatprep.subr.bf16.mxu0 0
  %692 = vmatpush1.bf16.msra.mxu0 0
  %693 = vmatprep.subr.bf16.mxu0 0
  %694 = vmatpush1.bf16.msra.mxu0 0
  %695 = vmatprep.subr.bf16.mxu0 0
  %696 = vmatpush1.bf16.msra.mxu0 0
  %697 = vmatprep.subr.bf16.mxu0 0
  %698 = vmatpush1.bf16.msra.mxu0 0
  %699 = vmatprep.subr.bf16.mxu0 0
  %700 = vmatpush1.bf16.msra.mxu0 0
  %701 = vmatprep.subr.bf16.mxu0 0
  %702 = vmatpush1.bf16.msra.mxu0 0
  %703 = vmatprep.subr.bf16.mxu0 0
  %704 = vmatpush1.bf16.msra.mxu0 0
  %705 = vmatprep.subr.bf16.mxu0 0
  %706 = vmatpush1.bf16.msra.mxu0 0
  %707 = vmatprep.subr.bf16.mxu0 0
  %708 = vmatpush1.bf16.msra.mxu0 0
  %709 = vmatprep.subr.bf16.mxu0 0
  %710 = vmatpush1.bf16.msra.mxu0 0
  %711 = vmatprep.subr.bf16.mxu0 0
  %712 = vmatpush1.bf16.msra.mxu0 0
  %713 = vmatprep.subr.bf16.mxu0 0
  %714 = vmatpush1.bf16.msra.mxu0 0
  %715 = vmatprep.mubr.bf16.mxu0 0
  %716 = vmatmul.mubr.bf16.gmra.mrb[0].mxu0 %v681
  %v717 = vpop.f32.mrb[0].mxu0
  %v718 = vadd.f32 0.0, %v717
  %v719 = vpop.f32.mrb[0].mxu0
  %v720 = vadd.f32 0.0, %v719
  %v721 = vpop.f32.mrb[0].mxu0
  %v722 = vpop.f32.mrb[0].mxu0
  %723 = vdwg.mxu0
  %v724 = vadd.f32 %v628, %v718
  %v725 = vadd.f32 %v629, %v720
  %v726 = vpack.c.bf16 %v223, %v223
  %s727 = scalar_lea.vmem %s2, 320
  %v728 = vld [vmem:[%s727] sm:$0xff]
  %v729 = vld [vmem:[%s727 + $0x8] sm:$0xff]
  %v730 = vld [vmem:[%s727 + $0x10] sm:$0xff]
  %v731 = vld [vmem:[%s727 + $0x18] sm:$0xff]
  %v732 = vld [vmem:[%s727 + $0x20] sm:$0xff]
  %v733 = vld [vmem:[%s727 + $0x28] sm:$0xff]
  %v734 = vld [vmem:[%s727 + $0x30] sm:$0xff]
  %v735 = vld [vmem:[%s727 + $0x38] sm:$0xff]
  %v744 = vunpack.c.l.b16 %v728
  %v745 = vunpack.c.h.b16 %v728
  %v746 = vunpack.c.l.b16 %v729
  %v747 = vunpack.c.h.b16 %v729
  %v748 = vunpack.c.l.b16 %v730
  %v749 = vunpack.c.h.b16 %v730
  %v750 = vunpack.c.l.b16 %v731
  %v751 = vunpack.c.h.b16 %v731
  %v752 = vunpack.c.l.b16 %v732
  %v753 = vunpack.c.h.b16 %v732
  %v754 = vunpack.c.l.b16 %v733
  %v755 = vunpack.c.h.b16 %v733
  %v756 = vunpack.c.l.b16 %v734
  %v757 = vunpack.c.h.b16 %v734
  %v758 = vunpack.c.l.b16 %v735
  %v759 = vunpack.c.h.b16 %v735
  %v760 = vpack.c.b16 %v746, %v744
  %v761 = vpack.c.b16 %v747, %v745
  %v762 = vpack.c.b16 %v750, %v748
  %v763 = vpack.c.b16 %v751, %v749
  %v764 = vpack.c.b16 %v754, %v752
  %v765 = vpack.c.b16 %v755, %v753
  %v766 = vpack.c.b16 %v758, %v756
  %v767 = vpack.c.b16 %v759, %v757
  %v777 = vsel %vm309, %v726, 0
  %779 = vmatprep.subr.bf16.mxu0 %v761
  %780 = vmatpush1.bf16.msra.mxu0 %v760
  %781 = vmatprep.subr.bf16.mxu0 %v763
  %782 = vmatpush1.bf16.msra.mxu0 %v762
  %783 = vmatprep.subr.bf16.mxu0 %v765
  %784 = vmatpush1.bf16.msra.mxu0 %v764
  %785 = vmatprep.subr.bf16.mxu0 %v767
  %786 = vmatpush1.bf16.msra.mxu0 %v766
  %787 = vmatprep.subr.bf16.mxu0 0
  %788 = vmatpush1.bf16.msra.mxu0 0
  %789 = vmatprep.subr.bf16.mxu0 0
  %790 = vmatpush1.bf16.msra.mxu0 0
  %791 = vmatprep.subr.bf16.mxu0 0
  %792 = vmatpush1.bf16.msra.mxu0 0
  %793 = vmatprep.subr.bf16.mxu0 0
  %794 = vmatpush1.bf16.msra.mxu0 0
  %795 = vmatprep.subr.bf16.mxu0 0
  %796 = vmatpush1.bf16.msra.mxu0 0
  %797 = vmatprep.subr.bf16.mxu0 0
  %798 = vmatpush1.bf16.msra.mxu0 0
  %799 = vmatprep.subr.bf16.mxu0 0
  %800 = vmatpush1.bf16.msra.mxu0 0
  %801 = vmatprep.subr.bf16.mxu0 0
  %802 = vmatpush1.bf16.msra.mxu0 0
  %803 = vmatprep.subr.bf16.mxu0 0
  %804 = vmatpush1.bf16.msra.mxu0 0
  %805 = vmatprep.subr.bf16.mxu0 0
  %806 = vmatpush1.bf16.msra.mxu0 0
  %807 = vmatprep.subr.bf16.mxu0 0
  %808 = vmatpush1.bf16.msra.mxu0 0
  %809 = vmatprep.subr.bf16.mxu0 0
  %810 = vmatpush1.bf16.msra.mxu0 0
  %811 = vmatprep.mubr.bf16.mxu0 0
  %812 = vmatmul.mubr.bf16.gmra.mrb[0].mxu0 %v777
  %v813 = vpop.f32.mrb[0].mxu0
  %v814 = vadd.f32 0.0, %v813
  %v815 = vpop.f32.mrb[0].mxu0
  %v816 = vadd.f32 0.0, %v815
  %v817 = vpop.f32.mrb[0].mxu0
  %v818 = vpop.f32.mrb[0].mxu0
  %819 = vdwg.mxu0
  %v820 = vadd.f32 %v724, %v814
  %v821 = vadd.f32 %v725, %v816
  %v822 = vpack.c.bf16 %v228, %v228
  %s823 = scalar_lea.vmem %s2, 384
  %v824 = vld [vmem:[%s823] sm:$0xff]
  %v825 = vld [vmem:[%s823 + $0x8] sm:$0xff]
  %v826 = vld [vmem:[%s823 + $0x10] sm:$0xff]
  %v827 = vld [vmem:[%s823 + $0x18] sm:$0xff]
  %v828 = vld [vmem:[%s823 + $0x20] sm:$0xff]
  %v829 = vld [vmem:[%s823 + $0x28] sm:$0xff]
  %v830 = vld [vmem:[%s823 + $0x30] sm:$0xff]
  %v831 = vld [vmem:[%s823 + $0x38] sm:$0xff]
  %v840 = vunpack.c.l.b16 %v824
  %v841 = vunpack.c.h.b16 %v824
  %v842 = vunpack.c.l.b16 %v825
  %v843 = vunpack.c.h.b16 %v825
  %v844 = vunpack.c.l.b16 %v826
  %v845 = vunpack.c.h.b16 %v826
  %v846 = vunpack.c.l.b16 %v827
  %v847 = vunpack.c.h.b16 %v827
  %v848 = vunpack.c.l.b16 %v828
  %v849 = vunpack.c.h.b16 %v828
  %v850 = vunpack.c.l.b16 %v829
  %v851 = vunpack.c.h.b16 %v829
  %v852 = vunpack.c.l.b16 %v830
  %v853 = vunpack.c.h.b16 %v830
  %v854 = vunpack.c.l.b16 %v831
  %v855 = vunpack.c.h.b16 %v831
  %v856 = vpack.c.b16 %v842, %v840
  %v857 = vpack.c.b16 %v843, %v841
  %v858 = vpack.c.b16 %v846, %v844
  %v859 = vpack.c.b16 %v847, %v845
  %v860 = vpack.c.b16 %v850, %v848
  %v861 = vpack.c.b16 %v851, %v849
  %v862 = vpack.c.b16 %v854, %v852
  %v863 = vpack.c.b16 %v855, %v853
  %v873 = vsel %vm309, %v822, 0
  %875 = vmatprep.subr.bf16.mxu0 %v857
  %876 = vmatpush1.bf16.msra.mxu0 %v856
  %877 = vmatprep.subr.bf16.mxu0 %v859
  %878 = vmatpush1.bf16.msra.mxu0 %v858
  %879 = vmatprep.subr.bf16.mxu0 %v861
  %880 = vmatpush1.bf16.msra.mxu0 %v860
  %881 = vmatprep.subr.bf16.mxu0 %v863
  %882 = vmatpush1.bf16.msra.mxu0 %v862
  %883 = vmatprep.subr.bf16.mxu0 0
  %884 = vmatpush1.bf16.msra.mxu0 0
  %885 = vmatprep.subr.bf16.mxu0 0
  %886 = vmatpush1.bf16.msra.mxu0 0
  %887 = vmatprep.subr.bf16.mxu0 0
  %888 = vmatpush1.bf16.msra.mxu0 0
  %889 = vmatprep.subr.bf16.mxu0 0
  %890 = vmatpush1.bf16.msra.mxu0 0
  %891 = vmatprep.subr.bf16.mxu0 0
  %892 = vmatpush1.bf16.msra.mxu0 0
  %893 = vmatprep.subr.bf16.mxu0 0
  %894 = vmatpush1.bf16.msra.mxu0 0
  %895 = vmatprep.subr.bf16.mxu0 0
  %896 = vmatpush1.bf16.msra.mxu0 0
  %897 = vmatprep.subr.bf16.mxu0 0
  %898 = vmatpush1.bf16.msra.mxu0 0
  %899 = vmatprep.subr.bf16.mxu0 0
  %900 = vmatpush1.bf16.msra.mxu0 0
  %901 = vmatprep.subr.bf16.mxu0 0
  %902 = vmatpush1.bf16.msra.mxu0 0
  %903 = vmatprep.subr.bf16.mxu0 0
  %904 = vmatpush1.bf16.msra.mxu0 0
  %905 = vmatprep.subr.bf16.mxu0 0
  %906 = vmatpush1.bf16.msra.mxu0 0
  %907 = vmatprep.mubr.bf16.mxu0 0
  %908 = vmatmul.mubr.bf16.gmra.mrb[0].mxu0 %v873
  %v909 = vpop.f32.mrb[0].mxu0
  %v910 = vadd.f32 0.0, %v909
  %v911 = vpop.f32.mrb[0].mxu0
  %v912 = vadd.f32 0.0, %v911
  %v913 = vpop.f32.mrb[0].mxu0
  %v914 = vpop.f32.mrb[0].mxu0
  %915 = vdwg.mxu0
  %v916 = vadd.f32 %v820, %v910
  %v917 = vadd.f32 %v821, %v912
  %v918 = vpack.c.bf16 %v231, %v231
  %s919 = scalar_lea.vmem %s2, 448
  %v920 = vld [vmem:[%s919] sm:$0xff]
  %v921 = vld [vmem:[%s919 + $0x8] sm:$0xff]
  %v922 = vld [vmem:[%s919 + $0x10] sm:$0xff]
  %v923 = vld [vmem:[%s919 + $0x18] sm:$0xff]
  %v924 = vld [vmem:[%s919 + $0x20] sm:$0xff]
  %v925 = vld [vmem:[%s919 + $0x28] sm:$0xff]
  %v926 = vld [vmem:[%s919 + $0x30] sm:$0xff]
  %v927 = vld [vmem:[%s919 + $0x38] sm:$0xff]
  %v936 = vunpack.c.l.b16 %v920
  %v937 = vunpack.c.h.b16 %v920
  %v938 = vunpack.c.l.b16 %v921
  %v939 = vunpack.c.h.b16 %v921
  %v940 = vunpack.c.l.b16 %v922
  %v941 = vunpack.c.h.b16 %v922
  %v942 = vunpack.c.l.b16 %v923
  %v943 = vunpack.c.h.b16 %v923
  %v944 = vunpack.c.l.b16 %v924
  %v945 = vunpack.c.h.b16 %v924
  %v946 = vunpack.c.l.b16 %v925
  %v947 = vunpack.c.h.b16 %v925
  %v948 = vunpack.c.l.b16 %v926
  %v949 = vunpack.c.h.b16 %v926
  %v950 = vunpack.c.l.b16 %v927
  %v951 = vunpack.c.h.b16 %v927
  %v952 = vpack.c.b16 %v938, %v936
  %v953 = vpack.c.b16 %v939, %v937
  %v954 = vpack.c.b16 %v942, %v940
  %v955 = vpack.c.b16 %v943, %v941
  %v956 = vpack.c.b16 %v946, %v944
  %v957 = vpack.c.b16 %v947, %v945
  %v958 = vpack.c.b16 %v950, %v948
  %v959 = vpack.c.b16 %v951, %v949
  %v969 = vsel %vm309, %v918, 0
  %971 = vmatprep.subr.bf16.mxu0 %v953
  %972 = vmatpush1.bf16.msra.mxu0 %v952
  %973 = vmatprep.subr.bf16.mxu0 %v955
  %974 = vmatpush1.bf16.msra.mxu0 %v954
  %975 = vmatprep.subr.bf16.mxu0 %v957
  %976 = vmatpush1.bf16.msra.mxu0 %v956
  %977 = vmatprep.subr.bf16.mxu0 %v959
  %978 = vmatpush1.bf16.msra.mxu0 %v958
  %979 = vmatprep.subr.bf16.mxu0 0
  %980 = vmatpush1.bf16.msra.mxu0 0
  %981 = vmatprep.subr.bf16.mxu0 0
  %982 = vmatpush1.bf16.msra.mxu0 0
  %983 = vmatprep.subr.bf16.mxu0 0
  %984 = vmatpush1.bf16.msra.mxu0 0
  %985 = vmatprep.subr.bf16.mxu0 0
  %986 = vmatpush1.bf16.msra.mxu0 0
  %987 = vmatprep.subr.bf16.mxu0 0
  %988 = vmatpush1.bf16.msra.mxu0 0
  %989 = vmatprep.subr.bf16.mxu0 0
  %990 = vmatpush1.bf16.msra.mxu0 0
  %991 = vmatprep.subr.bf16.mxu0 0
  %992 = vmatpush1.bf16.msra.mxu0 0
  %993 = vmatprep.subr.bf16.mxu0 0
  %994 = vmatpush1.bf16.msra.mxu0 0
  %995 = vmatprep.subr.bf16.mxu0 0
  %996 = vmatpush1.bf16.msra.mxu0 0
  %997 = vmatprep.subr.bf16.mxu0 0
  %998 = vmatpush1.bf16.msra.mxu0 0
  %999 = vmatprep.subr.bf16.mxu0 0
  %1000 = vmatpush1.bf16.msra.mxu0 0
  %1001 = vmatprep.subr.bf16.mxu0 0
  %1002 = vmatpush1.bf16.msra.mxu0 0
  %1003 = vmatprep.mubr.bf16.mxu0 0
  %1004 = vmatmul.mubr.bf16.gmra.mrb[0].mxu0 %v969
  %v1005 = vpop.f32.mrb[0].mxu0
  %v1006 = vadd.f32 0.0, %v1005
  %v1007 = vpop.f32.mrb[0].mxu0
  %v1008 = vadd.f32 0.0, %v1007
  %v1009 = vpop.f32.mrb[0].mxu0
  %v1010 = vpop.f32.mrb[0].mxu0
  %1011 = vdwg.mxu0
  %v1012 = vadd.f32 %v916, %v1006
  %v1013 = vadd.f32 %v917, %v1008
  %v1014 = vpack.c.bf16 %v236, %v236
  %s1015 = scalar_lea.vmem %s2, 512
  %v1016 = vld [vmem:[%s1015] sm:$0xff]
  %v1017 = vld [vmem:[%s1015 + $0x8] sm:$0xff]
  %v1018 = vld [vmem:[%s1015 + $0x10] sm:$0xff]
  %v1019 = vld [vmem:[%s1015 + $0x18] sm:$0xff]
  %v1020 = vld [vmem:[%s1015 + $0x20] sm:$0xff]
  %v1021 = vld [vmem:[%s1015 + $0x28] sm:$0xff]
  %v1022 = vld [vmem:[%s1015 + $0x30] sm:$0xff]
  %v1023 = vld [vmem:[%s1015 + $0x38] sm:$0xff]
  %v1032 = vunpack.c.l.b16 %v1016
  %v1033 = vunpack.c.h.b16 %v1016
  %v1034 = vunpack.c.l.b16 %v1017
  %v1035 = vunpack.c.h.b16 %v1017
  %v1036 = vunpack.c.l.b16 %v1018
  %v1037 = vunpack.c.h.b16 %v1018
  %v1038 = vunpack.c.l.b16 %v1019
  %v1039 = vunpack.c.h.b16 %v1019
  %v1040 = vunpack.c.l.b16 %v1020
  %v1041 = vunpack.c.h.b16 %v1020
  %v1042 = vunpack.c.l.b16 %v1021
  %v1043 = vunpack.c.h.b16 %v1021
  %v1044 = vunpack.c.l.b16 %v1022
  %v1045 = vunpack.c.h.b16 %v1022
  %v1046 = vunpack.c.l.b16 %v1023
  %v1047 = vunpack.c.h.b16 %v1023
  %v1048 = vpack.c.b16 %v1034, %v1032
  %v1049 = vpack.c.b16 %v1035, %v1033
  %v1050 = vpack.c.b16 %v1038, %v1036
  %v1051 = vpack.c.b16 %v1039, %v1037
  %v1052 = vpack.c.b16 %v1042, %v1040
  %v1053 = vpack.c.b16 %v1043, %v1041
  %v1054 = vpack.c.b16 %v1046, %v1044
  %v1055 = vpack.c.b16 %v1047, %v1045
  %v1065 = vsel %vm309, %v1014, 0
  %1067 = vmatprep.subr.bf16.mxu0 %v1049
  %1068 = vmatpush1.bf16.msra.mxu0 %v1048
  %1069 = vmatprep.subr.bf16.mxu0 %v1051
  %1070 = vmatpush1.bf16.msra.mxu0 %v1050
  %1071 = vmatprep.subr.bf16.mxu0 %v1053
  %1072 = vmatpush1.bf16.msra.mxu0 %v1052
  %1073 = vmatprep.subr.bf16.mxu0 %v1055
  %1074 = vmatpush1.bf16.msra.mxu0 %v1054
  %1075 = vmatprep.subr.bf16.mxu0 0
  %1076 = vmatpush1.bf16.msra.mxu0 0
  %1077 = vmatprep.subr.bf16.mxu0 0
  %1078 = vmatpush1.bf16.msra.mxu0 0
  %1079 = vmatprep.subr.bf16.mxu0 0
  %1080 = vmatpush1.bf16.msra.mxu0 0
  %1081 = vmatprep.subr.bf16.mxu0 0
  %1082 = vmatpush1.bf16.msra.mxu0 0
  %1083 = vmatprep.subr.bf16.mxu0 0
  %1084 = vmatpush1.bf16.msra.mxu0 0
  %1085 = vmatprep.subr.bf16.mxu0 0
  %1086 = vmatpush1.bf16.msra.mxu0 0
  %1087 = vmatprep.subr.bf16.mxu0 0
  %1088 = vmatpush1.bf16.msra.mxu0 0
  %1089 = vmatprep.subr.bf16.mxu0 0
  %1090 = vmatpush1.bf16.msra.mxu0 0
  %1091 = vmatprep.subr.bf16.mxu0 0
  %1092 = vmatpush1.bf16.msra.mxu0 0
  %1093 = vmatprep.subr.bf16.mxu0 0
  %1094 = vmatpush1.bf16.msra.mxu0 0
  %1095 = vmatprep.subr.bf16.mxu0 0
  %1096 = vmatpush1.bf16.msra.mxu0 0
  %1097 = vmatprep.subr.bf16.mxu0 0
  %1098 = vmatpush1.bf16.msra.mxu0 0
  %1099 = vmatprep.mubr.bf16.mxu0 0
  %1100 = vmatmul.mubr.bf16.gmra.mrb[0].mxu0 %v1065
  %v1101 = vpop.f32.mrb[0].mxu0
  %v1102 = vadd.f32 0.0, %v1101
  %v1103 = vpop.f32.mrb[0].mxu0
  %v1104 = vadd.f32 0.0, %v1103
  %v1105 = vpop.f32.mrb[0].mxu0
  %v1106 = vpop.f32.mrb[0].mxu0
  %1107 = vdwg.mxu0
  %v1108 = vadd.f32 %v1012, %v1102
  %v1109 = vadd.f32 %v1013, %v1104
  %v1110 = vpack.c.bf16 %v239, %v239
  %s1111 = scalar_lea.vmem %s2, 576
  %v1112 = vld [vmem:[%s1111] sm:$0xff]
  %v1113 = vld [vmem:[%s1111 + $0x8] sm:$0xff]
  %v1114 = vld [vmem:[%s1111 + $0x10] sm:$0xff]
  %v1115 = vld [vmem:[%s1111 + $0x18] sm:$0xff]
  %v1116 = vld [vmem:[%s1111 + $0x20] sm:$0xff]
  %v1117 = vld [vmem:[%s1111 + $0x28] sm:$0xff]
  %v1118 = vld [vmem:[%s1111 + $0x30] sm:$0xff]
  %v1119 = vld [vmem:[%s1111 + $0x38] sm:$0xff]
  %v1128 = vunpack.c.l.b16 %v1112
  %v1129 = vunpack.c.h.b16 %v1112
  %v1130 = vunpack.c.l.b16 %v1113
  %v1131 = vunpack.c.h.b16 %v1113
  %v1132 = vunpack.c.l.b16 %v1114
  %v1133 = vunpack.c.h.b16 %v1114
  %v1134 = vunpack.c.l.b16 %v1115
  %v1135 = vunpack.c.h.b16 %v1115
  %v1136 = vunpack.c.l.b16 %v1116
  %v1137 = vunpack.c.h.b16 %v1116
  %v1138 = vunpack.c.l.b16 %v1117
  %v1139 = vunpack.c.h.b16 %v1117
  %v1140 = vunpack.c.l.b16 %v1118
  %v1141 = vunpack.c.h.b16 %v1118
  %v1142 = vunpack.c.l.b16 %v1119
  %v1143 = vunpack.c.h.b16 %v1119
  %v1144 = vpack.c.b16 %v1130, %v1128
  %v1145 = vpack.c.b16 %v1131, %v1129
  %v1146 = vpack.c.b16 %v1134, %v1132
  %v1147 = vpack.c.b16 %v1135, %v1133
  %v1148 = vpack.c.b16 %v1138, %v1136
  %v1149 = vpack.c.b16 %v1139, %v1137
  %v1150 = vpack.c.b16 %v1142, %v1140
  %v1151 = vpack.c.b16 %v1143, %v1141
  %v1161 = vsel %vm309, %v1110, 0
  %1163 = vmatprep.subr.bf16.mxu0 %v1145
  %1164 = vmatpush1.bf16.msra.mxu0 %v1144
  %1165 = vmatprep.subr.bf16.mxu0 %v1147
  %1166 = vmatpush1.bf16.msra.mxu0 %v1146
  %1167 = vmatprep.subr.bf16.mxu0 %v1149
  %1168 = vmatpush1.bf16.msra.mxu0 %v1148
  %1169 = vmatprep.subr.bf16.mxu0 %v1151
  %1170 = vmatpush1.bf16.msra.mxu0 %v1150
  %1171 = vmatprep.subr.bf16.mxu0 0
  %1172 = vmatpush1.bf16.msra.mxu0 0
  %1173 = vmatprep.subr.bf16.mxu0 0
  %1174 = vmatpush1.bf16.msra.mxu0 0
  %1175 = vmatprep.subr.bf16.mxu0 0
  %1176 = vmatpush1.bf16.msra.mxu0 0
  %1177 = vmatprep.subr.bf16.mxu0 0
  %1178 = vmatpush1.bf16.msra.mxu0 0
  %1179 = vmatprep.subr.bf16.mxu0 0
  %1180 = vmatpush1.bf16.msra.mxu0 0
  %1181 = vmatprep.subr.bf16.mxu0 0
  %1182 = vmatpush1.bf16.msra.mxu0 0
  %1183 = vmatprep.subr.bf16.mxu0 0
  %1184 = vmatpush1.bf16.msra.mxu0 0
  %1185 = vmatprep.subr.bf16.mxu0 0
  %1186 = vmatpush1.bf16.msra.mxu0 0
  %1187 = vmatprep.subr.bf16.mxu0 0
  %1188 = vmatpush1.bf16.msra.mxu0 0
  %1189 = vmatprep.subr.bf16.mxu0 0
  %1190 = vmatpush1.bf16.msra.mxu0 0
  %1191 = vmatprep.subr.bf16.mxu0 0
  %1192 = vmatpush1.bf16.msra.mxu0 0
  %1193 = vmatprep.subr.bf16.mxu0 0
  %1194 = vmatpush1.bf16.msra.mxu0 0
  %1195 = vmatprep.mubr.bf16.mxu0 0
  %1196 = vmatmul.mubr.bf16.gmra.mrb[0].mxu0 %v1161
  %v1197 = vpop.f32.mrb[0].mxu0
  %v1198 = vadd.f32 0.0, %v1197
  %v1199 = vpop.f32.mrb[0].mxu0
  %v1200 = vadd.f32 0.0, %v1199
  %v1201 = vpop.f32.mrb[0].mxu0
  %v1202 = vpop.f32.mrb[0].mxu0
  %1203 = vdwg.mxu0
  %v1204 = vadd.f32 %v1108, %v1198
  %v1205 = vadd.f32 %v1109, %v1200
  %v1206 = vpack.c.bf16 %v244, %v244
  %s1207 = scalar_lea.vmem %s2, 640
  %v1208 = vld [vmem:[%s1207] sm:$0xff]
  %v1209 = vld [vmem:[%s1207 + $0x8] sm:$0xff]
  %v1210 = vld [vmem:[%s1207 + $0x10] sm:$0xff]
  %v1211 = vld [vmem:[%s1207 + $0x18] sm:$0xff]
  %v1212 = vld [vmem:[%s1207 + $0x20] sm:$0xff]
  %v1213 = vld [vmem:[%s1207 + $0x28] sm:$0xff]
  %v1214 = vld [vmem:[%s1207 + $0x30] sm:$0xff]
  %v1215 = vld [vmem:[%s1207 + $0x38] sm:$0xff]
  %v1224 = vunpack.c.l.b16 %v1208
  %v1225 = vunpack.c.h.b16 %v1208
  %v1226 = vunpack.c.l.b16 %v1209
  %v1227 = vunpack.c.h.b16 %v1209
  %v1228 = vunpack.c.l.b16 %v1210
  %v1229 = vunpack.c.h.b16 %v1210
  %v1230 = vunpack.c.l.b16 %v1211
  %v1231 = vunpack.c.h.b16 %v1211
  %v1232 = vunpack.c.l.b16 %v1212
  %v1233 = vunpack.c.h.b16 %v1212
  %v1234 = vunpack.c.l.b16 %v1213
  %v1235 = vunpack.c.h.b16 %v1213
  %v1236 = vunpack.c.l.b16 %v1214
  %v1237 = vunpack.c.h.b16 %v1214
  %v1238 = vunpack.c.l.b16 %v1215
  %v1239 = vunpack.c.h.b16 %v1215
  %v1240 = vpack.c.b16 %v1226, %v1224
  %v1241 = vpack.c.b16 %v1227, %v1225
  %v1242 = vpack.c.b16 %v1230, %v1228
  %v1243 = vpack.c.b16 %v1231, %v1229
  %v1244 = vpack.c.b16 %v1234, %v1232
  %v1245 = vpack.c.b16 %v1235, %v1233
  %v1246 = vpack.c.b16 %v1238, %v1236
  %v1247 = vpack.c.b16 %v1239, %v1237
  %v1257 = vsel %vm309, %v1206, 0
  %1259 = vmatprep.subr.bf16.mxu0 %v1241
  %1260 = vmatpush1.bf16.msra.mxu0 %v1240
  %1261 = vmatprep.subr.bf16.mxu0 %v1243
  %1262 = vmatpush1.bf16.msra.mxu0 %v1242
  %1263 = vmatprep.subr.bf16.mxu0 %v1245
  %1264 = vmatpush1.bf16.msra.mxu0 %v1244
  %1265 = vmatprep.subr.bf16.mxu0 %v1247
  %1266 = vmatpush1.bf16.msra.mxu0 %v1246
  %1267 = vmatprep.subr.bf16.mxu0 0
  %1268 = vmatpush1.bf16.msra.mxu0 0
  %1269 = vmatprep.subr.bf16.mxu0 0
  %1270 = vmatpush1.bf16.msra.mxu0 0
  %1271 = vmatprep.subr.bf16.mxu0 0
  %1272 = vmatpush1.bf16.msra.mxu0 0
  %1273 = vmatprep.subr.bf16.mxu0 0
  %1274 = vmatpush1.bf16.msra.mxu0 0
  %1275 = vmatprep.subr.bf16.mxu0 0
  %1276 = vmatpush1.bf16.msra.mxu0 0
  %1277 = vmatprep.subr.bf16.mxu0 0
  %1278 = vmatpush1.bf16.msra.mxu0 0
  %1279 = vmatprep.subr.bf16.mxu0 0
  %1280 = vmatpush1.bf16.msra.mxu0 0
  %1281 = vmatprep.subr.bf16.mxu0 0
  %1282 = vmatpush1.bf16.msra.mxu0 0
  %1283 = vmatprep.subr.bf16.mxu0 0
  %1284 = vmatpush1.bf16.msra.mxu0 0
  %1285 = vmatprep.subr.bf16.mxu0 0
  %1286 = vmatpush1.bf16.msra.mxu0 0
  %1287 = vmatprep.subr.bf16.mxu0 0
  %1288 = vmatpush1.bf16.msra.mxu0 0
  %1289 = vmatprep.subr.bf16.mxu0 0
  %1290 = vmatpush1.bf16.msra.mxu0 0
  %1291 = vmatprep.mubr.bf16.mxu0 0
  %1292 = vmatmul.mubr.bf16.gmra.mrb[0].mxu0 %v1257
  %v1293 = vpop.f32.mrb[0].mxu0
  %v1294 = vadd.f32 0.0, %v1293
  %v1295 = vpop.f32.mrb[0].mxu0
  %v1296 = vadd.f32 0.0, %v1295
  %v1297 = vpop.f32.mrb[0].mxu0
  %v1298 = vpop.f32.mrb[0].mxu0
  %1299 = vdwg.mxu0
  %v1300 = vadd.f32 %v1204, %v1294
  %v1301 = vadd.f32 %v1205, %v1296
  %v1302 = vpack.c.bf16 %v247, %v247
  %s1303 = scalar_lea.vmem %s2, 704
  %v1304 = vld [vmem:[%s1303] sm:$0xff]
  %v1305 = vld [vmem:[%s1303 + $0x8] sm:$0xff]
  %v1306 = vld [vmem:[%s1303 + $0x10] sm:$0xff]
  %v1307 = vld [vmem:[%s1303 + $0x18] sm:$0xff]
  %v1308 = vld [vmem:[%s1303 + $0x20] sm:$0xff]
  %v1309 = vld [vmem:[%s1303 + $0x28] sm:$0xff]
  %v1310 = vld [vmem:[%s1303 + $0x30] sm:$0xff]
  %v1311 = vld [vmem:[%s1303 + $0x38] sm:$0xff]
  %v1320 = vunpack.c.l.b16 %v1304
  %v1321 = vunpack.c.h.b16 %v1304
  %v1322 = vunpack.c.l.b16 %v1305
  %v1323 = vunpack.c.h.b16 %v1305
  %v1324 = vunpack.c.l.b16 %v1306
  %v1325 = vunpack.c.h.b16 %v1306
  %v1326 = vunpack.c.l.b16 %v1307
  %v1327 = vunpack.c.h.b16 %v1307
  %v1328 = vunpack.c.l.b16 %v1308
  %v1329 = vunpack.c.h.b16 %v1308
  %v1330 = vunpack.c.l.b16 %v1309
  %v1331 = vunpack.c.h.b16 %v1309
  %v1332 = vunpack.c.l.b16 %v1310
  %v1333 = vunpack.c.h.b16 %v1310
  %v1334 = vunpack.c.l.b16 %v1311
  %v1335 = vunpack.c.h.b16 %v1311
  %v1336 = vpack.c.b16 %v1322, %v1320
  %v1337 = vpack.c.b16 %v1323, %v1321
  %v1338 = vpack.c.b16 %v1326, %v1324
  %v1339 = vpack.c.b16 %v1327, %v1325
  %v1340 = vpack.c.b16 %v1330, %v1328
  %v1341 = vpack.c.b16 %v1331, %v1329
  %v1342 = vpack.c.b16 %v1334, %v1332
  %v1343 = vpack.c.b16 %v1335, %v1333
  %v1353 = vsel %vm309, %v1302, 0
  %1355 = vmatprep.subr.bf16.mxu0 %v1337
  %1356 = vmatpush1.bf16.msra.mxu0 %v1336
  %1357 = vmatprep.subr.bf16.mxu0 %v1339
  %1358 = vmatpush1.bf16.msra.mxu0 %v1338
  %1359 = vmatprep.subr.bf16.mxu0 %v1341
  %1360 = vmatpush1.bf16.msra.mxu0 %v1340
  %1361 = vmatprep.subr.bf16.mxu0 %v1343
  %1362 = vmatpush1.bf16.msra.mxu0 %v1342
  %1363 = vmatprep.subr.bf16.mxu0 0
  %1364 = vmatpush1.bf16.msra.mxu0 0
  %1365 = vmatprep.subr.bf16.mxu0 0
  %1366 = vmatpush1.bf16.msra.mxu0 0
  %1367 = vmatprep.subr.bf16.mxu0 0
  %1368 = vmatpush1.bf16.msra.mxu0 0
  %1369 = vmatprep.subr.bf16.mxu0 0
  %1370 = vmatpush1.bf16.msra.mxu0 0
  %1371 = vmatprep.subr.bf16.mxu0 0
  %1372 = vmatpush1.bf16.msra.mxu0 0
  %1373 = vmatprep.subr.bf16.mxu0 0
  %1374 = vmatpush1.bf16.msra.mxu0 0
  %1375 = vmatprep.subr.bf16.mxu0 0
  %1376 = vmatpush1.bf16.msra.mxu0 0
  %1377 = vmatprep.subr.bf16.mxu0 0
  %1378 = vmatpush1.bf16.msra.mxu0 0
  %1379 = vmatprep.subr.bf16.mxu0 0
  %1380 = vmatpush1.bf16.msra.mxu0 0
  %1381 = vmatprep.subr.bf16.mxu0 0
  %1382 = vmatpush1.bf16.msra.mxu0 0
  %1383 = vmatprep.subr.bf16.mxu0 0
  %1384 = vmatpush1.bf16.msra.mxu0 0
  %1385 = vmatprep.subr.bf16.mxu0 0
  %1386 = vmatpush1.bf16.msra.mxu0 0
  %1387 = vmatprep.mubr.bf16.mxu0 0
  %1388 = vmatmul.mubr.bf16.gmra.mrb[0].mxu0 %v1353
  %v1389 = vpop.f32.mrb[0].mxu0
  %v1390 = vadd.f32 0.0, %v1389
  %v1391 = vpop.f32.mrb[0].mxu0
  %v1392 = vadd.f32 0.0, %v1391
  %v1393 = vpop.f32.mrb[0].mxu0
  %v1394 = vpop.f32.mrb[0].mxu0
  %1395 = vdwg.mxu0
  %v1396 = vadd.f32 %v1300, %v1390
  %v1397 = vadd.f32 %v1301, %v1392
  %v1398 = vld [vmem:[%s3] sm:$0x3]
  %v1400 = vlaneseq
  %v1401 = vshrl.u32 %v1400, 7
  %v1402 = vsub.s32 0, %v1401
  %v1403 = vrot.slane %v1398, %v1402
  %v1404 = vlaneseq
  %v1405 = vshrl.u32 %v1404, 7
  %v1406 = vsub.s32 1, %v1405
  %v1407 = vrot.slane %v1398, %v1406
  %v1410 = vadd.f32 %v1396, %v1403
  %v1411 = vadd.f32 %v1397, %v1407
  %v1412 = vmul.f32 %v1410, %v1410
  %v1413 = vmul.f32 %v1411, %v1411
  %v1414 = vld [vmem:[%s4] sm:$0xff]
  %v1415 = vld [vmem:[%s4 + $0x8] sm:$0xff]
  %v1416 = vld [vmem:[%s4 + $0x10] sm:$0xff]
  %v1417 = vld [vmem:[%s4 + $0x18] sm:$0xff]
  %v1418 = vld [vmem:[%s4 + $0x20] sm:$0xff]
  %v1419 = vld [vmem:[%s4 + $0x28] sm:$0xff]
  %v1420 = vld [vmem:[%s4 + $0x30] sm:$0xff]
  %v1421 = vld [vmem:[%s4 + $0x38] sm:$0xff]
  %v1422 = vld [vmem:[%s4 + $0x40] sm:$0xff]
  %v1423 = vld [vmem:[%s4 + $0x48] sm:$0xff]
  %v1424 = vld [vmem:[%s4 + $0x50] sm:$0xff]
  %v1425 = vld [vmem:[%s4 + $0x58] sm:$0xff]
  %v1426 = vld [vmem:[%s4 + $0x60] sm:$0xff]
  %v1427 = vld [vmem:[%s4 + $0x68] sm:$0xff]
  %v1428 = vld [vmem:[%s4 + $0x70] sm:$0xff]
  %v1429 = vld [vmem:[%s4 + $0x78] sm:$0xff]
  %v1430 = vld [vmem:[%s4 + $0x80] sm:$0xff]
  %v1431 = vld [vmem:[%s4 + $0x88] sm:$0xff]
  %v1432 = vld [vmem:[%s4 + $0x90] sm:$0xff]
  %v1433 = vld [vmem:[%s4 + $0x98] sm:$0xff]
  %v1434 = vld [vmem:[%s4 + $0xa0] sm:$0xff]
  %v1435 = vld [vmem:[%s4 + $0xa8] sm:$0xff]
  %v1436 = vld [vmem:[%s4 + $0xb0] sm:$0xff]
  %v1437 = vld [vmem:[%s4 + $0xb8] sm:$0xff]
  %v1438 = vld [vmem:[%s4 + $0xc0] sm:$0xff]
  %v1439 = vld [vmem:[%s4 + $0xc8] sm:$0xff]
  %v1440 = vld [vmem:[%s4 + $0xd0] sm:$0xff]
  %v1441 = vld [vmem:[%s4 + $0xd8] sm:$0xff]
  %v1442 = vld [vmem:[%s4 + $0xe0] sm:$0xff]
  %v1443 = vld [vmem:[%s4 + $0xe8] sm:$0xff]
  %v1444 = vld [vmem:[%s4 + $0xf0] sm:$0xff]
  %v1445 = vld [vmem:[%s4 + $0xf8] sm:$0xff]
  %1446 = vmatprep.subr.mxu0 0.0
  %1447 = vmatpush1.msra.mxu0 %v1414
  %1448 = vmatprep.subr.mxu0 0.0
  %1449 = vmatpush1.msra.mxu0 %v1415
  %1450 = vmatprep.subr.mxu0 0.0
  %1451 = vmatpush1.msra.mxu0 %v1416
  %1452 = vmatprep.subr.mxu0 0.0
  %1453 = vmatpush1.msra.mxu0 %v1417
  %1454 = vmatprep.subr.mxu0 0.0
  %1455 = vmatpush1.msra.mxu0 %v1418
  %1456 = vmatprep.subr.mxu0 0.0
  %1457 = vmatpush1.msra.mxu0 %v1419
  %1458 = vmatprep.subr.mxu0 0.0
  %1459 = vmatpush1.msra.mxu0 %v1420
  %1460 = vmatprep.subr.mxu0 0.0
  %1461 = vmatpush1.msra.mxu0 %v1421
  %1462 = vmatprep.subr.mxu0 0.0
  %1463 = vmatpush1.msra.mxu0 %v1422
  %1464 = vmatprep.subr.mxu0 0.0
  %1465 = vmatpush1.msra.mxu0 %v1423
  %1466 = vmatprep.subr.mxu0 0.0
  %1467 = vmatpush1.msra.mxu0 %v1424
  %1468 = vmatprep.subr.mxu0 0.0
  %1469 = vmatpush1.msra.mxu0 %v1425
  %1470 = vmatprep.subr.mxu0 0.0
  %1471 = vmatpush1.msra.mxu0 %v1426
  %1472 = vmatprep.subr.mxu0 0.0
  %1473 = vmatpush1.msra.mxu0 %v1427
  %1474 = vmatprep.subr.mxu0 0.0
  %1475 = vmatpush1.msra.mxu0 %v1428
  %1476 = vmatprep.subr.mxu0 0.0
  %1477 = vmatpush1.msra.mxu0 %v1429
  %1478 = vmatprep.subr.mxu0 0.0
  %1479 = vmatpush1.msra.mxu0 %v1430
  %1480 = vmatprep.subr.mxu0 0.0
  %1481 = vmatpush1.msra.mxu0 %v1431
  %1482 = vmatprep.subr.mxu0 0.0
  %1483 = vmatpush1.msra.mxu0 %v1432
  %1484 = vmatprep.subr.mxu0 0.0
  %1485 = vmatpush1.msra.mxu0 %v1433
  %1486 = vmatprep.subr.mxu0 0.0
  %1487 = vmatpush1.msra.mxu0 %v1434
  %1488 = vmatprep.subr.mxu0 0.0
  %1489 = vmatpush1.msra.mxu0 %v1435
  %1490 = vmatprep.subr.mxu0 0.0
  %1491 = vmatpush1.msra.mxu0 %v1436
  %1492 = vmatprep.subr.mxu0 0.0
  %1493 = vmatpush1.msra.mxu0 %v1437
  %1494 = vmatprep.subr.mxu0 0.0
  %1495 = vmatpush1.msra.mxu0 %v1438
  %1496 = vmatprep.subr.mxu0 0.0
  %1497 = vmatpush1.msra.mxu0 %v1439
  %1498 = vmatprep.subr.mxu0 0.0
  %1499 = vmatpush1.msra.mxu0 %v1440
  %1500 = vmatprep.subr.mxu0 0.0
  %1501 = vmatpush1.msra.mxu0 %v1441
  %1502 = vmatprep.subr.mxu0 0.0
  %1503 = vmatpush1.msra.mxu0 %v1442
  %1504 = vmatprep.subr.mxu0 0.0
  %1505 = vmatpush1.msra.mxu0 %v1443
  %1506 = vmatprep.subr.mxu0 0.0
  %1507 = vmatpush1.msra.mxu0 %v1444
  %1508 = vmatprep.subr.mxu0 0.0
  %1509 = vmatpush1.msra.mxu0 %v1445
  %1510 = vmatprep.mubr.f32.mxu0 %v1413
  %1511 = vmatmul.mubr.f32.gmra.mrb[0].mxu0 %v1412
  %v1512 = vpop.f32.mrb[0].mxu0
  %v1513 = vadd.f32 0.0, %v1512
  %v1514 = vpop.f32.mrb[0].mxu0
  %1515 = vdwg.mxu0
  %v1516 = vrsqrt.pop %v1513
  %v1517 = vmul.f32 %v1513, %v1516
  %vm1518 = vcmp.eq.f32.partialorder %v1513, inf
  %v1519 = vsel %vm1518, %v1513, %v1517
  %vm1520 = vcmp.eq.f32.partialorder %v1513, 0.0
  %v1521 = vand.u32 %v1513, 2147483648
  %v1522 = vsel %vm1520, %v1521, %v1519
  %v1523 = vmax.f32 %v1522, 1e-12
  %v1524 = vrcp.pop %v1523
  %v1525 = vmul.f32 1.0, %v1524
  %v1526 = vld [vmem:[%s5] sm:$0xff]
  %v1527 = vld [vmem:[%s5 + $0x8] sm:$0xff]
  %vm1528 = vcmask 64512
  %v1530 = vsel %vm1528, %v1525, 0
  %1532 = vmatprep.subr.mxu0 %v1527
  %1533 = vmatpush1.msra.mxu0 %v1526
  %1534 = vmatprep.subr.mxu0 0.0
  %1535 = vmatpush1.msra.mxu0 0.0
  %1536 = vmatprep.subr.mxu0 0.0
  %1537 = vmatpush1.msra.mxu0 0.0
  %1538 = vmatprep.subr.mxu0 0.0
  %1539 = vmatpush1.msra.mxu0 0.0
  %1540 = vmatprep.subr.mxu0 0.0
  %1541 = vmatpush1.msra.mxu0 0.0
  %1542 = vmatprep.subr.mxu0 0.0
  %1543 = vmatpush1.msra.mxu0 0.0
  %1544 = vmatprep.subr.mxu0 0.0
  %1545 = vmatpush1.msra.mxu0 0.0
  %1546 = vmatprep.subr.mxu0 0.0
  %1547 = vmatpush1.msra.mxu0 0.0
  %1548 = vmatprep.subr.mxu0 0.0
  %1549 = vmatpush1.msra.mxu0 0.0
  %1550 = vmatprep.subr.mxu0 0.0
  %1551 = vmatpush1.msra.mxu0 0.0
  %1552 = vmatprep.subr.mxu0 0.0
  %1553 = vmatpush1.msra.mxu0 0.0
  %1554 = vmatprep.subr.mxu0 0.0
  %1555 = vmatpush1.msra.mxu0 0.0
  %1556 = vmatprep.subr.mxu0 0.0
  %1557 = vmatpush1.msra.mxu0 0.0
  %1558 = vmatprep.subr.mxu0 0.0
  %1559 = vmatpush1.msra.mxu0 0.0
  %1560 = vmatprep.subr.mxu0 0.0
  %1561 = vmatpush1.msra.mxu0 0.0
  %1562 = vmatprep.subr.mxu0 0.0
  %1563 = vmatpush1.msra.mxu0 0.0
  %1564 = vmatprep.subr.mxu0 0.0
  %1565 = vmatpush1.msra.mxu0 0.0
  %1566 = vmatprep.subr.mxu0 0.0
  %1567 = vmatpush1.msra.mxu0 0.0
  %1568 = vmatprep.subr.mxu0 0.0
  %1569 = vmatpush1.msra.mxu0 0.0
  %1570 = vmatprep.subr.mxu0 0.0
  %1571 = vmatpush1.msra.mxu0 0.0
  %1572 = vmatprep.subr.mxu0 0.0
  %1573 = vmatpush1.msra.mxu0 0.0
  %1574 = vmatprep.subr.mxu0 0.0
  %1575 = vmatpush1.msra.mxu0 0.0
  %1576 = vmatprep.subr.mxu0 0.0
  %1577 = vmatpush1.msra.mxu0 0.0
  %1578 = vmatprep.subr.mxu0 0.0
  %1579 = vmatpush1.msra.mxu0 0.0
  %1580 = vmatprep.subr.mxu0 0.0
  %1581 = vmatpush1.msra.mxu0 0.0
  %1582 = vmatprep.subr.mxu0 0.0
  %1583 = vmatpush1.msra.mxu0 0.0
  %1584 = vmatprep.subr.mxu0 0.0
  %1585 = vmatpush1.msra.mxu0 0.0
  %1586 = vmatprep.subr.mxu0 0.0
  %1587 = vmatpush1.msra.mxu0 0.0
  %1588 = vmatprep.subr.mxu0 0.0
  %1589 = vmatpush1.msra.mxu0 0.0
  %1590 = vmatprep.subr.mxu0 0.0
  %1591 = vmatpush1.msra.mxu0 0.0
  %1592 = vmatprep.subr.mxu0 0.0
  %1593 = vmatpush1.msra.mxu0 0.0
  %1594 = vmatprep.subr.mxu0 0.0
  %1595 = vmatpush1.msra.mxu0 0.0
  %1596 = vmatprep.mubr.f32.mxu0 0.0
  %1597 = vmatmul.mubr.f32.gmra.mrb[0].mxu0 %v1530
  %v1598 = vpop.f32.mrb[0].mxu0
  %v1599 = vadd.f32 0.0, %v1598
  %v1600 = vpop.f32.mrb[0].mxu0
  %v1601 = vadd.f32 0.0, %v1600
  %1602 = vdwg.mxu0
  %v1603 = vmul.f32 %v1410, %v1599
  %v1604 = vmul.f32 %v1411, %v1601
  %1605 = vst [vmem:[%s15] sm:$0xff] %v1603
  %1606 = vst [vmem:[%s15 + $0x8] sm:$0xff] %v1604
  %v1607 = vld [vmem:[%s9] sm:$0xf]
  %v1609 = vsel %vm1528, %v1607, 0
  %1611 = vmatprep.subr.mxu0 %v1604
  %1612 = vmatpush1.msra.mxu0 %v1603
  %1613 = vmatprep.subr.mxu0 0.0
  %1614 = vmatpush1.msra.mxu0 0.0
  %1615 = vmatprep.subr.mxu0 0.0
  %1616 = vmatpush1.msra.mxu0 0.0
  %1617 = vmatprep.subr.mxu0 0.0
  %1618 = vmatpush1.msra.mxu0 0.0
  %1619 = vmatprep.subr.mxu0 0.0
  %1620 = vmatpush1.msra.mxu0 0.0
  %1621 = vmatprep.subr.mxu0 0.0
  %1622 = vmatpush1.msra.mxu0 0.0
  %1623 = vmatprep.subr.mxu0 0.0
  %1624 = vmatpush1.msra.mxu0 0.0
  %1625 = vmatprep.subr.mxu0 0.0
  %1626 = vmatpush1.msra.mxu0 0.0
  %1627 = vmatprep.subr.mxu0 0.0
  %1628 = vmatpush1.msra.mxu0 0.0
  %1629 = vmatprep.subr.mxu0 0.0
  %1630 = vmatpush1.msra.mxu0 0.0
  %1631 = vmatprep.subr.mxu0 0.0
  %1632 = vmatpush1.msra.mxu0 0.0
  %1633 = vmatprep.subr.mxu0 0.0
  %1634 = vmatpush1.msra.mxu0 0.0
  %1635 = vmatprep.subr.mxu0 0.0
  %1636 = vmatpush1.msra.mxu0 0.0
  %1637 = vmatprep.subr.mxu0 0.0
  %1638 = vmatpush1.msra.mxu0 0.0
  %1639 = vmatprep.subr.mxu0 0.0
  %1640 = vmatpush1.msra.mxu0 0.0
  %1641 = vmatprep.subr.mxu0 0.0
  %1642 = vmatpush1.msra.mxu0 0.0
  %1643 = vmatprep.subr.mxu0 0.0
  %1644 = vmatpush1.msra.mxu0 0.0
  %1645 = vmatprep.subr.mxu0 0.0
  %1646 = vmatpush1.msra.mxu0 0.0
  %1647 = vmatprep.subr.mxu0 0.0
  %1648 = vmatpush1.msra.mxu0 0.0
  %1649 = vmatprep.subr.mxu0 0.0
  %1650 = vmatpush1.msra.mxu0 0.0
  %1651 = vmatprep.subr.mxu0 0.0
  %1652 = vmatpush1.msra.mxu0 0.0
  %1653 = vmatprep.subr.mxu0 0.0
  %1654 = vmatpush1.msra.mxu0 0.0
  %1655 = vmatprep.subr.mxu0 0.0
  %1656 = vmatpush1.msra.mxu0 0.0
  %1657 = vmatprep.subr.mxu0 0.0
  %1658 = vmatpush1.msra.mxu0 0.0
  %1659 = vmatprep.subr.mxu0 0.0
  %1660 = vmatpush1.msra.mxu0 0.0
  %1661 = vmatprep.subr.mxu0 0.0
  %1662 = vmatpush1.msra.mxu0 0.0
  %1663 = vmatprep.subr.mxu0 0.0
  %1664 = vmatpush1.msra.mxu0 0.0
  %1665 = vmatprep.subr.mxu0 0.0
  %1666 = vmatpush1.msra.mxu0 0.0
  %1667 = vmatprep.subr.mxu0 0.0
  %1668 = vmatpush1.msra.mxu0 0.0
  %1669 = vmatprep.subr.mxu0 0.0
  %1670 = vmatpush1.msra.mxu0 0.0
  %1671 = vmatprep.subr.mxu0 0.0
  %1672 = vmatpush1.msra.mxu0 0.0
  %1673 = vmatprep.subr.mxu0 0.0
  %1674 = vmatpush1.msra.mxu0 0.0
  %1675 = vmatprep.mubr.f32.mxu0 0.0
  %1676 = vmatmul.mubr.f32.gmra.mrb[0].mxu0 %v1609
  %v1677 = vpop.f32.mrb[0].mxu0
  %v1678 = vadd.f32 0.0, %v1677
  %v1679 = vpop.f32.mrb[0].mxu0
  %v1680 = vadd.f32 0.0, %v1679
  %1681 = vdwg.mxu0
  %v1682 = vld [vmem:[%s10] sm:$0xff]
  %v1683 = vld [vmem:[%s10 + $0x8] sm:$0xff]
  %v1684 = vld [vmem:[%s10 + $0x10] sm:$0xff]
  %v1685 = vld [vmem:[%s10 + $0x18] sm:$0xff]
  %v1686 = vld [vmem:[%s10 + $0x20] sm:$0xff]
  %v1687 = vld [vmem:[%s10 + $0x28] sm:$0xff]
  %v1688 = vld [vmem:[%s10 + $0x30] sm:$0xff]
  %v1689 = vld [vmem:[%s10 + $0x38] sm:$0xff]
  %v1690 = vld [vmem:[%s10 + $0x40] sm:$0xff]
  %v1691 = vld [vmem:[%s10 + $0x48] sm:$0xff]
  %v1692 = vld [vmem:[%s10 + $0x50] sm:$0xff]
  %v1693 = vld [vmem:[%s10 + $0x58] sm:$0xff]
  %v1694 = vld [vmem:[%s10 + $0x60] sm:$0xff]
  %v1695 = vld [vmem:[%s10 + $0x68] sm:$0xff]
  %v1696 = vld [vmem:[%s10 + $0x70] sm:$0xff]
  %v1697 = vld [vmem:[%s10 + $0x78] sm:$0xff]
  %v1698 = vld [vmem:[%s10 + $0x80] sm:$0xff]
  %v1699 = vld [vmem:[%s10 + $0x88] sm:$0xff]
  %v1700 = vld [vmem:[%s10 + $0x90] sm:$0xff]
  %v1701 = vld [vmem:[%s10 + $0x98] sm:$0xff]
  %v1702 = vld [vmem:[%s10 + $0xa0] sm:$0xff]
  %v1703 = vld [vmem:[%s10 + $0xa8] sm:$0xff]
  %v1704 = vld [vmem:[%s10 + $0xb0] sm:$0xff]
  %v1705 = vld [vmem:[%s10 + $0xb8] sm:$0xff]
  %v1706 = vld [vmem:[%s10 + $0xc0] sm:$0xff]
  %v1707 = vld [vmem:[%s10 + $0xc8] sm:$0xff]
  %v1708 = vld [vmem:[%s10 + $0xd0] sm:$0xff]
  %v1709 = vld [vmem:[%s10 + $0xd8] sm:$0xff]
  %v1710 = vld [vmem:[%s10 + $0xe0] sm:$0xff]
  %v1711 = vld [vmem:[%s10 + $0xe8] sm:$0xff]
  %v1712 = vld [vmem:[%s10 + $0xf0] sm:$0xff]
  %v1713 = vld [vmem:[%s10 + $0xf8] sm:$0xff]
  %1714 = vmatprep.subr.mxu0 0.0
  %1715 = vmatpush1.msra.mxu0 %v1682
  %1716 = vmatprep.subr.mxu0 0.0
  %1717 = vmatpush1.msra.mxu0 %v1683
  %1718 = vmatprep.subr.mxu0 0.0
  %1719 = vmatpush1.msra.mxu0 %v1684
  %1720 = vmatprep.subr.mxu0 0.0
  %1721 = vmatpush1.msra.mxu0 %v1685
  %1722 = vmatprep.subr.mxu0 0.0
  %1723 = vmatpush1.msra.mxu0 %v1686
  %1724 = vmatprep.subr.mxu0 0.0
  %1725 = vmatpush1.msra.mxu0 %v1687
  %1726 = vmatprep.subr.mxu0 0.0
  %1727 = vmatpush1.msra.mxu0 %v1688
  %1728 = vmatprep.subr.mxu0 0.0
  %1729 = vmatpush1.msra.mxu0 %v1689
  %1730 = vmatprep.subr.mxu0 0.0
  %1731 = vmatpush1.msra.mxu0 %v1690
  %1732 = vmatprep.subr.mxu0 0.0
  %1733 = vmatpush1.msra.mxu0 %v1691
  %1734 = vmatprep.subr.mxu0 0.0
  %1735 = vmatpush1.msra.mxu0 %v1692
  %1736 = vmatprep.subr.mxu0 0.0
  %1737 = vmatpush1.msra.mxu0 %v1693
  %1738 = vmatprep.subr.mxu0 0.0
  %1739 = vmatpush1.msra.mxu0 %v1694
  %1740 = vmatprep.subr.mxu0 0.0
  %1741 = vmatpush1.msra.mxu0 %v1695
  %1742 = vmatprep.subr.mxu0 0.0
  %1743 = vmatpush1.msra.mxu0 %v1696
  %1744 = vmatprep.subr.mxu0 0.0
  %1745 = vmatpush1.msra.mxu0 %v1697
  %1746 = vmatprep.subr.mxu0 0.0
  %1747 = vmatpush1.msra.mxu0 %v1698
  %1748 = vmatprep.subr.mxu0 0.0
  %1749 = vmatpush1.msra.mxu0 %v1699
  %1750 = vmatprep.subr.mxu0 0.0
  %1751 = vmatpush1.msra.mxu0 %v1700
  %1752 = vmatprep.subr.mxu0 0.0
  %1753 = vmatpush1.msra.mxu0 %v1701
  %1754 = vmatprep.subr.mxu0 0.0
  %1755 = vmatpush1.msra.mxu0 %v1702
  %1756 = vmatprep.subr.mxu0 0.0
  %1757 = vmatpush1.msra.mxu0 %v1703
  %1758 = vmatprep.subr.mxu0 0.0
  %1759 = vmatpush1.msra.mxu0 %v1704
  %1760 = vmatprep.subr.mxu0 0.0
  %1761 = vmatpush1.msra.mxu0 %v1705
  %1762 = vmatprep.subr.mxu0 0.0
  %1763 = vmatpush1.msra.mxu0 %v1706
  %1764 = vmatprep.subr.mxu0 0.0
  %1765 = vmatpush1.msra.mxu0 %v1707
  %1766 = vmatprep.subr.mxu0 0.0
  %1767 = vmatpush1.msra.mxu0 %v1708
  %1768 = vmatprep.subr.mxu0 0.0
  %1769 = vmatpush1.msra.mxu0 %v1709
  %1770 = vmatprep.subr.mxu0 0.0
  %1771 = vmatpush1.msra.mxu0 %v1710
  %1772 = vmatprep.subr.mxu0 0.0
  %1773 = vmatpush1.msra.mxu0 %v1711
  %1774 = vmatprep.subr.mxu0 0.0
  %1775 = vmatpush1.msra.mxu0 %v1712
  %1776 = vmatprep.subr.mxu0 0.0
  %1777 = vmatpush1.msra.mxu0 %v1713
  %1778 = vmatprep.mubr.f32.mxu0 %v1680
  %1779 = vmatmul.mubr.f32.gmra.mrb[0].mxu0 %v1678
  %v1780 = vpop.f32.mrb[0].mxu0
  %v1781 = vadd.f32 0.0, %v1780
  %v1782 = vpop.f32.mrb[0].mxu0
  %1783 = vdwg.mxu0
  %1784 = vst [vmem:[%s16] sm:$0xf] %v1781
  %v1785 = vld [vmem:[%s11] sm:$0xff]
  %v1786 = vld [vmem:[%s11 + $0x8] sm:$0xff]
  %v1787 = vld [vmem:[%s11 + $0x10] sm:$0xff]
  %v1788 = vld [vmem:[%s11 + $0x18] sm:$0xff]
  %v1789 = vld [vmem:[%s11 + $0x20] sm:$0xff]
  %v1790 = vld [vmem:[%s11 + $0x28] sm:$0xff]
  %v1791 = vld [vmem:[%s11 + $0x30] sm:$0xff]
  %v1792 = vld [vmem:[%s11 + $0x38] sm:$0xff]
  %v1793 = vld [vmem:[%s11 + $0x40] sm:$0xff]
  %v1794 = vld [vmem:[%s11 + $0x48] sm:$0xff]
  %v1795 = vld [vmem:[%s11 + $0x50] sm:$0xff]
  %v1796 = vld [vmem:[%s11 + $0x58] sm:$0xff]
  %v1797 = vld [vmem:[%s11 + $0x60] sm:$0xff]
  %v1798 = vld [vmem:[%s11 + $0x68] sm:$0xff]
  %v1799 = vld [vmem:[%s11 + $0x70] sm:$0xff]
  %v1800 = vld [vmem:[%s11 + $0x78] sm:$0xff]
  %v1801 = vld [vmem:[%s11 + $0x80] sm:$0xff]
  %v1802 = vld [vmem:[%s11 + $0x88] sm:$0xff]
  %v1803 = vld [vmem:[%s11 + $0x90] sm:$0xff]
  %v1804 = vld [vmem:[%s11 + $0x98] sm:$0xff]
  %v1805 = vld [vmem:[%s11 + $0xa0] sm:$0xff]
  %v1806 = vld [vmem:[%s11 + $0xa8] sm:$0xff]
  %v1807 = vld [vmem:[%s11 + $0xb0] sm:$0xff]
  %v1808 = vld [vmem:[%s11 + $0xb8] sm:$0xff]
  %v1809 = vld [vmem:[%s11 + $0xc0] sm:$0xff]
  %v1810 = vld [vmem:[%s11 + $0xc8] sm:$0xff]
  %v1811 = vld [vmem:[%s11 + $0xd0] sm:$0xff]
  %v1812 = vld [vmem:[%s11 + $0xd8] sm:$0xff]
  %v1813 = vld [vmem:[%s11 + $0xe0] sm:$0xff]
  %v1814 = vld [vmem:[%s11 + $0xe8] sm:$0xff]
  %v1815 = vld [vmem:[%s11 + $0xf0] sm:$0x1f]
  %v1816 = vmax.f32 %v1785, 0.0
  %v1817 = vmax.f32 %v1786, 0.0
  %v1818 = vmax.f32 %v1787, 0.0
  %v1819 = vmax.f32 %v1788, 0.0
  %v1820 = vmax.f32 %v1789, 0.0
  %v1821 = vmax.f32 %v1790, 0.0
  %v1822 = vmax.f32 %v1791, 0.0
  %v1823 = vmax.f32 %v1792, 0.0
  %v1824 = vmax.f32 %v1793, 0.0
  %v1825 = vmax.f32 %v1794, 0.0
  %v1826 = vmax.f32 %v1795, 0.0
  %v1827 = vmax.f32 %v1796, 0.0
  %v1828 = vmax.f32 %v1797, 0.0
  %v1829 = vmax.f32 %v1798, 0.0
  %v1830 = vmax.f32 %v1799, 0.0
  %v1831 = vmax.f32 %v1800, 0.0
  %v1832 = vmax.f32 %v1801, 0.0
  %v1833 = vmax.f32 %v1802, 0.0
  %v1834 = vmax.f32 %v1803, 0.0
  %v1835 = vmax.f32 %v1804, 0.0
  %v1836 = vmax.f32 %v1805, 0.0
  %v1837 = vmax.f32 %v1806, 0.0
  %v1838 = vmax.f32 %v1807, 0.0
  %v1839 = vmax.f32 %v1808, 0.0
  %v1840 = vmax.f32 %v1809, 0.0
  %v1841 = vmax.f32 %v1810, 0.0
  %v1842 = vmax.f32 %v1811, 0.0
  %v1843 = vmax.f32 %v1812, 0.0
  %v1844 = vmax.f32 %v1813, 0.0
  %v1845 = vmax.f32 %v1814, 0.0
  %v1846 = vmax.f32 %v1815, 0.0
  %v1847 = vmin.f32 %v1816, 7.0
  %v1848 = vmin.f32 %v1817, 7.0
  %v1849 = vmin.f32 %v1818, 7.0
  %v1850 = vmin.f32 %v1819, 7.0
  %v1851 = vmin.f32 %v1820, 7.0
  %v1852 = vmin.f32 %v1821, 7.0
  %v1853 = vmin.f32 %v1822, 7.0
  %v1854 = vmin.f32 %v1823, 7.0
  %v1855 = vmin.f32 %v1824, 7.0
  %v1856 = vmin.f32 %v1825, 7.0
  %v1857 = vmin.f32 %v1826, 7.0
  %v1858 = vmin.f32 %v1827, 7.0
  %v1859 = vmin.f32 %v1828, 7.0
  %v1860 = vmin.f32 %v1829, 7.0
  %v1861 = vmin.f32 %v1830, 7.0
  %v1862 = vmin.f32 %v1831, 7.0
  %v1863 = vmin.f32 %v1832, 7.0
  %v1864 = vmin.f32 %v1833, 7.0
  %v1865 = vmin.f32 %v1834, 7.0
  %v1866 = vmin.f32 %v1835, 7.0
  %v1867 = vmin.f32 %v1836, 7.0
  %v1868 = vmin.f32 %v1837, 7.0
  %v1869 = vmin.f32 %v1838, 7.0
  %v1870 = vmin.f32 %v1839, 7.0
  %v1871 = vmin.f32 %v1840, 7.0
  %v1872 = vmin.f32 %v1841, 7.0
  %v1873 = vmin.f32 %v1842, 7.0
  %v1874 = vmin.f32 %v1843, 7.0
  %v1875 = vmin.f32 %v1844, 7.0
  %v1876 = vmin.f32 %v1845, 7.0
  %v1877 = vmin.f32 %v1846, 7.0
  %v1878 = vlaneseq
  %v1879 = vand.u32 %v1878, 127
  %v1880 = vcvt.s32.f32 %v1879
  %1882 = vset.pattern.permute.xlu0 0
  %1883 = vperm.xlu0 %1882, %v1847
  %v1884 = vpop.permute.xlu0 %1883
  %1887 = vset.pattern.permute.xlu0 0
  %1888 = vperm.xlu0 %1887, %v1848
  %v1889 = vpop.permute.xlu0 %1888
  %1892 = vset.pattern.permute.xlu0 0
  %1893 = vperm.xlu0 %1892, %v1849
  %v1894 = vpop.permute.xlu0 %1893
  %1897 = vset.pattern.permute.xlu0 0
  %1898 = vperm.xlu0 %1897, %v1850
  %v1899 = vpop.permute.xlu0 %1898
  %1902 = vset.pattern.permute.xlu0 0
  %1903 = vperm.xlu0 %1902, %v1851
  %v1904 = vpop.permute.xlu0 %1903
  %1907 = vset.pattern.permute.xlu0 0
  %1908 = vperm.xlu0 %1907, %v1852
  %v1909 = vpop.permute.xlu0 %1908
  %1912 = vset.pattern.permute.xlu0 0
  %1913 = vperm.xlu0 %1912, %v1853
  %v1914 = vpop.permute.xlu0 %1913
  %1917 = vset.pattern.permute.xlu0 0
  %1918 = vperm.xlu0 %1917, %v1854
  %v1919 = vpop.permute.xlu0 %1918
  %1922 = vset.pattern.permute.xlu0 0
  %1923 = vperm.xlu0 %1922, %v1855
  %v1924 = vpop.permute.xlu0 %1923
  %1927 = vset.pattern.permute.xlu0 0
  %1928 = vperm.xlu0 %1927, %v1856
  %v1929 = vpop.permute.xlu0 %1928
  %1932 = vset.pattern.permute.xlu0 0
  %1933 = vperm.xlu0 %1932, %v1857
  %v1934 = vpop.permute.xlu0 %1933
  %1937 = vset.pattern.permute.xlu0 0
  %1938 = vperm.xlu0 %1937, %v1858
  %v1939 = vpop.permute.xlu0 %1938
  %1942 = vset.pattern.permute.xlu0 0
  %1943 = vperm.xlu0 %1942, %v1859
  %v1944 = vpop.permute.xlu0 %1943
  %1947 = vset.pattern.permute.xlu0 0
  %1948 = vperm.xlu0 %1947, %v1860
  %v1949 = vpop.permute.xlu0 %1948
  %1952 = vset.pattern.permute.xlu0 0
  %1953 = vperm.xlu0 %1952, %v1861
  %v1954 = vpop.permute.xlu0 %1953
  %1957 = vset.pattern.permute.xlu0 0
  %1958 = vperm.xlu0 %1957, %v1862
  %v1959 = vpop.permute.xlu0 %1958
  %1962 = vset.pattern.permute.xlu0 0
  %1963 = vperm.xlu0 %1962, %v1863
  %v1964 = vpop.permute.xlu0 %1963
  %1967 = vset.pattern.permute.xlu0 0
  %1968 = vperm.xlu0 %1967, %v1864
  %v1969 = vpop.permute.xlu0 %1968
  %1972 = vset.pattern.permute.xlu0 0
  %1973 = vperm.xlu0 %1972, %v1865
  %v1974 = vpop.permute.xlu0 %1973
  %1977 = vset.pattern.permute.xlu0 0
  %1978 = vperm.xlu0 %1977, %v1866
  %v1979 = vpop.permute.xlu0 %1978
  %1982 = vset.pattern.permute.xlu0 0
  %1983 = vperm.xlu0 %1982, %v1867
  %v1984 = vpop.permute.xlu0 %1983
  %1987 = vset.pattern.permute.xlu0 0
  %1988 = vperm.xlu0 %1987, %v1868
  %v1989 = vpop.permute.xlu0 %1988
  %1992 = vset.pattern.permute.xlu0 0
  %1993 = vperm.xlu0 %1992, %v1869
  %v1994 = vpop.permute.xlu0 %1993
  %1997 = vset.pattern.permute.xlu0 0
  %1998 = vperm.xlu0 %1997, %v1870
  %v1999 = vpop.permute.xlu0 %1998
  %2002 = vset.pattern.permute.xlu0 0
  %2003 = vperm.xlu0 %2002, %v1871
  %v2004 = vpop.permute.xlu0 %2003
  %2007 = vset.pattern.permute.xlu0 0
  %2008 = vperm.xlu0 %2007, %v1872
  %v2009 = vpop.permute.xlu0 %2008
  %2012 = vset.pattern.permute.xlu0 0
  %2013 = vperm.xlu0 %2012, %v1873
  %v2014 = vpop.permute.xlu0 %2013
  %2017 = vset.pattern.permute.xlu0 0
  %2018 = vperm.xlu0 %2017, %v1874
  %v2019 = vpop.permute.xlu0 %2018
  %2022 = vset.pattern.permute.xlu0 0
  %2023 = vperm.xlu0 %2022, %v1875
  %v2024 = vpop.permute.xlu0 %2023
  %2027 = vset.pattern.permute.xlu0 0
  %2028 = vperm.xlu0 %2027, %v1876
  %v2029 = vpop.permute.xlu0 %2028
  %2032 = vset.pattern.permute.xlu0 0
  %2033 = vperm.xlu0 %2032, %v1877
  %v2034 = vpop.permute.xlu0 %2033
  %v2036 = vsub.f32 %v1884, %v1880
  %v2037 = vsub.f32 %v1889, %v1880
  %v2038 = vsub.f32 %v1894, %v1880
  %v2039 = vsub.f32 %v1899, %v1880
  %v2040 = vsub.f32 %v1904, %v1880
  %v2041 = vsub.f32 %v1909, %v1880
  %v2042 = vsub.f32 %v1914, %v1880
  %v2043 = vsub.f32 %v1919, %v1880
  %v2044 = vsub.f32 %v1924, %v1880
  %v2045 = vsub.f32 %v1929, %v1880
  %v2046 = vsub.f32 %v1934, %v1880
  %v2047 = vsub.f32 %v1939, %v1880
  %v2048 = vsub.f32 %v1944, %v1880
  %v2049 = vsub.f32 %v1949, %v1880
  %v2050 = vsub.f32 %v1954, %v1880
  %v2051 = vsub.f32 %v1959, %v1880
  %v2052 = vsub.f32 %v1964, %v1880
  %v2053 = vsub.f32 %v1969, %v1880
  %v2054 = vsub.f32 %v1974, %v1880
  %v2055 = vsub.f32 %v1979, %v1880
  %v2056 = vsub.f32 %v1984, %v1880
  %v2057 = vsub.f32 %v1989, %v1880
  %v2058 = vsub.f32 %v1994, %v1880
  %v2059 = vsub.f32 %v1999, %v1880
  %v2060 = vsub.f32 %v2004, %v1880
  %v2061 = vsub.f32 %v2009, %v1880
  %v2062 = vsub.f32 %v2014, %v1880
  %v2063 = vsub.f32 %v2019, %v1880
  %v2064 = vsub.f32 %v2024, %v1880
  %v2065 = vsub.f32 %v2029, %v1880
  %v2066 = vsub.f32 %v2034, %v1880
  %v2067 = vand.u32 2147483647, %v2036
  %v2068 = vand.u32 2147483647, %v2037
  %v2069 = vand.u32 2147483647, %v2038
  %v2070 = vand.u32 2147483647, %v2039
  %v2071 = vand.u32 2147483647, %v2040
  %v2072 = vand.u32 2147483647, %v2041
  %v2073 = vand.u32 2147483647, %v2042
  %v2074 = vand.u32 2147483647, %v2043
  %v2075 = vand.u32 2147483647, %v2044
  %v2076 = vand.u32 2147483647, %v2045
  %v2077 = vand.u32 2147483647, %v2046
  %v2078 = vand.u32 2147483647, %v2047
  %v2079 = vand.u32 2147483647, %v2048
  %v2080 = vand.u32 2147483647, %v2049
  %v2081 = vand.u32 2147483647, %v2050
  %v2082 = vand.u32 2147483647, %v2051
  %v2083 = vand.u32 2147483647, %v2052
  %v2084 = vand.u32 2147483647, %v2053
  %v2085 = vand.u32 2147483647, %v2054
  %v2086 = vand.u32 2147483647, %v2055
  %v2087 = vand.u32 2147483647, %v2056
  %v2088 = vand.u32 2147483647, %v2057
  %v2089 = vand.u32 2147483647, %v2058
  %v2090 = vand.u32 2147483647, %v2059
  %v2091 = vand.u32 2147483647, %v2060
  %v2092 = vand.u32 2147483647, %v2061
  %v2093 = vand.u32 2147483647, %v2062
  %v2094 = vand.u32 2147483647, %v2063
  %v2095 = vand.u32 2147483647, %v2064
  %v2096 = vand.u32 2147483647, %v2065
  %v2097 = vand.u32 2147483647, %v2066
  %v2098 = vsub.f32 1.0, %v2067
  %v2099 = vsub.f32 1.0, %v2068
  %v2100 = vsub.f32 1.0, %v2069
  %v2101 = vsub.f32 1.0, %v2070
  %v2102 = vsub.f32 1.0, %v2071
  %v2103 = vsub.f32 1.0, %v2072
  %v2104 = vsub.f32 1.0, %v2073
  %v2105 = vsub.f32 1.0, %v2074
  %v2106 = vsub.f32 1.0, %v2075
  %v2107 = vsub.f32 1.0, %v2076
  %v2108 = vsub.f32 1.0, %v2077
  %v2109 = vsub.f32 1.0, %v2078
  %v2110 = vsub.f32 1.0, %v2079
  %v2111 = vsub.f32 1.0, %v2080
  %v2112 = vsub.f32 1.0, %v2081
  %v2113 = vsub.f32 1.0, %v2082
  %v2114 = vsub.f32 1.0, %v2083
  %v2115 = vsub.f32 1.0, %v2084
  %v2116 = vsub.f32 1.0, %v2085
  %v2117 = vsub.f32 1.0, %v2086
  %v2118 = vsub.f32 1.0, %v2087
  %v2119 = vsub.f32 1.0, %v2088
  %v2120 = vsub.f32 1.0, %v2089
  %v2121 = vsub.f32 1.0, %v2090
  %v2122 = vsub.f32 1.0, %v2091
  %v2123 = vsub.f32 1.0, %v2092
  %v2124 = vsub.f32 1.0, %v2093
  %v2125 = vsub.f32 1.0, %v2094
  %v2126 = vsub.f32 1.0, %v2095
  %v2127 = vsub.f32 1.0, %v2096
  %v2128 = vsub.f32 1.0, %v2097
  %v2129 = vmax.f32 %v2098, 0.0
  %v2130 = vmax.f32 %v2099, 0.0
  %v2131 = vmax.f32 %v2100, 0.0
  %v2132 = vmax.f32 %v2101, 0.0
  %v2133 = vmax.f32 %v2102, 0.0
  %v2134 = vmax.f32 %v2103, 0.0
  %v2135 = vmax.f32 %v2104, 0.0
  %v2136 = vmax.f32 %v2105, 0.0
  %v2137 = vmax.f32 %v2106, 0.0
  %v2138 = vmax.f32 %v2107, 0.0
  %v2139 = vmax.f32 %v2108, 0.0
  %v2140 = vmax.f32 %v2109, 0.0
  %v2141 = vmax.f32 %v2110, 0.0
  %v2142 = vmax.f32 %v2111, 0.0
  %v2143 = vmax.f32 %v2112, 0.0
  %v2144 = vmax.f32 %v2113, 0.0
  %v2145 = vmax.f32 %v2114, 0.0
  %v2146 = vmax.f32 %v2115, 0.0
  %v2147 = vmax.f32 %v2116, 0.0
  %v2148 = vmax.f32 %v2117, 0.0
  %v2149 = vmax.f32 %v2118, 0.0
  %v2150 = vmax.f32 %v2119, 0.0
  %v2151 = vmax.f32 %v2120, 0.0
  %v2152 = vmax.f32 %v2121, 0.0
  %v2153 = vmax.f32 %v2122, 0.0
  %v2154 = vmax.f32 %v2123, 0.0
  %v2155 = vmax.f32 %v2124, 0.0
  %v2156 = vmax.f32 %v2125, 0.0
  %v2157 = vmax.f32 %v2126, 0.0
  %v2158 = vmax.f32 %v2127, 0.0
  %v2159 = vmax.f32 %v2128, 0.0
  %2160 = vset.pattern.permute.xlu0 1
  %2161 = vperm.xlu0 %2160, %v1847
  %v2162 = vpop.permute.xlu0 %2161
  %2164 = vset.pattern.permute.xlu0 1
  %2165 = vperm.xlu0 %2164, %v1848
  %v2166 = vpop.permute.xlu0 %2165
  %2168 = vset.pattern.permute.xlu0 1
  %2169 = vperm.xlu0 %2168, %v1849
  %v2170 = vpop.permute.xlu0 %2169
  %2172 = vset.pattern.permute.xlu0 1
  %2173 = vperm.xlu0 %2172, %v1850
  %v2174 = vpop.permute.xlu0 %2173
  %2176 = vset.pattern.permute.xlu0 1
  %2177 = vperm.xlu0 %2176, %v1851
  %v2178 = vpop.permute.xlu0 %2177
  %2180 = vset.pattern.permute.xlu0 1
  %2181 = vperm.xlu0 %2180, %v1852
  %v2182 = vpop.permute.xlu0 %2181
  %2184 = vset.pattern.permute.xlu0 1
  %2185 = vperm.xlu0 %2184, %v1853
  %v2186 = vpop.permute.xlu0 %2185
  %2188 = vset.pattern.permute.xlu0 1
  %2189 = vperm.xlu0 %2188, %v1854
  %v2190 = vpop.permute.xlu0 %2189
  %2192 = vset.pattern.permute.xlu0 1
  %2193 = vperm.xlu0 %2192, %v1855
  %v2194 = vpop.permute.xlu0 %2193
  %2196 = vset.pattern.permute.xlu0 1
  %2197 = vperm.xlu0 %2196, %v1856
  %v2198 = vpop.permute.xlu0 %2197
  %2200 = vset.pattern.permute.xlu0 1
  %2201 = vperm.xlu0 %2200, %v1857
  %v2202 = vpop.permute.xlu0 %2201
  %2204 = vset.pattern.permute.xlu0 1
  %2205 = vperm.xlu0 %2204, %v1858
  %v2206 = vpop.permute.xlu0 %2205
  %2208 = vset.pattern.permute.xlu0 1
  %2209 = vperm.xlu0 %2208, %v1859
  %v2210 = vpop.permute.xlu0 %2209
  %2212 = vset.pattern.permute.xlu0 1
  %2213 = vperm.xlu0 %2212, %v1860
  %v2214 = vpop.permute.xlu0 %2213
  %2216 = vset.pattern.permute.xlu0 1
  %2217 = vperm.xlu0 %2216, %v1861
  %v2218 = vpop.permute.xlu0 %2217
  %2220 = vset.pattern.permute.xlu0 1
  %2221 = vperm.xlu0 %2220, %v1862
  %v2222 = vpop.permute.xlu0 %2221
  %2224 = vset.pattern.permute.xlu0 1
  %2225 = vperm.xlu0 %2224, %v1863
  %v2226 = vpop.permute.xlu0 %2225
  %2228 = vset.pattern.permute.xlu0 1
  %2229 = vperm.xlu0 %2228, %v1864
  %v2230 = vpop.permute.xlu0 %2229
  %2232 = vset.pattern.permute.xlu0 1
  %2233 = vperm.xlu0 %2232, %v1865
  %v2234 = vpop.permute.xlu0 %2233
  %2236 = vset.pattern.permute.xlu0 1
  %2237 = vperm.xlu0 %2236, %v1866
  %v2238 = vpop.permute.xlu0 %2237
  %2240 = vset.pattern.permute.xlu0 1
  %2241 = vperm.xlu0 %2240, %v1867
  %v2242 = vpop.permute.xlu0 %2241
  %2244 = vset.pattern.permute.xlu0 1
  %2245 = vperm.xlu0 %2244, %v1868
  %v2246 = vpop.permute.xlu0 %2245
  %2248 = vset.pattern.permute.xlu0 1
  %2249 = vperm.xlu0 %2248, %v1869
  %v2250 = vpop.permute.xlu0 %2249
  %2252 = vset.pattern.permute.xlu0 1
  %2253 = vperm.xlu0 %2252, %v1870
  %v2254 = vpop.permute.xlu0 %2253
  %2256 = vset.pattern.permute.xlu0 1
  %2257 = vperm.xlu0 %2256, %v1871
  %v2258 = vpop.permute.xlu0 %2257
  %2260 = vset.pattern.permute.xlu0 1
  %2261 = vperm.xlu0 %2260, %v1872
  %v2262 = vpop.permute.xlu0 %2261
  %2264 = vset.pattern.permute.xlu0 1
  %2265 = vperm.xlu0 %2264, %v1873
  %v2266 = vpop.permute.xlu0 %2265
  %2268 = vset.pattern.permute.xlu0 1
  %2269 = vperm.xlu0 %2268, %v1874
  %v2270 = vpop.permute.xlu0 %2269
  %2272 = vset.pattern.permute.xlu0 1
  %2273 = vperm.xlu0 %2272, %v1875
  %v2274 = vpop.permute.xlu0 %2273
  %2276 = vset.pattern.permute.xlu0 1
  %2277 = vperm.xlu0 %2276, %v1876
  %v2278 = vpop.permute.xlu0 %2277
  %2280 = vset.pattern.permute.xlu0 1
  %2281 = vperm.xlu0 %2280, %v1877
  %v2282 = vpop.permute.xlu0 %2281
  %v2284 = vsub.f32 %v2162, %v1880
  %v2285 = vsub.f32 %v2166, %v1880
  %v2286 = vsub.f32 %v2170, %v1880
  %v2287 = vsub.f32 %v2174, %v1880
  %v2288 = vsub.f32 %v2178, %v1880
  %v2289 = vsub.f32 %v2182, %v1880
  %v2290 = vsub.f32 %v2186, %v1880
  %v2291 = vsub.f32 %v2190, %v1880
  %v2292 = vsub.f32 %v2194, %v1880
  %v2293 = vsub.f32 %v2198, %v1880
  %v2294 = vsub.f32 %v2202, %v1880
  %v2295 = vsub.f32 %v2206, %v1880
  %v2296 = vsub.f32 %v2210, %v1880
  %v2297 = vsub.f32 %v2214, %v1880
  %v2298 = vsub.f32 %v2218, %v1880
  %v2299 = vsub.f32 %v2222, %v1880
  %v2300 = vsub.f32 %v2226, %v1880
  %v2301 = vsub.f32 %v2230, %v1880
  %v2302 = vsub.f32 %v2234, %v1880
  %v2303 = vsub.f32 %v2238, %v1880
  %v2304 = vsub.f32 %v2242, %v1880
  %v2305 = vsub.f32 %v2246, %v1880
  %v2306 = vsub.f32 %v2250, %v1880
  %v2307 = vsub.f32 %v2254, %v1880
  %v2308 = vsub.f32 %v2258, %v1880
  %v2309 = vsub.f32 %v2262, %v1880
  %v2310 = vsub.f32 %v2266, %v1880
  %v2311 = vsub.f32 %v2270, %v1880
  %v2312 = vsub.f32 %v2274, %v1880
  %v2313 = vsub.f32 %v2278, %v1880
  %v2314 = vsub.f32 %v2282, %v1880
  %v2315 = vand.u32 2147483647, %v2284
  %v2316 = vand.u32 2147483647, %v2285
  %v2317 = vand.u32 2147483647, %v2286
  %v2318 = vand.u32 2147483647, %v2287
  %v2319 = vand.u32 2147483647, %v2288
  %v2320 = vand.u32 2147483647, %v2289
  %v2321 = vand.u32 2147483647, %v2290
  %v2322 = vand.u32 2147483647, %v2291
  %v2323 = vand.u32 2147483647, %v2292
  %v2324 = vand.u32 2147483647, %v2293
  %v2325 = vand.u32 2147483647, %v2294
  %v2326 = vand.u32 2147483647, %v2295
  %v2327 = vand.u32 2147483647, %v2296
  %v2328 = vand.u32 2147483647, %v2297
  %v2329 = vand.u32 2147483647, %v2298
  %v2330 = vand.u32 2147483647, %v2299
  %v2331 = vand.u32 2147483647, %v2300
  %v2332 = vand.u32 2147483647, %v2301
  %v2333 = vand.u32 2147483647, %v2302
  %v2334 = vand.u32 2147483647, %v2303
  %v2335 = vand.u32 2147483647, %v2304
  %v2336 = vand.u32 2147483647, %v2305
  %v2337 = vand.u32 2147483647, %v2306
  %v2338 = vand.u32 2147483647, %v2307
  %v2339 = vand.u32 2147483647, %v2308
  %v2340 = vand.u32 2147483647, %v2309
  %v2341 = vand.u32 2147483647, %v2310
  %v2342 = vand.u32 2147483647, %v2311
  %v2343 = vand.u32 2147483647, %v2312
  %v2344 = vand.u32 2147483647, %v2313
  %v2345 = vand.u32 2147483647, %v2314
  %v2346 = vsub.f32 1.0, %v2315
  %v2347 = vsub.f32 1.0, %v2316
  %v2348 = vsub.f32 1.0, %v2317
  %v2349 = vsub.f32 1.0, %v2318
  %v2350 = vsub.f32 1.0, %v2319
  %v2351 = vsub.f32 1.0, %v2320
  %v2352 = vsub.f32 1.0, %v2321
  %v2353 = vsub.f32 1.0, %v2322
  %v2354 = vsub.f32 1.0, %v2323
  %v2355 = vsub.f32 1.0, %v2324
  %v2356 = vsub.f32 1.0, %v2325
  %v2357 = vsub.f32 1.0, %v2326
  %v2358 = vsub.f32 1.0, %v2327
  %v2359 = vsub.f32 1.0, %v2328
  %v2360 = vsub.f32 1.0, %v2329
  %v2361 = vsub.f32 1.0, %v2330
  %v2362 = vsub.f32 1.0, %v2331
  %v2363 = vsub.f32 1.0, %v2332
  %v2364 = vsub.f32 1.0, %v2333
  %v2365 = vsub.f32 1.0, %v2334
  %v2366 = vsub.f32 1.0, %v2335
  %v2367 = vsub.f32 1.0, %v2336
  %v2368 = vsub.f32 1.0, %v2337
  %v2369 = vsub.f32 1.0, %v2338
  %v2370 = vsub.f32 1.0, %v2339
  %v2371 = vsub.f32 1.0, %v2340
  %v2372 = vsub.f32 1.0, %v2341
  %v2373 = vsub.f32 1.0, %v2342
  %v2374 = vsub.f32 1.0, %v2343
  %v2375 = vsub.f32 1.0, %v2344
  %v2376 = vsub.f32 1.0, %v2345
  %v2377 = vmax.f32 %v2346, 0.0
  %v2378 = vmax.f32 %v2347, 0.0
  %v2379 = vmax.f32 %v2348, 0.0
  %v2380 = vmax.f32 %v2349, 0.0
  %v2381 = vmax.f32 %v2350, 0.0
  %v2382 = vmax.f32 %v2351, 0.0
  %v2383 = vmax.f32 %v2352, 0.0
  %v2384 = vmax.f32 %v2353, 0.0
  %v2385 = vmax.f32 %v2354, 0.0
  %v2386 = vmax.f32 %v2355, 0.0
  %v2387 = vmax.f32 %v2356, 0.0
  %v2388 = vmax.f32 %v2357, 0.0
  %v2389 = vmax.f32 %v2358, 0.0
  %v2390 = vmax.f32 %v2359, 0.0
  %v2391 = vmax.f32 %v2360, 0.0
  %v2392 = vmax.f32 %v2361, 0.0
  %v2393 = vmax.f32 %v2362, 0.0
  %v2394 = vmax.f32 %v2363, 0.0
  %v2395 = vmax.f32 %v2364, 0.0
  %v2396 = vmax.f32 %v2365, 0.0
  %v2397 = vmax.f32 %v2366, 0.0
  %v2398 = vmax.f32 %v2367, 0.0
  %v2399 = vmax.f32 %v2368, 0.0
  %v2400 = vmax.f32 %v2369, 0.0
  %v2401 = vmax.f32 %v2370, 0.0
  %v2402 = vmax.f32 %v2371, 0.0
  %v2403 = vmax.f32 %v2372, 0.0
  %v2404 = vmax.f32 %v2373, 0.0
  %v2405 = vmax.f32 %v2374, 0.0
  %v2406 = vmax.f32 %v2375, 0.0
  %v2407 = vmax.f32 %v2376, 0.0
  %v2408 = vpack.c.bf16 %v2378, %v2377
  %v2409 = vpack.c.bf16 %v2380, %v2379
  %v2410 = vpack.c.bf16 %v2382, %v2381
  %v2411 = vpack.c.bf16 %v2384, %v2383
  %v2412 = vpack.c.bf16 %v2386, %v2385
  %v2413 = vpack.c.bf16 %v2388, %v2387
  %v2414 = vpack.c.bf16 %v2390, %v2389
  %v2415 = vpack.c.bf16 %v2392, %v2391
  %v2416 = vpack.c.bf16 %v2394, %v2393
  %v2417 = vpack.c.bf16 %v2396, %v2395
  %v2418 = vpack.c.bf16 %v2398, %v2397
  %v2419 = vpack.c.bf16 %v2400, %v2399
  %v2420 = vpack.c.bf16 %v2402, %v2401
  %v2421 = vpack.c.bf16 %v2404, %v2403
  %v2422 = vpack.c.bf16 %v2406, %v2405
  %v2423 = vpack.c.bf16 %v2407, %v2407
  %v2424 = vpack.c.bf16 %v1603, %v1603
  %v2425 = vpack.c.bf16 %v1604, %v1604
  %v2427 = vsel %vm1528, %v2408, 0
  %v2430 = vsel %vm1528, %v2409, 0
  %v2433 = vsel %vm1528, %v2410, 0
  %v2436 = vsel %vm1528, %v2411, 0
  %v2439 = vsel %vm1528, %v2412, 0
  %v2442 = vsel %vm1528, %v2413, 0
  %v2445 = vsel %vm1528, %v2414, 0
  %v2448 = vsel %vm1528, %v2415, 0
  %v2451 = vsel %vm1528, %v2416, 0
  %v2454 = vsel %vm1528, %v2417, 0
  %v2457 = vsel %vm1528, %v2418, 0
  %v2460 = vsel %vm1528, %v2419, 0
  %v2463 = vsel %vm1528, %v2420, 0
  %v2466 = vsel %vm1528, %v2421, 0
  %v2469 = vsel %vm1528, %v2422, 0
  %v2472 = vsel %vm1528, %v2423, 0
  %vm2474 = vcmask 1043456
  %v2476 = vsel %vm2474, %v2424, 0
  %v2479 = vsel %vm2474, %v2425, 0
  %2481 = vmatprep.subr.bf16.mxu0 %v2479
  %2482 = vmatpush1.bf16.msra.mxu0 %v2476
  %2483 = vmatprep.subr.bf16.mxu0 0
  %2484 = vmatpush1.bf16.msra.mxu0 0
  %2485 = vmatprep.subr.bf16.mxu0 0
  %2486 = vmatpush1.bf16.msra.mxu0 0
  %2487 = vmatprep.subr.bf16.mxu0 0
  %2488 = vmatpush1.bf16.msra.mxu0 0
  %2489 = vmatprep.subr.bf16.mxu0 0
  %2490 = vmatpush1.bf16.msra.mxu0 0
  %2491 = vmatprep.subr.bf16.mxu0 0
  %2492 = vmatpush1.bf16.msra.mxu0 0
  %2493 = vmatprep.subr.bf16.mxu0 0
  %2494 = vmatpush1.bf16.msra.mxu0 0
  %2495 = vmatprep.subr.bf16.mxu0 0
  %2496 = vmatpush1.bf16.msra.mxu0 0
  %2497 = vmatprep.subr.bf16.mxu0 0
  %2498 = vmatpush1.bf16.msra.mxu0 0
  %2499 = vmatprep.subr.bf16.mxu0 0
  %2500 = vmatpush1.bf16.msra.mxu0 0
  %2501 = vmatprep.subr.bf16.mxu0 0
  %2502 = vmatpush1.bf16.msra.mxu0 0
  %2503 = vmatprep.subr.bf16.mxu0 0
  %2504 = vmatpush1.bf16.msra.mxu0 0
  %2505 = vmatprep.subr.bf16.mxu0 0
  %2506 = vmatpush1.bf16.msra.mxu0 0
  %2507 = vmatprep.subr.bf16.mxu0 0
  %2508 = vmatpush1.bf16.msra.mxu0 0
  %2509 = vmatprep.subr.bf16.mxu0 0
  %2510 = vmatpush1.bf16.msra.mxu0 0
  %2511 = vmatprep.subr.bf16.mxu0 0
  %2512 = vmatpush1.bf16.msra.mxu0 0
  %2513 = vmatprep.mubr.bf16.mxu0 0
  %2514 = vmatmul.mubr.bf16.gmra.mrb[0].mxu0 %v2427
  %v2515 = vpop.f32.mrb[0].mxu0
  %v2516 = vadd.f32 0.0, %v2515
  %v2517 = vpop.f32.mrb[0].mxu0
  %v2518 = vadd.f32 0.0, %v2517
  %v2519 = vpop.f32.mrb[0].mxu0
  %v2520 = vadd.f32 0.0, %v2519
  %v2521 = vpop.f32.mrb[0].mxu0
  %v2522 = vadd.f32 0.0, %v2521
  %2523 = vmatprep.mubr.bf16.mxu0 0
  %2524 = vmatmul.mubr.bf16.gmra.mrb[0].mxu0 %v2430
  %v2525 = vpop.f32.mrb[0].mxu0
  %v2526 = vadd.f32 0.0, %v2525
  %v2527 = vpop.f32.mrb[0].mxu0
  %v2528 = vadd.f32 0.0, %v2527
  %v2529 = vpop.f32.mrb[0].mxu0
  %v2530 = vadd.f32 0.0, %v2529
  %v2531 = vpop.f32.mrb[0].mxu0
  %v2532 = vadd.f32 0.0, %v2531
  %2533 = vmatprep.mubr.bf16.mxu0 0
  %2534 = vmatmul.mubr.bf16.gmra.mrb[0].mxu0 %v2433
  %v2535 = vpop.f32.mrb[0].mxu0
  %v2536 = vadd.f32 0.0, %v2535
  %v2537 = vpop.f32.mrb[0].mxu0
  %v2538 = vadd.f32 0.0, %v2537
  %v2539 = vpop.f32.mrb[0].mxu0
  %v2540 = vadd.f32 0.0, %v2539
  %v2541 = vpop.f32.mrb[0].mxu0
  %v2542 = vadd.f32 0.0, %v2541
  %2543 = vmatprep.mubr.bf16.mxu0 0
  %2544 = vmatmul.mubr.bf16.gmra.mrb[0].mxu0 %v2436
  %v2545 = vpop.f32.mrb[0].mxu0
  %v2546 = vadd.f32 0.0, %v2545
  %v2547 = vpop.f32.mrb[0].mxu0
  %v2548 = vadd.f32 0.0, %v2547
  %v2549 = vpop.f32.mrb[0].mxu0
  %v2550 = vadd.f32 0.0, %v2549
  %v2551 = vpop.f32.mrb[0].mxu0
  %v2552 = vadd.f32 0.0, %v2551
  %2553 = vmatprep.mubr.bf16.mxu0 0
  %2554 = vmatmul.mubr.bf16.gmra.mrb[0].mxu0 %v2439
  %v2555 = vpop.f32.mrb[0].mxu0
  %v2556 = vadd.f32 0.0, %v2555
  %v2557 = vpop.f32.mrb[0].mxu0
  %v2558 = vadd.f32 0.0, %v2557
  %v2559 = vpop.f32.mrb[0].mxu0
  %v2560 = vadd.f32 0.0, %v2559
  %v2561 = vpop.f32.mrb[0].mxu0
  %v2562 = vadd.f32 0.0, %v2561
  %2563 = vmatprep.mubr.bf16.mxu0 0
  %2564 = vmatmul.mubr.bf16.gmra.mrb[0].mxu0 %v2442
  %v2565 = vpop.f32.mrb[0].mxu0
  %v2566 = vadd.f32 0.0, %v2565
  %v2567 = vpop.f32.mrb[0].mxu0
  %v2568 = vadd.f32 0.0, %v2567
  %v2569 = vpop.f32.mrb[0].mxu0
  %v2570 = vadd.f32 0.0, %v2569
  %v2571 = vpop.f32.mrb[0].mxu0
  %v2572 = vadd.f32 0.0, %v2571
  %2573 = vmatprep.mubr.bf16.mxu0 0
  %2574 = vmatmul.mubr.bf16.gmra.mrb[0].mxu0 %v2445
  %v2575 = vpop.f32.mrb[0].mxu0
  %v2576 = vadd.f32 0.0, %v2575
  %v2577 = vpop.f32.mrb[0].mxu0
  %v2578 = vadd.f32 0.0, %v2577
  %v2579 = vpop.f32.mrb[0].mxu0
  %v2580 = vadd.f32 0.0, %v2579
  %v2581 = vpop.f32.mrb[0].mxu0
  %v2582 = vadd.f32 0.0, %v2581
  %2583 = vmatprep.mubr.bf16.mxu0 0
  %2584 = vmatmul.mubr.bf16.gmra.mrb[0].mxu0 %v2448
  %v2585 = vpop.f32.mrb[0].mxu0
  %v2586 = vadd.f32 0.0, %v2585
  %v2587 = vpop.f32.mrb[0].mxu0
  %v2588 = vadd.f32 0.0, %v2587
  %v2589 = vpop.f32.mrb[0].mxu0
  %v2590 = vadd.f32 0.0, %v2589
  %v2591 = vpop.f32.mrb[0].mxu0
  %v2592 = vadd.f32 0.0, %v2591
  %2593 = vmatprep.mubr.bf16.mxu0 0
  %2594 = vmatmul.mubr.bf16.gmra.mrb[0].mxu0 %v2451
  %v2595 = vpop.f32.mrb[0].mxu0
  %v2596 = vadd.f32 0.0, %v2595
  %v2597 = vpop.f32.mrb[0].mxu0
  %v2598 = vadd.f32 0.0, %v2597
  %v2599 = vpop.f32.mrb[0].mxu0
  %v2600 = vadd.f32 0.0, %v2599
  %v2601 = vpop.f32.mrb[0].mxu0
  %v2602 = vadd.f32 0.0, %v2601
  %2603 = vmatprep.mubr.bf16.mxu0 0
  %2604 = vmatmul.mubr.bf16.gmra.mrb[0].mxu0 %v2454
  %v2605 = vpop.f32.mrb[0].mxu0
  %v2606 = vadd.f32 0.0, %v2605
  %v2607 = vpop.f32.mrb[0].mxu0
  %v2608 = vadd.f32 0.0, %v2607
  %v2609 = vpop.f32.mrb[0].mxu0
  %v2610 = vadd.f32 0.0, %v2609
  %v2611 = vpop.f32.mrb[0].mxu0
  %v2612 = vadd.f32 0.0, %v2611
  %2613 = vmatprep.mubr.bf16.mxu0 0
  %2614 = vmatmul.mubr.bf16.gmra.mrb[0].mxu0 %v2457
  %v2615 = vpop.f32.mrb[0].mxu0
  %v2616 = vadd.f32 0.0, %v2615
  %v2617 = vpop.f32.mrb[0].mxu0
  %v2618 = vadd.f32 0.0, %v2617
  %v2619 = vpop.f32.mrb[0].mxu0
  %v2620 = vadd.f32 0.0, %v2619
  %v2621 = vpop.f32.mrb[0].mxu0
  %v2622 = vadd.f32 0.0, %v2621
  %2623 = vmatprep.mubr.bf16.mxu0 0
  %2624 = vmatmul.mubr.bf16.gmra.mrb[0].mxu0 %v2460
  %v2625 = vpop.f32.mrb[0].mxu0
  %v2626 = vadd.f32 0.0, %v2625
  %v2627 = vpop.f32.mrb[0].mxu0
  %v2628 = vadd.f32 0.0, %v2627
  %v2629 = vpop.f32.mrb[0].mxu0
  %v2630 = vadd.f32 0.0, %v2629
  %v2631 = vpop.f32.mrb[0].mxu0
  %v2632 = vadd.f32 0.0, %v2631
  %2633 = vmatprep.mubr.bf16.mxu0 0
  %2634 = vmatmul.mubr.bf16.gmra.mrb[0].mxu0 %v2463
  %v2635 = vpop.f32.mrb[0].mxu0
  %v2636 = vadd.f32 0.0, %v2635
  %v2637 = vpop.f32.mrb[0].mxu0
  %v2638 = vadd.f32 0.0, %v2637
  %v2639 = vpop.f32.mrb[0].mxu0
  %v2640 = vadd.f32 0.0, %v2639
  %v2641 = vpop.f32.mrb[0].mxu0
  %v2642 = vadd.f32 0.0, %v2641
  %2643 = vmatprep.mubr.bf16.mxu0 0
  %2644 = vmatmul.mubr.bf16.gmra.mrb[0].mxu0 %v2466
  %v2645 = vpop.f32.mrb[0].mxu0
  %v2646 = vadd.f32 0.0, %v2645
  %v2647 = vpop.f32.mrb[0].mxu0
  %v2648 = vadd.f32 0.0, %v2647
  %v2649 = vpop.f32.mrb[0].mxu0
  %v2650 = vadd.f32 0.0, %v2649
  %v2651 = vpop.f32.mrb[0].mxu0
  %v2652 = vadd.f32 0.0, %v2651
  %2653 = vmatprep.mubr.bf16.mxu0 0
  %2654 = vmatmul.mubr.bf16.gmra.mrb[0].mxu0 %v2469
  %v2655 = vpop.f32.mrb[0].mxu0
  %v2656 = vadd.f32 0.0, %v2655
  %v2657 = vpop.f32.mrb[0].mxu0
  %v2658 = vadd.f32 0.0, %v2657
  %v2659 = vpop.f32.mrb[0].mxu0
  %v2660 = vadd.f32 0.0, %v2659
  %v2661 = vpop.f32.mrb[0].mxu0
  %v2662 = vadd.f32 0.0, %v2661
  %2663 = vmatprep.mubr.bf16.mxu0 0
  %2664 = vmatmul.mubr.bf16.gmra.mrb[0].mxu0 %v2472
  %v2665 = vpop.f32.mrb[0].mxu0
  %v2666 = vadd.f32 0.0, %v2665
  %v2667 = vpop.f32.mrb[0].mxu0
  %v2668 = vadd.f32 0.0, %v2667
  %v2669 = vpop.f32.mrb[0].mxu0
  %v2670 = vpop.f32.mrb[0].mxu0
  %2671 = vdwg.mxu0
  %v2672 = vld [vmem:[%s5] sm:$0xff]
  %v2673 = vld [vmem:[%s5 + $0x8] sm:$0xff]
  %v2675 = vsel %vm1528, %v2129, 0
  %v2678 = vsel %vm1528, %v2130, 0
  %v2681 = vsel %vm1528, %v2131, 0
  %v2684 = vsel %vm1528, %v2132, 0
  %v2687 = vsel %vm1528, %v2133, 0
  %v2690 = vsel %vm1528, %v2134, 0
  %v2693 = vsel %vm1528, %v2135, 0
  %v2696 = vsel %vm1528, %v2136, 0
  %v2699 = vsel %vm1528, %v2137, 0
  %v2702 = vsel %vm1528, %v2138, 0
  %v2705 = vsel %vm1528, %v2139, 0
  %v2708 = vsel %vm1528, %v2140, 0
  %v2711 = vsel %vm1528, %v2141, 0
  %v2714 = vsel %vm1528, %v2142, 0
  %v2717 = vsel %vm1528, %v2143, 0
  %v2720 = vsel %vm1528, %v2144, 0
  %v2723 = vsel %vm1528, %v2145, 0
  %v2726 = vsel %vm1528, %v2146, 0
  %v2729 = vsel %vm1528, %v2147, 0
  %v2732 = vsel %vm1528, %v2148, 0
  %v2735 = vsel %vm1528, %v2149, 0
  %v2738 = vsel %vm1528, %v2150, 0
  %v2741 = vsel %vm1528, %v2151, 0
  %v2744 = vsel %vm1528, %v2152, 0
  %v2747 = vsel %vm1528, %v2153, 0
  %v2750 = vsel %vm1528, %v2154, 0
  %v2753 = vsel %vm1528, %v2155, 0
  %v2756 = vsel %vm1528, %v2156, 0
  %v2759 = vsel %vm1528, %v2157, 0
  %v2762 = vsel %vm1528, %v2158, 0
  %v2765 = vsel %vm1528, %v2159, 0
  %2767 = vmatprep.subr.mxu0 %v2673
  %2768 = vmatpush1.msra.mxu0 %v2672
  %2769 = vmatprep.subr.mxu0 0.0
  %2770 = vmatpush1.msra.mxu0 0.0
  %2771 = vmatprep.subr.mxu0 0.0
  %2772 = vmatpush1.msra.mxu0 0.0
  %2773 = vmatprep.subr.mxu0 0.0
  %2774 = vmatpush1.msra.mxu0 0.0
  %2775 = vmatprep.subr.mxu0 0.0
  %2776 = vmatpush1.msra.mxu0 0.0
  %2777 = vmatprep.subr.mxu0 0.0
  %2778 = vmatpush1.msra.mxu0 0.0
  %2779 = vmatprep.subr.mxu0 0.0
  %2780 = vmatpush1.msra.mxu0 0.0
  %2781 = vmatprep.subr.mxu0 0.0
  %2782 = vmatpush1.msra.mxu0 0.0
  %2783 = vmatprep.subr.mxu0 0.0
  %2784 = vmatpush1.msra.mxu0 0.0
  %2785 = vmatprep.subr.mxu0 0.0
  %2786 = vmatpush1.msra.mxu0 0.0
  %2787 = vmatprep.subr.mxu0 0.0
  %2788 = vmatpush1.msra.mxu0 0.0
  %2789 = vmatprep.subr.mxu0 0.0
  %2790 = vmatpush1.msra.mxu0 0.0
  %2791 = vmatprep.subr.mxu0 0.0
  %2792 = vmatpush1.msra.mxu0 0.0
  %2793 = vmatprep.subr.mxu0 0.0
  %2794 = vmatpush1.msra.mxu0 0.0
  %2795 = vmatprep.subr.mxu0 0.0
  %2796 = vmatpush1.msra.mxu0 0.0
  %2797 = vmatprep.subr.mxu0 0.0
  %2798 = vmatpush1.msra.mxu0 0.0
  %2799 = vmatprep.subr.mxu0 0.0
  %2800 = vmatpush1.msra.mxu0 0.0
  %2801 = vmatprep.subr.mxu0 0.0
  %2802 = vmatpush1.msra.mxu0 0.0
  %2803 = vmatprep.subr.mxu0 0.0
  %2804 = vmatpush1.msra.mxu0 0.0
  %2805 = vmatprep.subr.mxu0 0.0
  %2806 = vmatpush1.msra.mxu0 0.0
  %2807 = vmatprep.subr.mxu0 0.0
  %2808 = vmatpush1.msra.mxu0 0.0
  %2809 = vmatprep.subr.mxu0 0.0
  %2810 = vmatpush1.msra.mxu0 0.0
  %2811 = vmatprep.subr.mxu0 0.0
  %2812 = vmatpush1.msra.mxu0 0.0
  %2813 = vmatprep.subr.mxu0 0.0
  %2814 = vmatpush1.msra.mxu0 0.0
  %2815 = vmatprep.subr.mxu0 0.0
  %2816 = vmatpush1.msra.mxu0 0.0
  %2817 = vmatprep.subr.mxu0 0.0
  %2818 = vmatpush1.msra.mxu0 0.0
  %2819 = vmatprep.subr.mxu0 0.0
  %2820 = vmatpush1.msra.mxu0 0.0
  %2821 = vmatprep.subr.mxu0 0.0
  %2822 = vmatpush1.msra.mxu0 0.0
  %2823 = vmatprep.subr.mxu0 0.0
  %2824 = vmatpush1.msra.mxu0 0.0
  %2825 = vmatprep.subr.mxu0 0.0
  %2826 = vmatpush1.msra.mxu0 0.0
  %2827 = vmatprep.subr.mxu0 0.0
  %2828 = vmatpush1.msra.mxu0 0.0
  %2829 = vmatprep.subr.mxu0 0.0
  %2830 = vmatpush1.msra.mxu0 0.0
  %2831 = vmatprep.mubr.f32.mxu0 0.0
  %2832 = vmatmul.mubr.f32.gmra.mrb[0].mxu0 %v2675
  %v2833 = vpop.f32.mrb[0].mxu0
  %v2834 = vadd.f32 0.0, %v2833
  %v2835 = vpop.f32.mrb[0].mxu0
  %v2836 = vadd.f32 0.0, %v2835
  %2837 = vmatprep.mubr.f32.mxu0 0.0
  %2838 = vmatmul.mubr.f32.gmra.mrb[0].mxu0 %v2678
  %v2839 = vpop.f32.mrb[0].mxu0
  %v2840 = vadd.f32 0.0, %v2839
  %v2841 = vpop.f32.mrb[0].mxu0
  %v2842 = vadd.f32 0.0, %v2841
  %2843 = vmatprep.mubr.f32.mxu0 0.0
  %2844 = vmatmul.mubr.f32.gmra.mrb[0].mxu0 %v2681
  %v2845 = vpop.f32.mrb[0].mxu0
  %v2846 = vadd.f32 0.0, %v2845
  %v2847 = vpop.f32.mrb[0].mxu0
  %v2848 = vadd.f32 0.0, %v2847
  %2849 = vmatprep.mubr.f32.mxu0 0.0
  %2850 = vmatmul.mubr.f32.gmra.mrb[0].mxu0 %v2684
  %v2851 = vpop.f32.mrb[0].mxu0
  %v2852 = vadd.f32 0.0, %v2851
  %v2853 = vpop.f32.mrb[0].mxu0
  %v2854 = vadd.f32 0.0, %v2853
  %2855 = vmatprep.mubr.f32.mxu0 0.0
  %2856 = vmatmul.mubr.f32.gmra.mrb[0].mxu0 %v2687
  %v2857 = vpop.f32.mrb[0].mxu0
  %v2858 = vadd.f32 0.0, %v2857
  %v2859 = vpop.f32.mrb[0].mxu0
  %v2860 = vadd.f32 0.0, %v2859
  %2861 = vmatprep.mubr.f32.mxu0 0.0
  %2862 = vmatmul.mubr.f32.gmra.mrb[0].mxu0 %v2690
  %v2863 = vpop.f32.mrb[0].mxu0
  %v2864 = vadd.f32 0.0, %v2863
  %v2865 = vpop.f32.mrb[0].mxu0
  %v2866 = vadd.f32 0.0, %v2865
  %2867 = vmatprep.mubr.f32.mxu0 0.0
  %2868 = vmatmul.mubr.f32.gmra.mrb[0].mxu0 %v2693
  %v2869 = vpop.f32.mrb[0].mxu0
  %v2870 = vadd.f32 0.0, %v2869
  %v2871 = vpop.f32.mrb[0].mxu0
  %v2872 = vadd.f32 0.0, %v2871
  %2873 = vmatprep.mubr.f32.mxu0 0.0
  %2874 = vmatmul.mubr.f32.gmra.mrb[0].mxu0 %v2696
  %v2875 = vpop.f32.mrb[0].mxu0
  %v2876 = vadd.f32 0.0, %v2875
  %v2877 = vpop.f32.mrb[0].mxu0
  %v2878 = vadd.f32 0.0, %v2877
  %2879 = vmatprep.mubr.f32.mxu0 0.0
  %2880 = vmatmul.mubr.f32.gmra.mrb[0].mxu0 %v2699
  %v2881 = vpop.f32.mrb[0].mxu0
  %v2882 = vadd.f32 0.0, %v2881
  %v2883 = vpop.f32.mrb[0].mxu0
  %v2884 = vadd.f32 0.0, %v2883
  %2885 = vmatprep.mubr.f32.mxu0 0.0
  %2886 = vmatmul.mubr.f32.gmra.mrb[0].mxu0 %v2702
  %v2887 = vpop.f32.mrb[0].mxu0
  %v2888 = vadd.f32 0.0, %v2887
  %v2889 = vpop.f32.mrb[0].mxu0
  %v2890 = vadd.f32 0.0, %v2889
  %2891 = vmatprep.mubr.f32.mxu0 0.0
  %2892 = vmatmul.mubr.f32.gmra.mrb[0].mxu0 %v2705
  %v2893 = vpop.f32.mrb[0].mxu0
  %v2894 = vadd.f32 0.0, %v2893
  %v2895 = vpop.f32.mrb[0].mxu0
  %v2896 = vadd.f32 0.0, %v2895
  %2897 = vmatprep.mubr.f32.mxu0 0.0
  %2898 = vmatmul.mubr.f32.gmra.mrb[0].mxu0 %v2708
  %v2899 = vpop.f32.mrb[0].mxu0
  %v2900 = vadd.f32 0.0, %v2899
  %v2901 = vpop.f32.mrb[0].mxu0
  %v2902 = vadd.f32 0.0, %v2901
  %2903 = vmatprep.mubr.f32.mxu0 0.0
  %2904 = vmatmul.mubr.f32.gmra.mrb[0].mxu0 %v2711
  %v2905 = vpop.f32.mrb[0].mxu0
  %v2906 = vadd.f32 0.0, %v2905
  %v2907 = vpop.f32.mrb[0].mxu0
  %v2908 = vadd.f32 0.0, %v2907
  %2909 = vmatprep.mubr.f32.mxu0 0.0
  %2910 = vmatmul.mubr.f32.gmra.mrb[0].mxu0 %v2714
  %v2911 = vpop.f32.mrb[0].mxu0
  %v2912 = vadd.f32 0.0, %v2911
  %v2913 = vpop.f32.mrb[0].mxu0
  %v2914 = vadd.f32 0.0, %v2913
  %2915 = vmatprep.mubr.f32.mxu0 0.0
  %2916 = vmatmul.mubr.f32.gmra.mrb[0].mxu0 %v2717
  %v2917 = vpop.f32.mrb[0].mxu0
  %v2918 = vadd.f32 0.0, %v2917
  %v2919 = vpop.f32.mrb[0].mxu0
  %v2920 = vadd.f32 0.0, %v2919
  %2921 = vmatprep.mubr.f32.mxu0 0.0
  %2922 = vmatmul.mubr.f32.gmra.mrb[0].mxu0 %v2720
  %v2923 = vpop.f32.mrb[0].mxu0
  %v2924 = vadd.f32 0.0, %v2923
  %v2925 = vpop.f32.mrb[0].mxu0
  %v2926 = vadd.f32 0.0, %v2925
  %2927 = vmatprep.mubr.f32.mxu0 0.0
  %2928 = vmatmul.mubr.f32.gmra.mrb[0].mxu0 %v2723
  %v2929 = vpop.f32.mrb[0].mxu0
  %v2930 = vadd.f32 0.0, %v2929
  %v2931 = vpop.f32.mrb[0].mxu0
  %v2932 = vadd.f32 0.0, %v2931
  %2933 = vmatprep.mubr.f32.mxu0 0.0
  %2934 = vmatmul.mubr.f32.gmra.mrb[0].mxu0 %v2726
  %v2935 = vpop.f32.mrb[0].mxu0
  %v2936 = vadd.f32 0.0, %v2935
  %v2937 = vpop.f32.mrb[0].mxu0
  %v2938 = vadd.f32 0.0, %v2937
  %2939 = vmatprep.mubr.f32.mxu0 0.0
  %2940 = vmatmul.mubr.f32.gmra.mrb[0].mxu0 %v2729
  %v2941 = vpop.f32.mrb[0].mxu0
  %v2942 = vadd.f32 0.0, %v2941
  %v2943 = vpop.f32.mrb[0].mxu0
  %v2944 = vadd.f32 0.0, %v2943
  %2945 = vmatprep.mubr.f32.mxu0 0.0
  %2946 = vmatmul.mubr.f32.gmra.mrb[0].mxu0 %v2732
  %v2947 = vpop.f32.mrb[0].mxu0
  %v2948 = vadd.f32 0.0, %v2947
  %v2949 = vpop.f32.mrb[0].mxu0
  %v2950 = vadd.f32 0.0, %v2949
  %2951 = vmatprep.mubr.f32.mxu0 0.0
  %2952 = vmatmul.mubr.f32.gmra.mrb[0].mxu0 %v2735
  %v2953 = vpop.f32.mrb[0].mxu0
  %v2954 = vadd.f32 0.0, %v2953
  %v2955 = vpop.f32.mrb[0].mxu0
  %v2956 = vadd.f32 0.0, %v2955
  %2957 = vmatprep.mubr.f32.mxu0 0.0
  %2958 = vmatmul.mubr.f32.gmra.mrb[0].mxu0 %v2738
  %v2959 = vpop.f32.mrb[0].mxu0
  %v2960 = vadd.f32 0.0, %v2959
  %v2961 = vpop.f32.mrb[0].mxu0
  %v2962 = vadd.f32 0.0, %v2961
  %2963 = vmatprep.mubr.f32.mxu0 0.0
  %2964 = vmatmul.mubr.f32.gmra.mrb[0].mxu0 %v2741
  %v2965 = vpop.f32.mrb[0].mxu0
  %v2966 = vadd.f32 0.0, %v2965
  %v2967 = vpop.f32.mrb[0].mxu0
  %v2968 = vadd.f32 0.0, %v2967
  %2969 = vmatprep.mubr.f32.mxu0 0.0
  %2970 = vmatmul.mubr.f32.gmra.mrb[0].mxu0 %v2744
  %v2971 = vpop.f32.mrb[0].mxu0
  %v2972 = vadd.f32 0.0, %v2971
  %v2973 = vpop.f32.mrb[0].mxu0
  %v2974 = vadd.f32 0.0, %v2973
  %2975 = vmatprep.mubr.f32.mxu0 0.0
  %2976 = vmatmul.mubr.f32.gmra.mrb[0].mxu0 %v2747
  %v2977 = vpop.f32.mrb[0].mxu0
  %v2978 = vadd.f32 0.0, %v2977
  %v2979 = vpop.f32.mrb[0].mxu0
  %v2980 = vadd.f32 0.0, %v2979
  %2981 = vmatprep.mubr.f32.mxu0 0.0
  %2982 = vmatmul.mubr.f32.gmra.mrb[0].mxu0 %v2750
  %v2983 = vpop.f32.mrb[0].mxu0
  %v2984 = vadd.f32 0.0, %v2983
  %v2985 = vpop.f32.mrb[0].mxu0
  %v2986 = vadd.f32 0.0, %v2985
  %2987 = vmatprep.mubr.f32.mxu0 0.0
  %2988 = vmatmul.mubr.f32.gmra.mrb[0].mxu0 %v2753
  %v2989 = vpop.f32.mrb[0].mxu0
  %v2990 = vadd.f32 0.0, %v2989
  %v2991 = vpop.f32.mrb[0].mxu0
  %v2992 = vadd.f32 0.0, %v2991
  %2993 = vmatprep.mubr.f32.mxu0 0.0
  %2994 = vmatmul.mubr.f32.gmra.mrb[0].mxu0 %v2756
  %v2995 = vpop.f32.mrb[0].mxu0
  %v2996 = vadd.f32 0.0, %v2995
  %v2997 = vpop.f32.mrb[0].mxu0
  %v2998 = vadd.f32 0.0, %v2997
  %2999 = vmatprep.mubr.f32.mxu0 0.0
  %3000 = vmatmul.mubr.f32.gmra.mrb[0].mxu0 %v2759
  %v3001 = vpop.f32.mrb[0].mxu0
  %v3002 = vadd.f32 0.0, %v3001
  %v3003 = vpop.f32.mrb[0].mxu0
  %v3004 = vadd.f32 0.0, %v3003
  %3005 = vmatprep.mubr.f32.mxu0 0.0
  %3006 = vmatmul.mubr.f32.gmra.mrb[0].mxu0 %v2762
  %v3007 = vpop.f32.mrb[0].mxu0
  %v3008 = vadd.f32 0.0, %v3007
  %v3009 = vpop.f32.mrb[0].mxu0
  %v3010 = vadd.f32 0.0, %v3009
  %3011 = vmatprep.mubr.f32.mxu0 0.0
  %3012 = vmatmul.mubr.f32.gmra.mrb[0].mxu0 %v2765
  %v3013 = vpop.f32.mrb[0].mxu0
  %v3014 = vadd.f32 0.0, %v3013
  %v3015 = vpop.f32.mrb[0].mxu0
  %v3016 = vadd.f32 0.0, %v3015
  %3017 = vdwg.mxu0
  %v3018 = vmul.f32 %v2516, %v2834
  %v3019 = vmul.f32 %v2518, %v2836
  %v3020 = vmul.f32 %v2520, %v2840
  %v3021 = vmul.f32 %v2522, %v2842
  %v3022 = vmul.f32 %v2526, %v2846
  %v3023 = vmul.f32 %v2528, %v2848
  %v3024 = vmul.f32 %v2530, %v2852
  %v3025 = vmul.f32 %v2532, %v2854
  %v3026 = vmul.f32 %v2536, %v2858
  %v3027 = vmul.f32 %v2538, %v2860
  %v3028 = vmul.f32 %v2540, %v2864
  %v3029 = vmul.f32 %v2542, %v2866
  %v3030 = vmul.f32 %v2546, %v2870
  %v3031 = vmul.f32 %v2548, %v2872
  %v3032 = vmul.f32 %v2550, %v2876
  %v3033 = vmul.f32 %v2552, %v2878
  %v3034 = vmul.f32 %v2556, %v2882
  %v3035 = vmul.f32 %v2558, %v2884
  %v3036 = vmul.f32 %v2560, %v2888
  %v3037 = vmul.f32 %v2562, %v2890
  %v3038 = vmul.f32 %v2566, %v2894
  %v3039 = vmul.f32 %v2568, %v2896
  %v3040 = vmul.f32 %v2570, %v2900
  %v3041 = vmul.f32 %v2572, %v2902
  %v3042 = vmul.f32 %v2576, %v2906
  %v3043 = vmul.f32 %v2578, %v2908
  %v3044 = vmul.f32 %v2580, %v2912
  %v3045 = vmul.f32 %v2582, %v2914
  %v3046 = vmul.f32 %v2586, %v2918
  %v3047 = vmul.f32 %v2588, %v2920
  %v3048 = vmul.f32 %v2590, %v2924
  %v3049 = vmul.f32 %v2592, %v2926
  %v3050 = vmul.f32 %v2596, %v2930
  %v3051 = vmul.f32 %v2598, %v2932
  %v3052 = vmul.f32 %v2600, %v2936
  %v3053 = vmul.f32 %v2602, %v2938
  %v3054 = vmul.f32 %v2606, %v2942
  %v3055 = vmul.f32 %v2608, %v2944
  %v3056 = vmul.f32 %v2610, %v2948
  %v3057 = vmul.f32 %v2612, %v2950
  %v3058 = vmul.f32 %v2616, %v2954
  %v3059 = vmul.f32 %v2618, %v2956
  %v3060 = vmul.f32 %v2620, %v2960
  %v3061 = vmul.f32 %v2622, %v2962
  %v3062 = vmul.f32 %v2626, %v2966
  %v3063 = vmul.f32 %v2628, %v2968
  %v3064 = vmul.f32 %v2630, %v2972
  %v3065 = vmul.f32 %v2632, %v2974
  %v3066 = vmul.f32 %v2636, %v2978
  %v3067 = vmul.f32 %v2638, %v2980
  %v3068 = vmul.f32 %v2640, %v2984
  %v3069 = vmul.f32 %v2642, %v2986
  %v3070 = vmul.f32 %v2646, %v2990
  %v3071 = vmul.f32 %v2648, %v2992
  %v3072 = vmul.f32 %v2650, %v2996
  %v3073 = vmul.f32 %v2652, %v2998
  %v3074 = vmul.f32 %v2656, %v3002
  %v3075 = vmul.f32 %v2658, %v3004
  %v3076 = vmul.f32 %v2660, %v3008
  %v3077 = vmul.f32 %v2662, %v3010
  %v3078 = vmul.f32 %v2666, %v3014
  %v3079 = vmul.f32 %v2668, %v3016
  %v3080 = vpack.c.bf16 %v3020, %v3018
  %v3081 = vpack.c.bf16 %v3021, %v3019
  %v3082 = vpack.c.bf16 %v3024, %v3022
  %v3083 = vpack.c.bf16 %v3025, %v3023
  %v3084 = vpack.c.bf16 %v3028, %v3026
  %v3085 = vpack.c.bf16 %v3029, %v3027
  %v3086 = vpack.c.bf16 %v3032, %v3030
  %v3087 = vpack.c.bf16 %v3033, %v3031
  %v3088 = vpack.c.bf16 %v3036, %v3034
  %v3089 = vpack.c.bf16 %v3037, %v3035
  %v3090 = vpack.c.bf16 %v3040, %v3038
  %v3091 = vpack.c.bf16 %v3041, %v3039
  %v3092 = vpack.c.bf16 %v3044, %v3042
  %v3093 = vpack.c.bf16 %v3045, %v3043
  %v3094 = vpack.c.bf16 %v3048, %v3046
  %v3095 = vpack.c.bf16 %v3049, %v3047
  %v3096 = vpack.c.bf16 %v3052, %v3050
  %v3097 = vpack.c.bf16 %v3053, %v3051
  %v3098 = vpack.c.bf16 %v3056, %v3054
  %v3099 = vpack.c.bf16 %v3057, %v3055
  %v3100 = vpack.c.bf16 %v3060, %v3058
  %v3101 = vpack.c.bf16 %v3061, %v3059
  %v3102 = vpack.c.bf16 %v3064, %v3062
  %v3103 = vpack.c.bf16 %v3065, %v3063
  %v3104 = vpack.c.bf16 %v3068, %v3066
  %v3105 = vpack.c.bf16 %v3069, %v3067
  %v3106 = vpack.c.bf16 %v3072, %v3070
  %v3107 = vpack.c.bf16 %v3073, %v3071
  %v3108 = vpack.c.bf16 %v3076, %v3074
  %v3109 = vpack.c.bf16 %v3077, %v3075
  %v3110 = vpack.c.bf16 %v3078, %v3078
  %v3111 = vpack.c.bf16 %v3079, %v3079
  %v3112 = vld [vmem:[%s6] sm:$0xf]
  %v3113 = vld [vmem:[%s6 + $0x4] sm:$0xf]
  %v3114 = vld [vmem:[%s6 + $0x8] sm:$0xf]
  %v3115 = vld [vmem:[%s6 + $0xc] sm:$0xf]
  %v3116 = vld [vmem:[%s6 + $0x10] sm:$0xf]
  %v3117 = vld [vmem:[%s6 + $0x14] sm:$0xf]
  %v3118 = vld [vmem:[%s6 + $0x18] sm:$0xf]
  %v3119 = vld [vmem:[%s6 + $0x1c] sm:$0xf]
  %v3120 = vld [vmem:[%s6 + $0x20] sm:$0xf]
  %v3121 = vld [vmem:[%s6 + $0x24] sm:$0xf]
  %v3122 = vld [vmem:[%s6 + $0x28] sm:$0xf]
  %v3123 = vld [vmem:[%s6 + $0x2c] sm:$0xf]
  %v3124 = vld [vmem:[%s6 + $0x30] sm:$0xf]
  %v3125 = vld [vmem:[%s6 + $0x34] sm:$0xf]
  %v3126 = vld [vmem:[%s6 + $0x38] sm:$0xf]
  %v3127 = vld [vmem:[%s6 + $0x3c] sm:$0xf]
  %v3128 = vld [vmem:[%s6 + $0x40] sm:$0xf]
  %v3129 = vld [vmem:[%s6 + $0x44] sm:$0xf]
  %v3130 = vld [vmem:[%s6 + $0x48] sm:$0xf]
  %v3131 = vld [vmem:[%s6 + $0x4c] sm:$0xf]
  %v3132 = vld [vmem:[%s6 + $0x50] sm:$0xf]
  %v3133 = vld [vmem:[%s6 + $0x54] sm:$0xf]
  %v3134 = vld [vmem:[%s6 + $0x58] sm:$0xf]
  %v3135 = vld [vmem:[%s6 + $0x5c] sm:$0xf]
  %v3136 = vld [vmem:[%s6 + $0x60] sm:$0xf]
  %v3137 = vld [vmem:[%s6 + $0x64] sm:$0xf]
  %v3138 = vld [vmem:[%s6 + $0x68] sm:$0xf]
  %v3139 = vld [vmem:[%s6 + $0x6c] sm:$0xf]
  %v3140 = vld [vmem:[%s6 + $0x70] sm:$0xf]
  %v3141 = vld [vmem:[%s6 + $0x74] sm:$0xf]
  %v3142 = vld [vmem:[%s6 + $0x78] sm:$0xf]
  %v3143 = vld [vmem:[%s6 + $0x7c] sm:$0xf]
  %v3176 = vunpack.c.l.b16 %v3112
  %v3177 = vunpack.c.l.b16 %v3113
  %v3178 = vunpack.c.l.b16 %v3114
  %v3179 = vunpack.c.l.b16 %v3115
  %v3180 = vunpack.c.l.b16 %v3116
  %v3181 = vunpack.c.l.b16 %v3117
  %v3182 = vunpack.c.l.b16 %v3118
  %v3183 = vunpack.c.l.b16 %v3119
  %v3184 = vunpack.c.l.b16 %v3120
  %v3185 = vunpack.c.l.b16 %v3121
  %v3186 = vunpack.c.l.b16 %v3122
  %v3187 = vunpack.c.l.b16 %v3123
  %v3188 = vunpack.c.l.b16 %v3124
  %v3189 = vunpack.c.l.b16 %v3125
  %v3190 = vunpack.c.l.b16 %v3126
  %v3191 = vunpack.c.l.b16 %v3127
  %v3192 = vunpack.c.l.b16 %v3128
  %v3193 = vunpack.c.l.b16 %v3129
  %v3194 = vunpack.c.l.b16 %v3130
  %v3195 = vunpack.c.l.b16 %v3131
  %v3196 = vunpack.c.l.b16 %v3132
  %v3197 = vunpack.c.l.b16 %v3133
  %v3198 = vunpack.c.l.b16 %v3134
  %v3199 = vunpack.c.l.b16 %v3135
  %v3200 = vunpack.c.l.b16 %v3136
  %v3201 = vunpack.c.l.b16 %v3137
  %v3202 = vunpack.c.l.b16 %v3138
  %v3203 = vunpack.c.l.b16 %v3139
  %v3204 = vunpack.c.l.b16 %v3140
  %v3205 = vunpack.c.l.b16 %v3141
  %v3206 = vunpack.c.l.b16 %v3142
  %v3207 = vunpack.c.l.b16 %v3143
  %v3208 = vpack.c.b16 %v3177, %v3176
  %v3209 = vpack.c.b16 %v3179, %v3178
  %v3210 = vpack.c.b16 %v3181, %v3180
  %v3211 = vpack.c.b16 %v3183, %v3182
  %v3212 = vpack.c.b16 %v3185, %v3184
  %v3213 = vpack.c.b16 %v3187, %v3186
  %v3214 = vpack.c.b16 %v3189, %v3188
  %v3215 = vpack.c.b16 %v3191, %v3190
  %v3216 = vpack.c.b16 %v3193, %v3192
  %v3217 = vpack.c.b16 %v3195, %v3194
  %v3218 = vpack.c.b16 %v3197, %v3196
  %v3219 = vpack.c.b16 %v3199, %v3198
  %v3220 = vpack.c.b16 %v3201, %v3200
  %v3221 = vpack.c.b16 %v3203, %v3202
  %v3222 = vpack.c.b16 %v3205, %v3204
  %v3223 = vpack.c.b16 %v3207, %v3206
  %3240 = vmatprep.subr.bf16.mxu0 0
  %3241 = vmatpush1.bf16.msra.mxu0 %v3208
  %3242 = vmatprep.subr.bf16.mxu0 0
  %3243 = vmatpush1.bf16.msra.mxu0 %v3209
  %3244 = vmatprep.subr.bf16.mxu0 0
  %3245 = vmatpush1.bf16.msra.mxu0 %v3210
  %3246 = vmatprep.subr.bf16.mxu0 0
  %3247 = vmatpush1.bf16.msra.mxu0 %v3211
  %3248 = vmatprep.subr.bf16.mxu0 0
  %3249 = vmatpush1.bf16.msra.mxu0 %v3212
  %3250 = vmatprep.subr.bf16.mxu0 0
  %3251 = vmatpush1.bf16.msra.mxu0 %v3213
  %3252 = vmatprep.subr.bf16.mxu0 0
  %3253 = vmatpush1.bf16.msra.mxu0 %v3214
  %3254 = vmatprep.subr.bf16.mxu0 0
  %3255 = vmatpush1.bf16.msra.mxu0 %v3215
  %3256 = vmatprep.subr.bf16.mxu0 0
  %3257 = vmatpush1.bf16.msra.mxu0 %v3216
  %3258 = vmatprep.subr.bf16.mxu0 0
  %3259 = vmatpush1.bf16.msra.mxu0 %v3217
  %3260 = vmatprep.subr.bf16.mxu0 0
  %3261 = vmatpush1.bf16.msra.mxu0 %v3218
  %3262 = vmatprep.subr.bf16.mxu0 0
  %3263 = vmatpush1.bf16.msra.mxu0 %v3219
  %3264 = vmatprep.subr.bf16.mxu0 0
  %3265 = vmatpush1.bf16.msra.mxu0 %v3220
  %3266 = vmatprep.subr.bf16.mxu0 0
  %3267 = vmatpush1.bf16.msra.mxu0 %v3221
  %3268 = vmatprep.subr.bf16.mxu0 0
  %3269 = vmatpush1.bf16.msra.mxu0 %v3222
  %3270 = vmatprep.subr.bf16.mxu0 0
  %3271 = vmatpush1.bf16.msra.mxu0 %v3223
  %3272 = vmatprep.mubr.bf16.mxu0 %v3081
  %3273 = vmatmul.mubr.bf16.gmra.mrb[0].mxu0 %v3080
  %v3274 = vpop.f32.mrb[0].mxu0
  %v3275 = vadd.f32 0.0, %v3274
  %v3276 = vpop.f32.mrb[0].mxu0
  %v3277 = vpop.f32.mrb[0].mxu0
  %v3278 = vadd.f32 0.0, %v3277
  %v3279 = vpop.f32.mrb[0].mxu0
  %3280 = vmatprep.mubr.bf16.mxu0 %v3083
  %3281 = vmatmul.mubr.bf16.gmra.mrb[0].mxu0 %v3082
  %v3282 = vpop.f32.mrb[0].mxu0
  %v3283 = vadd.f32 0.0, %v3282
  %v3284 = vpop.f32.mrb[0].mxu0
  %v3285 = vpop.f32.mrb[0].mxu0
  %v3286 = vadd.f32 0.0, %v3285
  %v3287 = vpop.f32.mrb[0].mxu0
  %3288 = vmatprep.mubr.bf16.mxu0 %v3085
  %3289 = vmatmul.mubr.bf16.gmra.mrb[0].mxu0 %v3084
  %v3290 = vpop.f32.mrb[0].mxu0
  %v3291 = vadd.f32 0.0, %v3290
  %v3292 = vpop.f32.mrb[0].mxu0
  %v3293 = vpop.f32.mrb[0].mxu0
  %v3294 = vadd.f32 0.0, %v3293
  %v3295 = vpop.f32.mrb[0].mxu0
  %3296 = vmatprep.mubr.bf16.mxu0 %v3087
  %3297 = vmatmul.mubr.bf16.gmra.mrb[0].mxu0 %v3086
  %v3298 = vpop.f32.mrb[0].mxu0
  %v3299 = vadd.f32 0.0, %v3298
  %v3300 = vpop.f32.mrb[0].mxu0
  %v3301 = vpop.f32.mrb[0].mxu0
  %v3302 = vadd.f32 0.0, %v3301
  %v3303 = vpop.f32.mrb[0].mxu0
  %3304 = vmatprep.mubr.bf16.mxu0 %v3089
  %3305 = vmatmul.mubr.bf16.gmra.mrb[0].mxu0 %v3088
  %v3306 = vpop.f32.mrb[0].mxu0
  %v3307 = vadd.f32 0.0, %v3306
  %v3308 = vpop.f32.mrb[0].mxu0
  %v3309 = vpop.f32.mrb[0].mxu0
  %v3310 = vadd.f32 0.0, %v3309
  %v3311 = vpop.f32.mrb[0].mxu0
  %3312 = vmatprep.mubr.bf16.mxu0 %v3091
  %3313 = vmatmul.mubr.bf16.gmra.mrb[0].mxu0 %v3090
  %v3314 = vpop.f32.mrb[0].mxu0
  %v3315 = vadd.f32 0.0, %v3314
  %v3316 = vpop.f32.mrb[0].mxu0
  %v3317 = vpop.f32.mrb[0].mxu0
  %v3318 = vadd.f32 0.0, %v3317
  %v3319 = vpop.f32.mrb[0].mxu0
  %3320 = vmatprep.mubr.bf16.mxu0 %v3093
  %3321 = vmatmul.mubr.bf16.gmra.mrb[0].mxu0 %v3092
  %v3322 = vpop.f32.mrb[0].mxu0
  %v3323 = vadd.f32 0.0, %v3322
  %v3324 = vpop.f32.mrb[0].mxu0
  %v3325 = vpop.f32.mrb[0].mxu0
  %v3326 = vadd.f32 0.0, %v3325
  %v3327 = vpop.f32.mrb[0].mxu0
  %3328 = vmatprep.mubr.bf16.mxu0 %v3095
  %3329 = vmatmul.mubr.bf16.gmra.mrb[0].mxu0 %v3094
  %v3330 = vpop.f32.mrb[0].mxu0
  %v3331 = vadd.f32 0.0, %v3330
  %v3332 = vpop.f32.mrb[0].mxu0
  %v3333 = vpop.f32.mrb[0].mxu0
  %v3334 = vadd.f32 0.0, %v3333
  %v3335 = vpop.f32.mrb[0].mxu0
  %3336 = vmatprep.mubr.bf16.mxu0 %v3097
  %3337 = vmatmul.mubr.bf16.gmra.mrb[0].mxu0 %v3096
  %v3338 = vpop.f32.mrb[0].mxu0
  %v3339 = vadd.f32 0.0, %v3338
  %v3340 = vpop.f32.mrb[0].mxu0
  %v3341 = vpop.f32.mrb[0].mxu0
  %v3342 = vadd.f32 0.0, %v3341
  %v3343 = vpop.f32.mrb[0].mxu0
  %3344 = vmatprep.mubr.bf16.mxu0 %v3099
  %3345 = vmatmul.mubr.bf16.gmra.mrb[0].mxu0 %v3098
  %v3346 = vpop.f32.mrb[0].mxu0
  %v3347 = vadd.f32 0.0, %v3346
  %v3348 = vpop.f32.mrb[0].mxu0
  %v3349 = vpop.f32.mrb[0].mxu0
  %v3350 = vadd.f32 0.0, %v3349
  %v3351 = vpop.f32.mrb[0].mxu0
  %3352 = vmatprep.mubr.bf16.mxu0 %v3101
  %3353 = vmatmul.mubr.bf16.gmra.mrb[0].mxu0 %v3100
  %v3354 = vpop.f32.mrb[0].mxu0
  %v3355 = vadd.f32 0.0, %v3354
  %v3356 = vpop.f32.mrb[0].mxu0
  %v3357 = vpop.f32.mrb[0].mxu0
  %v3358 = vadd.f32 0.0, %v3357
  %v3359 = vpop.f32.mrb[0].mxu0
  %3360 = vmatprep.mubr.bf16.mxu0 %v3103
  %3361 = vmatmul.mubr.bf16.gmra.mrb[0].mxu0 %v3102
  %v3362 = vpop.f32.mrb[0].mxu0
  %v3363 = vadd.f32 0.0, %v3362
  %v3364 = vpop.f32.mrb[0].mxu0
  %v3365 = vpop.f32.mrb[0].mxu0
  %v3366 = vadd.f32 0.0, %v3365
  %v3367 = vpop.f32.mrb[0].mxu0
  %3368 = vmatprep.mubr.bf16.mxu0 %v3105
  %3369 = vmatmul.mubr.bf16.gmra.mrb[0].mxu0 %v3104
  %v3370 = vpop.f32.mrb[0].mxu0
  %v3371 = vadd.f32 0.0, %v3370
  %v3372 = vpop.f32.mrb[0].mxu0
  %v3373 = vpop.f32.mrb[0].mxu0
  %v3374 = vadd.f32 0.0, %v3373
  %v3375 = vpop.f32.mrb[0].mxu0
  %3376 = vmatprep.mubr.bf16.mxu0 %v3107
  %3377 = vmatmul.mubr.bf16.gmra.mrb[0].mxu0 %v3106
  %v3378 = vpop.f32.mrb[0].mxu0
  %v3379 = vadd.f32 0.0, %v3378
  %v3380 = vpop.f32.mrb[0].mxu0
  %v3381 = vpop.f32.mrb[0].mxu0
  %v3382 = vadd.f32 0.0, %v3381
  %v3383 = vpop.f32.mrb[0].mxu0
  %3384 = vmatprep.mubr.bf16.mxu0 %v3109
  %3385 = vmatmul.mubr.bf16.gmra.mrb[0].mxu0 %v3108
  %v3386 = vpop.f32.mrb[0].mxu0
  %v3387 = vadd.f32 0.0, %v3386
  %v3388 = vpop.f32.mrb[0].mxu0
  %v3389 = vpop.f32.mrb[0].mxu0
  %v3390 = vadd.f32 0.0, %v3389
  %v3391 = vpop.f32.mrb[0].mxu0
  %3392 = vmatprep.mubr.bf16.mxu0 %v3111
  %3393 = vmatmul.mubr.bf16.gmra.mrb[0].mxu0 %v3110
  %v3394 = vpop.f32.mrb[0].mxu0
  %v3395 = vadd.f32 0.0, %v3394
  %v3396 = vpop.f32.mrb[0].mxu0
  %v3397 = vpop.f32.mrb[0].mxu0
  %v3398 = vpop.f32.mrb[0].mxu0
  %3399 = vdwg.mxu0
  %vm3400 = vcmask 261120
  %3401 = vst.msk [vmem:[%s17] sm:$0xff] %vm3400, %v3275
  %3402 = vst.msk [vmem:[%s17 + $0x8] sm:$0xff] %vm3400, %v3278
  %3403 = vst.msk [vmem:[%s17 + $0x10] sm:$0xff] %vm3400, %v3283
  %3404 = vst.msk [vmem:[%s17 + $0x18] sm:$0xff] %vm3400, %v3286
  %3405 = vst.msk [vmem:[%s17 + $0x20] sm:$0xff] %vm3400, %v3291
  %3406 = vst.msk [vmem:[%s17 + $0x28] sm:$0xff] %vm3400, %v3294
  %3407 = vst.msk [vmem:[%s17 + $0x30] sm:$0xff] %vm3400, %v3299
  %3408 = vst.msk [vmem:[%s17 + $0x38] sm:$0xff] %vm3400, %v3302
  %3409 = vst.msk [vmem:[%s17 + $0x40] sm:$0xff] %vm3400, %v3307
  %3410 = vst.msk [vmem:[%s17 + $0x48] sm:$0xff] %vm3400, %v3310
  %3411 = vst.msk [vmem:[%s17 + $0x50] sm:$0xff] %vm3400, %v3315
  %3412 = vst.msk [vmem:[%s17 + $0x58] sm:$0xff] %vm3400, %v3318
  %3413 = vst.msk [vmem:[%s17 + $0x60] sm:$0xff] %vm3400, %v3323
  %3414 = vst.msk [vmem:[%s17 + $0x68] sm:$0xff] %vm3400, %v3326
  %3415 = vst.msk [vmem:[%s17 + $0x70] sm:$0xff] %vm3400, %v3331
  %3416 = vst.msk [vmem:[%s17 + $0x78] sm:$0xff] %vm3400, %v3334
  %3417 = vst.msk [vmem:[%s17 + $0x80] sm:$0xff] %vm3400, %v3339
  %3418 = vst.msk [vmem:[%s17 + $0x88] sm:$0xff] %vm3400, %v3342
  %3419 = vst.msk [vmem:[%s17 + $0x90] sm:$0xff] %vm3400, %v3347
  %3420 = vst.msk [vmem:[%s17 + $0x98] sm:$0xff] %vm3400, %v3350
  %3421 = vst.msk [vmem:[%s17 + $0xa0] sm:$0xff] %vm3400, %v3355
  %3422 = vst.msk [vmem:[%s17 + $0xa8] sm:$0xff] %vm3400, %v3358
  %3423 = vst.msk [vmem:[%s17 + $0xb0] sm:$0xff] %vm3400, %v3363
  %3424 = vst.msk [vmem:[%s17 + $0xb8] sm:$0xff] %vm3400, %v3366
  %3425 = vst.msk [vmem:[%s17 + $0xc0] sm:$0xff] %vm3400, %v3371
  %3426 = vst.msk [vmem:[%s17 + $0xc8] sm:$0xff] %vm3400, %v3374
  %3427 = vst.msk [vmem:[%s17 + $0xd0] sm:$0xff] %vm3400, %v3379
  %3428 = vst.msk [vmem:[%s17 + $0xd8] sm:$0xff] %vm3400, %v3382
  %3429 = vst.msk [vmem:[%s17 + $0xe0] sm:$0xff] %vm3400, %v3387
  %3430 = vst.msk [vmem:[%s17 + $0xe8] sm:$0xff] %vm3400, %v3390
  %vm3431 = vcmask 258048
  %3432 = vst.msk [vmem:[%s17 + $0xf0] sm:$0x1f] %vm3431, %v3395
  %v3433 = vld [vmem:[%s12] sm:$0xff]
  %v3434 = vld [vmem:[%s12 + $0x8] sm:$0xff]
  %v3435 = vld [vmem:[%s12 + $0x10] sm:$0xff]
  %v3436 = vld [vmem:[%s12 + $0x18] sm:$0xff]
  %v3437 = vld [vmem:[%s12 + $0x20] sm:$0xff]
  %v3438 = vld [vmem:[%s12 + $0x28] sm:$0xff]
  %v3439 = vld [vmem:[%s12 + $0x30] sm:$0xff]
  %v3440 = vld [vmem:[%s12 + $0x38] sm:$0xff]
  %v3441 = vld [vmem:[%s12 + $0x40] sm:$0xff]
  %v3442 = vld [vmem:[%s12 + $0x48] sm:$0xff]
  %v3443 = vld [vmem:[%s12 + $0x50] sm:$0xff]
  %v3444 = vld [vmem:[%s12 + $0x58] sm:$0xff]
  %v3445 = vld [vmem:[%s12 + $0x60] sm:$0xff]
  %v3446 = vld [vmem:[%s12 + $0x68] sm:$0xff]
  %v3447 = vld [vmem:[%s12 + $0x70] sm:$0xff]
  %v3448 = vld [vmem:[%s12 + $0x78] sm:$0xff]
  %v3449 = vld [vmem:[%s12 + $0x80] sm:$0xff]
  %v3450 = vld [vmem:[%s12 + $0x88] sm:$0xff]
  %v3451 = vld [vmem:[%s12 + $0x90] sm:$0xff]
  %v3452 = vld [vmem:[%s12 + $0x98] sm:$0xff]
  %v3453 = vld [vmem:[%s12 + $0xa0] sm:$0xff]
  %v3454 = vld [vmem:[%s12 + $0xa8] sm:$0xff]
  %v3455 = vld [vmem:[%s12 + $0xb0] sm:$0xff]
  %v3456 = vld [vmem:[%s12 + $0xb8] sm:$0xff]
  %v3457 = vld [vmem:[%s12 + $0xc0] sm:$0xff]
  %v3458 = vld [vmem:[%s12 + $0xc8] sm:$0xff]
  %v3459 = vld [vmem:[%s12 + $0xd0] sm:$0xff]
  %v3460 = vld [vmem:[%s12 + $0xd8] sm:$0xff]
  %v3461 = vld [vmem:[%s12 + $0xe0] sm:$0xff]
  %v3462 = vld [vmem:[%s12 + $0xe8] sm:$0xff]
  %v3463 = vld [vmem:[%s12 + $0xf0] sm:$0x1f]
  %v3464 = vmax.f32 %v3433, 0.0
  %v3465 = vmax.f32 %v3434, 0.0
  %v3466 = vmax.f32 %v3435, 0.0
  %v3467 = vmax.f32 %v3436, 0.0
  %v3468 = vmax.f32 %v3437, 0.0
  %v3469 = vmax.f32 %v3438, 0.0
  %v3470 = vmax.f32 %v3439, 0.0
  %v3471 = vmax.f32 %v3440, 0.0
  %v3472 = vmax.f32 %v3441, 0.0
  %v3473 = vmax.f32 %v3442, 0.0
  %v3474 = vmax.f32 %v3443, 0.0
  %v3475 = vmax.f32 %v3444, 0.0
  %v3476 = vmax.f32 %v3445, 0.0
  %v3477 = vmax.f32 %v3446, 0.0
  %v3478 = vmax.f32 %v3447, 0.0
  %v3479 = vmax.f32 %v3448, 0.0
  %v3480 = vmax.f32 %v3449, 0.0
  %v3481 = vmax.f32 %v3450, 0.0
  %v3482 = vmax.f32 %v3451, 0.0
  %v3483 = vmax.f32 %v3452, 0.0
  %v3484 = vmax.f32 %v3453, 0.0
  %v3485 = vmax.f32 %v3454, 0.0
  %v3486 = vmax.f32 %v3455, 0.0
  %v3487 = vmax.f32 %v3456, 0.0
  %v3488 = vmax.f32 %v3457, 0.0
  %v3489 = vmax.f32 %v3458, 0.0
  %v3490 = vmax.f32 %v3459, 0.0
  %v3491 = vmax.f32 %v3460, 0.0
  %v3492 = vmax.f32 %v3461, 0.0
  %v3493 = vmax.f32 %v3462, 0.0
  %v3494 = vmax.f32 %v3463, 0.0
  %v3495 = vmin.f32 %v3464, 3.0
  %v3496 = vmin.f32 %v3465, 3.0
  %v3497 = vmin.f32 %v3466, 3.0
  %v3498 = vmin.f32 %v3467, 3.0
  %v3499 = vmin.f32 %v3468, 3.0
  %v3500 = vmin.f32 %v3469, 3.0
  %v3501 = vmin.f32 %v3470, 3.0
  %v3502 = vmin.f32 %v3471, 3.0
  %v3503 = vmin.f32 %v3472, 3.0
  %v3504 = vmin.f32 %v3473, 3.0
  %v3505 = vmin.f32 %v3474, 3.0
  %v3506 = vmin.f32 %v3475, 3.0
  %v3507 = vmin.f32 %v3476, 3.0
  %v3508 = vmin.f32 %v3477, 3.0
  %v3509 = vmin.f32 %v3478, 3.0
  %v3510 = vmin.f32 %v3479, 3.0
  %v3511 = vmin.f32 %v3480, 3.0
  %v3512 = vmin.f32 %v3481, 3.0
  %v3513 = vmin.f32 %v3482, 3.0
  %v3514 = vmin.f32 %v3483, 3.0
  %v3515 = vmin.f32 %v3484, 3.0
  %v3516 = vmin.f32 %v3485, 3.0
  %v3517 = vmin.f32 %v3486, 3.0
  %v3518 = vmin.f32 %v3487, 3.0
  %v3519 = vmin.f32 %v3488, 3.0
  %v3520 = vmin.f32 %v3489, 3.0
  %v3521 = vmin.f32 %v3490, 3.0
  %v3522 = vmin.f32 %v3491, 3.0
  %v3523 = vmin.f32 %v3492, 3.0
  %v3524 = vmin.f32 %v3493, 3.0
  %v3525 = vmin.f32 %v3494, 3.0
  %3527 = vset.pattern.permute.xlu0 0
  %3528 = vperm.xlu0 %3527, %v3495
  %v3529 = vpop.permute.xlu0 %3528
  %3532 = vset.pattern.permute.xlu0 0
  %3533 = vperm.xlu0 %3532, %v3496
  %v3534 = vpop.permute.xlu0 %3533
  %3537 = vset.pattern.permute.xlu0 0
  %3538 = vperm.xlu0 %3537, %v3497
  %v3539 = vpop.permute.xlu0 %3538
  %3542 = vset.pattern.permute.xlu0 0
  %3543 = vperm.xlu0 %3542, %v3498
  %v3544 = vpop.permute.xlu0 %3543
  %3547 = vset.pattern.permute.xlu0 0
  %3548 = vperm.xlu0 %3547, %v3499
  %v3549 = vpop.permute.xlu0 %3548
  %3552 = vset.pattern.permute.xlu0 0
  %3553 = vperm.xlu0 %3552, %v3500
  %v3554 = vpop.permute.xlu0 %3553
  %3557 = vset.pattern.permute.xlu0 0
  %3558 = vperm.xlu0 %3557, %v3501
  %v3559 = vpop.permute.xlu0 %3558
  %3562 = vset.pattern.permute.xlu0 0
  %3563 = vperm.xlu0 %3562, %v3502
  %v3564 = vpop.permute.xlu0 %3563
  %3567 = vset.pattern.permute.xlu0 0
  %3568 = vperm.xlu0 %3567, %v3503
  %v3569 = vpop.permute.xlu0 %3568
  %3572 = vset.pattern.permute.xlu0 0
  %3573 = vperm.xlu0 %3572, %v3504
  %v3574 = vpop.permute.xlu0 %3573
  %3577 = vset.pattern.permute.xlu0 0
  %3578 = vperm.xlu0 %3577, %v3505
  %v3579 = vpop.permute.xlu0 %3578
  %3582 = vset.pattern.permute.xlu0 0
  %3583 = vperm.xlu0 %3582, %v3506
  %v3584 = vpop.permute.xlu0 %3583
  %3587 = vset.pattern.permute.xlu0 0
  %3588 = vperm.xlu0 %3587, %v3507
  %v3589 = vpop.permute.xlu0 %3588
  %3592 = vset.pattern.permute.xlu0 0
  %3593 = vperm.xlu0 %3592, %v3508
  %v3594 = vpop.permute.xlu0 %3593
  %3597 = vset.pattern.permute.xlu0 0
  %3598 = vperm.xlu0 %3597, %v3509
  %v3599 = vpop.permute.xlu0 %3598
  %3602 = vset.pattern.permute.xlu0 0
  %3603 = vperm.xlu0 %3602, %v3510
  %v3604 = vpop.permute.xlu0 %3603
  %3607 = vset.pattern.permute.xlu0 0
  %3608 = vperm.xlu0 %3607, %v3511
  %v3609 = vpop.permute.xlu0 %3608
  %3612 = vset.pattern.permute.xlu0 0
  %3613 = vperm.xlu0 %3612, %v3512
  %v3614 = vpop.permute.xlu0 %3613
  %3617 = vset.pattern.permute.xlu0 0
  %3618 = vperm.xlu0 %3617, %v3513
  %v3619 = vpop.permute.xlu0 %3618
  %3622 = vset.pattern.permute.xlu0 0
  %3623 = vperm.xlu0 %3622, %v3514
  %v3624 = vpop.permute.xlu0 %3623
  %3627 = vset.pattern.permute.xlu0 0
  %3628 = vperm.xlu0 %3627, %v3515
  %v3629 = vpop.permute.xlu0 %3628
  %3632 = vset.pattern.permute.xlu0 0
  %3633 = vperm.xlu0 %3632, %v3516
  %v3634 = vpop.permute.xlu0 %3633
  %3637 = vset.pattern.permute.xlu0 0
  %3638 = vperm.xlu0 %3637, %v3517
  %v3639 = vpop.permute.xlu0 %3638
  %3642 = vset.pattern.permute.xlu0 0
  %3643 = vperm.xlu0 %3642, %v3518
  %v3644 = vpop.permute.xlu0 %3643
  %3647 = vset.pattern.permute.xlu0 0
  %3648 = vperm.xlu0 %3647, %v3519
  %v3649 = vpop.permute.xlu0 %3648
  %3652 = vset.pattern.permute.xlu0 0
  %3653 = vperm.xlu0 %3652, %v3520
  %v3654 = vpop.permute.xlu0 %3653
  %3657 = vset.pattern.permute.xlu0 0
  %3658 = vperm.xlu0 %3657, %v3521
  %v3659 = vpop.permute.xlu0 %3658
  %3662 = vset.pattern.permute.xlu0 0
  %3663 = vperm.xlu0 %3662, %v3522
  %v3664 = vpop.permute.xlu0 %3663
  %3667 = vset.pattern.permute.xlu0 0
  %3668 = vperm.xlu0 %3667, %v3523
  %v3669 = vpop.permute.xlu0 %3668
  %3672 = vset.pattern.permute.xlu0 0
  %3673 = vperm.xlu0 %3672, %v3524
  %v3674 = vpop.permute.xlu0 %3673
  %3677 = vset.pattern.permute.xlu0 0
  %3678 = vperm.xlu0 %3677, %v3525
  %v3679 = vpop.permute.xlu0 %3678
  %v3681 = vsub.f32 %v3529, %v1880
  %v3682 = vsub.f32 %v3534, %v1880
  %v3683 = vsub.f32 %v3539, %v1880
  %v3684 = vsub.f32 %v3544, %v1880
  %v3685 = vsub.f32 %v3549, %v1880
  %v3686 = vsub.f32 %v3554, %v1880
  %v3687 = vsub.f32 %v3559, %v1880
  %v3688 = vsub.f32 %v3564, %v1880
  %v3689 = vsub.f32 %v3569, %v1880
  %v3690 = vsub.f32 %v3574, %v1880
  %v3691 = vsub.f32 %v3579, %v1880
  %v3692 = vsub.f32 %v3584, %v1880
  %v3693 = vsub.f32 %v3589, %v1880
  %v3694 = vsub.f32 %v3594, %v1880
  %v3695 = vsub.f32 %v3599, %v1880
  %v3696 = vsub.f32 %v3604, %v1880
  %v3697 = vsub.f32 %v3609, %v1880
  %v3698 = vsub.f32 %v3614, %v1880
  %v3699 = vsub.f32 %v3619, %v1880
  %v3700 = vsub.f32 %v3624, %v1880
  %v3701 = vsub.f32 %v3629, %v1880
  %v3702 = vsub.f32 %v3634, %v1880
  %v3703 = vsub.f32 %v3639, %v1880
  %v3704 = vsub.f32 %v3644, %v1880
  %v3705 = vsub.f32 %v3649, %v1880
  %v3706 = vsub.f32 %v3654, %v1880
  %v3707 = vsub.f32 %v3659, %v1880
  %v3708 = vsub.f32 %v3664, %v1880
  %v3709 = vsub.f32 %v3669, %v1880
  %v3710 = vsub.f32 %v3674, %v1880
  %v3711 = vsub.f32 %v3679, %v1880
  %v3712 = vand.u32 2147483647, %v3681
  %v3713 = vand.u32 2147483647, %v3682
  %v3714 = vand.u32 2147483647, %v3683
  %v3715 = vand.u32 2147483647, %v3684
  %v3716 = vand.u32 2147483647, %v3685
  %v3717 = vand.u32 2147483647, %v3686
  %v3718 = vand.u32 2147483647, %v3687
  %v3719 = vand.u32 2147483647, %v3688
  %v3720 = vand.u32 2147483647, %v3689
  %v3721 = vand.u32 2147483647, %v3690
  %v3722 = vand.u32 2147483647, %v3691
  %v3723 = vand.u32 2147483647, %v3692
  %v3724 = vand.u32 2147483647, %v3693
  %v3725 = vand.u32 2147483647, %v3694
  %v3726 = vand.u32 2147483647, %v3695
  %v3727 = vand.u32 2147483647, %v3696
  %v3728 = vand.u32 2147483647, %v3697
  %v3729 = vand.u32 2147483647, %v3698
  %v3730 = vand.u32 2147483647, %v3699
  %v3731 = vand.u32 2147483647, %v3700
  %v3732 = vand.u32 2147483647, %v3701
  %v3733 = vand.u32 2147483647, %v3702
  %v3734 = vand.u32 2147483647, %v3703
  %v3735 = vand.u32 2147483647, %v3704
  %v3736 = vand.u32 2147483647, %v3705
  %v3737 = vand.u32 2147483647, %v3706
  %v3738 = vand.u32 2147483647, %v3707
  %v3739 = vand.u32 2147483647, %v3708
  %v3740 = vand.u32 2147483647, %v3709
  %v3741 = vand.u32 2147483647, %v3710
  %v3742 = vand.u32 2147483647, %v3711
  %v3743 = vsub.f32 1.0, %v3712
  %v3744 = vsub.f32 1.0, %v3713
  %v3745 = vsub.f32 1.0, %v3714
  %v3746 = vsub.f32 1.0, %v3715
  %v3747 = vsub.f32 1.0, %v3716
  %v3748 = vsub.f32 1.0, %v3717
  %v3749 = vsub.f32 1.0, %v3718
  %v3750 = vsub.f32 1.0, %v3719
  %v3751 = vsub.f32 1.0, %v3720
  %v3752 = vsub.f32 1.0, %v3721
  %v3753 = vsub.f32 1.0, %v3722
  %v3754 = vsub.f32 1.0, %v3723
  %v3755 = vsub.f32 1.0, %v3724
  %v3756 = vsub.f32 1.0, %v3725
  %v3757 = vsub.f32 1.0, %v3726
  %v3758 = vsub.f32 1.0, %v3727
  %v3759 = vsub.f32 1.0, %v3728
  %v3760 = vsub.f32 1.0, %v3729
  %v3761 = vsub.f32 1.0, %v3730
  %v3762 = vsub.f32 1.0, %v3731
  %v3763 = vsub.f32 1.0, %v3732
  %v3764 = vsub.f32 1.0, %v3733
  %v3765 = vsub.f32 1.0, %v3734
  %v3766 = vsub.f32 1.0, %v3735
  %v3767 = vsub.f32 1.0, %v3736
  %v3768 = vsub.f32 1.0, %v3737
  %v3769 = vsub.f32 1.0, %v3738
  %v3770 = vsub.f32 1.0, %v3739
  %v3771 = vsub.f32 1.0, %v3740
  %v3772 = vsub.f32 1.0, %v3741
  %v3773 = vsub.f32 1.0, %v3742
  %v3774 = vmax.f32 %v3743, 0.0
  %v3775 = vmax.f32 %v3744, 0.0
  %v3776 = vmax.f32 %v3745, 0.0
  %v3777 = vmax.f32 %v3746, 0.0
  %v3778 = vmax.f32 %v3747, 0.0
  %v3779 = vmax.f32 %v3748, 0.0
  %v3780 = vmax.f32 %v3749, 0.0
  %v3781 = vmax.f32 %v3750, 0.0
  %v3782 = vmax.f32 %v3751, 0.0
  %v3783 = vmax.f32 %v3752, 0.0
  %v3784 = vmax.f32 %v3753, 0.0
  %v3785 = vmax.f32 %v3754, 0.0
  %v3786 = vmax.f32 %v3755, 0.0
  %v3787 = vmax.f32 %v3756, 0.0
  %v3788 = vmax.f32 %v3757, 0.0
  %v3789 = vmax.f32 %v3758, 0.0
  %v3790 = vmax.f32 %v3759, 0.0
  %v3791 = vmax.f32 %v3760, 0.0
  %v3792 = vmax.f32 %v3761, 0.0
  %v3793 = vmax.f32 %v3762, 0.0
  %v3794 = vmax.f32 %v3763, 0.0
  %v3795 = vmax.f32 %v3764, 0.0
  %v3796 = vmax.f32 %v3765, 0.0
  %v3797 = vmax.f32 %v3766, 0.0
  %v3798 = vmax.f32 %v3767, 0.0
  %v3799 = vmax.f32 %v3768, 0.0
  %v3800 = vmax.f32 %v3769, 0.0
  %v3801 = vmax.f32 %v3770, 0.0
  %v3802 = vmax.f32 %v3771, 0.0
  %v3803 = vmax.f32 %v3772, 0.0
  %v3804 = vmax.f32 %v3773, 0.0
  %3805 = vset.pattern.permute.xlu0 1
  %3806 = vperm.xlu0 %3805, %v3495
  %v3807 = vpop.permute.xlu0 %3806
  %3809 = vset.pattern.permute.xlu0 1
  %3810 = vperm.xlu0 %3809, %v3496
  %v3811 = vpop.permute.xlu0 %3810
  %3813 = vset.pattern.permute.xlu0 1
  %3814 = vperm.xlu0 %3813, %v3497
  %v3815 = vpop.permute.xlu0 %3814
  %3817 = vset.pattern.permute.xlu0 1
  %3818 = vperm.xlu0 %3817, %v3498
  %v3819 = vpop.permute.xlu0 %3818
  %3821 = vset.pattern.permute.xlu0 1
  %3822 = vperm.xlu0 %3821, %v3499
  %v3823 = vpop.permute.xlu0 %3822
  %3825 = vset.pattern.permute.xlu0 1
  %3826 = vperm.xlu0 %3825, %v3500
  %v3827 = vpop.permute.xlu0 %3826
  %3829 = vset.pattern.permute.xlu0 1
  %3830 = vperm.xlu0 %3829, %v3501
  %v3831 = vpop.permute.xlu0 %3830
  %3833 = vset.pattern.permute.xlu0 1
  %3834 = vperm.xlu0 %3833, %v3502
  %v3835 = vpop.permute.xlu0 %3834
  %3837 = vset.pattern.permute.xlu0 1
  %3838 = vperm.xlu0 %3837, %v3503
  %v3839 = vpop.permute.xlu0 %3838
  %3841 = vset.pattern.permute.xlu0 1
  %3842 = vperm.xlu0 %3841, %v3504
  %v3843 = vpop.permute.xlu0 %3842
  %3845 = vset.pattern.permute.xlu0 1
  %3846 = vperm.xlu0 %3845, %v3505
  %v3847 = vpop.permute.xlu0 %3846
  %3849 = vset.pattern.permute.xlu0 1
  %3850 = vperm.xlu0 %3849, %v3506
  %v3851 = vpop.permute.xlu0 %3850
  %3853 = vset.pattern.permute.xlu0 1
  %3854 = vperm.xlu0 %3853, %v3507
  %v3855 = vpop.permute.xlu0 %3854
  %3857 = vset.pattern.permute.xlu0 1
  %3858 = vperm.xlu0 %3857, %v3508
  %v3859 = vpop.permute.xlu0 %3858
  %3861 = vset.pattern.permute.xlu0 1
  %3862 = vperm.xlu0 %3861, %v3509
  %v3863 = vpop.permute.xlu0 %3862
  %3865 = vset.pattern.permute.xlu0 1
  %3866 = vperm.xlu0 %3865, %v3510
  %v3867 = vpop.permute.xlu0 %3866
  %3869 = vset.pattern.permute.xlu0 1
  %3870 = vperm.xlu0 %3869, %v3511
  %v3871 = vpop.permute.xlu0 %3870
  %3873 = vset.pattern.permute.xlu0 1
  %3874 = vperm.xlu0 %3873, %v3512
  %v3875 = vpop.permute.xlu0 %3874
  %3877 = vset.pattern.permute.xlu0 1
  %3878 = vperm.xlu0 %3877, %v3513
  %v3879 = vpop.permute.xlu0 %3878
  %3881 = vset.pattern.permute.xlu0 1
  %3882 = vperm.xlu0 %3881, %v3514
  %v3883 = vpop.permute.xlu0 %3882
  %3885 = vset.pattern.permute.xlu0 1
  %3886 = vperm.xlu0 %3885, %v3515
  %v3887 = vpop.permute.xlu0 %3886
  %3889 = vset.pattern.permute.xlu0 1
  %3890 = vperm.xlu0 %3889, %v3516
  %v3891 = vpop.permute.xlu0 %3890
  %3893 = vset.pattern.permute.xlu0 1
  %3894 = vperm.xlu0 %3893, %v3517
  %v3895 = vpop.permute.xlu0 %3894
  %3897 = vset.pattern.permute.xlu0 1
  %3898 = vperm.xlu0 %3897, %v3518
  %v3899 = vpop.permute.xlu0 %3898
  %3901 = vset.pattern.permute.xlu0 1
  %3902 = vperm.xlu0 %3901, %v3519
  %v3903 = vpop.permute.xlu0 %3902
  %3905 = vset.pattern.permute.xlu0 1
  %3906 = vperm.xlu0 %3905, %v3520
  %v3907 = vpop.permute.xlu0 %3906
  %3909 = vset.pattern.permute.xlu0 1
  %3910 = vperm.xlu0 %3909, %v3521
  %v3911 = vpop.permute.xlu0 %3910
  %3913 = vset.pattern.permute.xlu0 1
  %3914 = vperm.xlu0 %3913, %v3522
  %v3915 = vpop.permute.xlu0 %3914
  %3917 = vset.pattern.permute.xlu0 1
  %3918 = vperm.xlu0 %3917, %v3523
  %v3919 = vpop.permute.xlu0 %3918
  %3921 = vset.pattern.permute.xlu0 1
  %3922 = vperm.xlu0 %3921, %v3524
  %v3923 = vpop.permute.xlu0 %3922
  %3925 = vset.pattern.permute.xlu0 1
  %3926 = vperm.xlu0 %3925, %v3525
  %v3927 = vpop.permute.xlu0 %3926
  %v3929 = vsub.f32 %v3807, %v1880
  %v3930 = vsub.f32 %v3811, %v1880
  %v3931 = vsub.f32 %v3815, %v1880
  %v3932 = vsub.f32 %v3819, %v1880
  %v3933 = vsub.f32 %v3823, %v1880
  %v3934 = vsub.f32 %v3827, %v1880
  %v3935 = vsub.f32 %v3831, %v1880
  %v3936 = vsub.f32 %v3835, %v1880
  %v3937 = vsub.f32 %v3839, %v1880
  %v3938 = vsub.f32 %v3843, %v1880
  %v3939 = vsub.f32 %v3847, %v1880
  %v3940 = vsub.f32 %v3851, %v1880
  %v3941 = vsub.f32 %v3855, %v1880
  %v3942 = vsub.f32 %v3859, %v1880
  %v3943 = vsub.f32 %v3863, %v1880
  %v3944 = vsub.f32 %v3867, %v1880
  %v3945 = vsub.f32 %v3871, %v1880
  %v3946 = vsub.f32 %v3875, %v1880
  %v3947 = vsub.f32 %v3879, %v1880
  %v3948 = vsub.f32 %v3883, %v1880
  %v3949 = vsub.f32 %v3887, %v1880
  %v3950 = vsub.f32 %v3891, %v1880
  %v3951 = vsub.f32 %v3895, %v1880
  %v3952 = vsub.f32 %v3899, %v1880
  %v3953 = vsub.f32 %v3903, %v1880
  %v3954 = vsub.f32 %v3907, %v1880
  %v3955 = vsub.f32 %v3911, %v1880
  %v3956 = vsub.f32 %v3915, %v1880
  %v3957 = vsub.f32 %v3919, %v1880
  %v3958 = vsub.f32 %v3923, %v1880
  %v3959 = vsub.f32 %v3927, %v1880
  %v3960 = vand.u32 2147483647, %v3929
  %v3961 = vand.u32 2147483647, %v3930
  %v3962 = vand.u32 2147483647, %v3931
  %v3963 = vand.u32 2147483647, %v3932
  %v3964 = vand.u32 2147483647, %v3933
  %v3965 = vand.u32 2147483647, %v3934
  %v3966 = vand.u32 2147483647, %v3935
  %v3967 = vand.u32 2147483647, %v3936
  %v3968 = vand.u32 2147483647, %v3937
  %v3969 = vand.u32 2147483647, %v3938
  %v3970 = vand.u32 2147483647, %v3939
  %v3971 = vand.u32 2147483647, %v3940
  %v3972 = vand.u32 2147483647, %v3941
  %v3973 = vand.u32 2147483647, %v3942
  %v3974 = vand.u32 2147483647, %v3943
  %v3975 = vand.u32 2147483647, %v3944
  %v3976 = vand.u32 2147483647, %v3945
  %v3977 = vand.u32 2147483647, %v3946
  %v3978 = vand.u32 2147483647, %v3947
  %v3979 = vand.u32 2147483647, %v3948
  %v3980 = vand.u32 2147483647, %v3949
  %v3981 = vand.u32 2147483647, %v3950
  %v3982 = vand.u32 2147483647, %v3951
  %v3983 = vand.u32 2147483647, %v3952
  %v3984 = vand.u32 2147483647, %v3953
  %v3985 = vand.u32 2147483647, %v3954
  %v3986 = vand.u32 2147483647, %v3955
  %v3987 = vand.u32 2147483647, %v3956
  %v3988 = vand.u32 2147483647, %v3957
  %v3989 = vand.u32 2147483647, %v3958
  %v3990 = vand.u32 2147483647, %v3959
  %v3991 = vsub.f32 1.0, %v3960
  %v3992 = vsub.f32 1.0, %v3961
  %v3993 = vsub.f32 1.0, %v3962
  %v3994 = vsub.f32 1.0, %v3963
  %v3995 = vsub.f32 1.0, %v3964
  %v3996 = vsub.f32 1.0, %v3965
  %v3997 = vsub.f32 1.0, %v3966
  %v3998 = vsub.f32 1.0, %v3967
  %v3999 = vsub.f32 1.0, %v3968
  %v4000 = vsub.f32 1.0, %v3969
  %v4001 = vsub.f32 1.0, %v3970
  %v4002 = vsub.f32 1.0, %v3971
  %v4003 = vsub.f32 1.0, %v3972
  %v4004 = vsub.f32 1.0, %v3973
  %v4005 = vsub.f32 1.0, %v3974
  %v4006 = vsub.f32 1.0, %v3975
  %v4007 = vsub.f32 1.0, %v3976
  %v4008 = vsub.f32 1.0, %v3977
  %v4009 = vsub.f32 1.0, %v3978
  %v4010 = vsub.f32 1.0, %v3979
  %v4011 = vsub.f32 1.0, %v3980
  %v4012 = vsub.f32 1.0, %v3981
  %v4013 = vsub.f32 1.0, %v3982
  %v4014 = vsub.f32 1.0, %v3983
  %v4015 = vsub.f32 1.0, %v3984
  %v4016 = vsub.f32 1.0, %v3985
  %v4017 = vsub.f32 1.0, %v3986
  %v4018 = vsub.f32 1.0, %v3987
  %v4019 = vsub.f32 1.0, %v3988
  %v4020 = vsub.f32 1.0, %v3989
  %v4021 = vsub.f32 1.0, %v3990
  %v4022 = vmax.f32 %v3991, 0.0
  %v4023 = vmax.f32 %v3992, 0.0
  %v4024 = vmax.f32 %v3993, 0.0
  %v4025 = vmax.f32 %v3994, 0.0
  %v4026 = vmax.f32 %v3995, 0.0
  %v4027 = vmax.f32 %v3996, 0.0
  %v4028 = vmax.f32 %v3997, 0.0
  %v4029 = vmax.f32 %v3998, 0.0
  %v4030 = vmax.f32 %v3999, 0.0
  %v4031 = vmax.f32 %v4000, 0.0
  %v4032 = vmax.f32 %v4001, 0.0
  %v4033 = vmax.f32 %v4002, 0.0
  %v4034 = vmax.f32 %v4003, 0.0
  %v4035 = vmax.f32 %v4004, 0.0
  %v4036 = vmax.f32 %v4005, 0.0
  %v4037 = vmax.f32 %v4006, 0.0
  %v4038 = vmax.f32 %v4007, 0.0
  %v4039 = vmax.f32 %v4008, 0.0
  %v4040 = vmax.f32 %v4009, 0.0
  %v4041 = vmax.f32 %v4010, 0.0
  %v4042 = vmax.f32 %v4011, 0.0
  %v4043 = vmax.f32 %v4012, 0.0
  %v4044 = vmax.f32 %v4013, 0.0
  %v4045 = vmax.f32 %v4014, 0.0
  %v4046 = vmax.f32 %v4015, 0.0
  %v4047 = vmax.f32 %v4016, 0.0
  %v4048 = vmax.f32 %v4017, 0.0
  %v4049 = vmax.f32 %v4018, 0.0
  %v4050 = vmax.f32 %v4019, 0.0
  %v4051 = vmax.f32 %v4020, 0.0
  %v4052 = vmax.f32 %v4021, 0.0
  %v4053 = vpack.c.bf16 %v4023, %v4022
  %v4054 = vpack.c.bf16 %v4025, %v4024
  %v4055 = vpack.c.bf16 %v4027, %v4026
  %v4056 = vpack.c.bf16 %v4029, %v4028
  %v4057 = vpack.c.bf16 %v4031, %v4030
  %v4058 = vpack.c.bf16 %v4033, %v4032
  %v4059 = vpack.c.bf16 %v4035, %v4034
  %v4060 = vpack.c.bf16 %v4037, %v4036
  %v4061 = vpack.c.bf16 %v4039, %v4038
  %v4062 = vpack.c.bf16 %v4041, %v4040
  %v4063 = vpack.c.bf16 %v4043, %v4042
  %v4064 = vpack.c.bf16 %v4045, %v4044
  %v4065 = vpack.c.bf16 %v4047, %v4046
  %v4066 = vpack.c.bf16 %v4049, %v4048
  %v4067 = vpack.c.bf16 %v4051, %v4050
  %v4068 = vpack.c.bf16 %v4052, %v4052
  %v4069 = vpack.c.bf16 %v1781, %v1781
  %vm4070 = vcmask 31744
  %v4072 = vsel %vm4070, %v4053, 0
  %v4075 = vsel %vm4070, %v4054, 0
  %v4078 = vsel %vm4070, %v4055, 0
  %v4081 = vsel %vm4070, %v4056, 0
  %v4084 = vsel %vm4070, %v4057, 0
  %v4087 = vsel %vm4070, %v4058, 0
  %v4090 = vsel %vm4070, %v4059, 0
  %v4093 = vsel %vm4070, %v4060, 0
  %v4096 = vsel %vm4070, %v4061, 0
  %v4099 = vsel %vm4070, %v4062, 0
  %v4102 = vsel %vm4070, %v4063, 0
  %v4105 = vsel %vm4070, %v4064, 0
  %v4108 = vsel %vm4070, %v4065, 0
  %v4111 = vsel %vm4070, %v4066, 0
  %v4114 = vsel %vm4070, %v4067, 0
  %v4117 = vsel %vm4070, %v4068, 0
  %vm4119 = vcmask 1041408
  %v4121 = vsel %vm4119, %v4069, 0
  %4123 = vmatprep.subr.bf16.mxu0 0
  %4124 = vmatpush1.bf16.msra.mxu0 %v4121
  %4125 = vmatprep.subr.bf16.mxu0 0
  %4126 = vmatpush1.bf16.msra.mxu0 0
  %4127 = vmatprep.subr.bf16.mxu0 0
  %4128 = vmatpush1.bf16.msra.mxu0 0
  %4129 = vmatprep.subr.bf16.mxu0 0
  %4130 = vmatpush1.bf16.msra.mxu0 0
  %4131 = vmatprep.subr.bf16.mxu0 0
  %4132 = vmatpush1.bf16.msra.mxu0 0
  %4133 = vmatprep.subr.bf16.mxu0 0
  %4134 = vmatpush1.bf16.msra.mxu0 0
  %4135 = vmatprep.subr.bf16.mxu0 0
  %4136 = vmatpush1.bf16.msra.mxu0 0
  %4137 = vmatprep.subr.bf16.mxu0 0
  %4138 = vmatpush1.bf16.msra.mxu0 0
  %4139 = vmatprep.subr.bf16.mxu0 0
  %4140 = vmatpush1.bf16.msra.mxu0 0
  %4141 = vmatprep.subr.bf16.mxu0 0
  %4142 = vmatpush1.bf16.msra.mxu0 0
  %4143 = vmatprep.subr.bf16.mxu0 0
  %4144 = vmatpush1.bf16.msra.mxu0 0
  %4145 = vmatprep.subr.bf16.mxu0 0
  %4146 = vmatpush1.bf16.msra.mxu0 0
  %4147 = vmatprep.subr.bf16.mxu0 0
  %4148 = vmatpush1.bf16.msra.mxu0 0
  %4149 = vmatprep.subr.bf16.mxu0 0
  %4150 = vmatpush1.bf16.msra.mxu0 0
  %4151 = vmatprep.subr.bf16.mxu0 0
  %4152 = vmatpush1.bf16.msra.mxu0 0
  %4153 = vmatprep.subr.bf16.mxu0 0
  %4154 = vmatpush1.bf16.msra.mxu0 0
  %4155 = vmatprep.mubr.bf16.mxu0 0
  %4156 = vmatmul.mubr.bf16.gmra.mrb[0].mxu0 %v4072
  %v4157 = vpop.f32.mrb[0].mxu0
  %v4158 = vadd.f32 0.0, %v4157
  %v4159 = vpop.f32.mrb[0].mxu0
  %v4160 = vpop.f32.mrb[0].mxu0
  %v4161 = vadd.f32 0.0, %v4160
  %v4162 = vpop.f32.mrb[0].mxu0
  %4163 = vmatprep.mubr.bf16.mxu0 0
  %4164 = vmatmul.mubr.bf16.gmra.mrb[0].mxu0 %v4075
  %v4165 = vpop.f32.mrb[0].mxu0
  %v4166 = vadd.f32 0.0, %v4165
  %v4167 = vpop.f32.mrb[0].mxu0
  %v4168 = vpop.f32.mrb[0].mxu0
  %v4169 = vadd.f32 0.0, %v4168
  %v4170 = vpop.f32.mrb[0].mxu0
  %4171 = vmatprep.mubr.bf16.mxu0 0
  %4172 = vmatmul.mubr.bf16.gmra.mrb[0].mxu0 %v4078
  %v4173 = vpop.f32.mrb[0].mxu0
  %v4174 = vadd.f32 0.0, %v4173
  %v4175 = vpop.f32.mrb[0].mxu0
  %v4176 = vpop.f32.mrb[0].mxu0
  %v4177 = vadd.f32 0.0, %v4176
  %v4178 = vpop.f32.mrb[0].mxu0
  %4179 = vmatprep.mubr.bf16.mxu0 0
  %4180 = vmatmul.mubr.bf16.gmra.mrb[0].mxu0 %v4081
  %v4181 = vpop.f32.mrb[0].mxu0
  %v4182 = vadd.f32 0.0, %v4181
  %v4183 = vpop.f32.mrb[0].mxu0
  %v4184 = vpop.f32.mrb[0].mxu0
  %v4185 = vadd.f32 0.0, %v4184
  %v4186 = vpop.f32.mrb[0].mxu0
  %4187 = vmatprep.mubr.bf16.mxu0 0
  %4188 = vmatmul.mubr.bf16.gmra.mrb[0].mxu0 %v4084
  %v4189 = vpop.f32.mrb[0].mxu0
  %v4190 = vadd.f32 0.0, %v4189
  %v4191 = vpop.f32.mrb[0].mxu0
  %v4192 = vpop.f32.mrb[0].mxu0
  %v4193 = vadd.f32 0.0, %v4192
  %v4194 = vpop.f32.mrb[0].mxu0
  %4195 = vmatprep.mubr.bf16.mxu0 0
  %4196 = vmatmul.mubr.bf16.gmra.mrb[0].mxu0 %v4087
  %v4197 = vpop.f32.mrb[0].mxu0
  %v4198 = vadd.f32 0.0, %v4197
  %v4199 = vpop.f32.mrb[0].mxu0
  %v4200 = vpop.f32.mrb[0].mxu0
  %v4201 = vadd.f32 0.0, %v4200
  %v4202 = vpop.f32.mrb[0].mxu0
  %4203 = vmatprep.mubr.bf16.mxu0 0
  %4204 = vmatmul.mubr.bf16.gmra.mrb[0].mxu0 %v4090
  %v4205 = vpop.f32.mrb[0].mxu0
  %v4206 = vadd.f32 0.0, %v4205
  %v4207 = vpop.f32.mrb[0].mxu0
  %v4208 = vpop.f32.mrb[0].mxu0
  %v4209 = vadd.f32 0.0, %v4208
  %v4210 = vpop.f32.mrb[0].mxu0
  %4211 = vmatprep.mubr.bf16.mxu0 0
  %4212 = vmatmul.mubr.bf16.gmra.mrb[0].mxu0 %v4093
  %v4213 = vpop.f32.mrb[0].mxu0
  %v4214 = vadd.f32 0.0, %v4213
  %v4215 = vpop.f32.mrb[0].mxu0
  %v4216 = vpop.f32.mrb[0].mxu0
  %v4217 = vadd.f32 0.0, %v4216
  %v4218 = vpop.f32.mrb[0].mxu0
  %4219 = vmatprep.mubr.bf16.mxu0 0
  %4220 = vmatmul.mubr.bf16.gmra.mrb[0].mxu0 %v4096
  %v4221 = vpop.f32.mrb[0].mxu0
  %v4222 = vadd.f32 0.0, %v4221
  %v4223 = vpop.f32.mrb[0].mxu0
  %v4224 = vpop.f32.mrb[0].mxu0
  %v4225 = vadd.f32 0.0, %v4224
  %v4226 = vpop.f32.mrb[0].mxu0
  %4227 = vmatprep.mubr.bf16.mxu0 0
  %4228 = vmatmul.mubr.bf16.gmra.mrb[0].mxu0 %v4099
  %v4229 = vpop.f32.mrb[0].mxu0
  %v4230 = vadd.f32 0.0, %v4229
  %v4231 = vpop.f32.mrb[0].mxu0
  %v4232 = vpop.f32.mrb[0].mxu0
  %v4233 = vadd.f32 0.0, %v4232
  %v4234 = vpop.f32.mrb[0].mxu0
  %4235 = vmatprep.mubr.bf16.mxu0 0
  %4236 = vmatmul.mubr.bf16.gmra.mrb[0].mxu0 %v4102
  %v4237 = vpop.f32.mrb[0].mxu0
  %v4238 = vadd.f32 0.0, %v4237
  %v4239 = vpop.f32.mrb[0].mxu0
  %v4240 = vpop.f32.mrb[0].mxu0
  %v4241 = vadd.f32 0.0, %v4240
  %v4242 = vpop.f32.mrb[0].mxu0
  %4243 = vmatprep.mubr.bf16.mxu0 0
  %4244 = vmatmul.mubr.bf16.gmra.mrb[0].mxu0 %v4105
  %v4245 = vpop.f32.mrb[0].mxu0
  %v4246 = vadd.f32 0.0, %v4245
  %v4247 = vpop.f32.mrb[0].mxu0
  %v4248 = vpop.f32.mrb[0].mxu0
  %v4249 = vadd.f32 0.0, %v4248
  %v4250 = vpop.f32.mrb[0].mxu0
  %4251 = vmatprep.mubr.bf16.mxu0 0
  %4252 = vmatmul.mubr.bf16.gmra.mrb[0].mxu0 %v4108
  %v4253 = vpop.f32.mrb[0].mxu0
  %v4254 = vadd.f32 0.0, %v4253
  %v4255 = vpop.f32.mrb[0].mxu0
  %v4256 = vpop.f32.mrb[0].mxu0
  %v4257 = vadd.f32 0.0, %v4256
  %v4258 = vpop.f32.mrb[0].mxu0
  %4259 = vmatprep.mubr.bf16.mxu0 0
  %4260 = vmatmul.mubr.bf16.gmra.mrb[0].mxu0 %v4111
  %v4261 = vpop.f32.mrb[0].mxu0
  %v4262 = vadd.f32 0.0, %v4261
  %v4263 = vpop.f32.mrb[0].mxu0
  %v4264 = vpop.f32.mrb[0].mxu0
  %v4265 = vadd.f32 0.0, %v4264
  %v4266 = vpop.f32.mrb[0].mxu0
  %4267 = vmatprep.mubr.bf16.mxu0 0
  %4268 = vmatmul.mubr.bf16.gmra.mrb[0].mxu0 %v4114
  %v4269 = vpop.f32.mrb[0].mxu0
  %v4270 = vadd.f32 0.0, %v4269
  %v4271 = vpop.f32.mrb[0].mxu0
  %v4272 = vpop.f32.mrb[0].mxu0
  %v4273 = vadd.f32 0.0, %v4272
  %v4274 = vpop.f32.mrb[0].mxu0
  %4275 = vmatprep.mubr.bf16.mxu0 0
  %4276 = vmatmul.mubr.bf16.gmra.mrb[0].mxu0 %v4117
  %v4277 = vpop.f32.mrb[0].mxu0
  %v4278 = vadd.f32 0.0, %v4277
  %v4279 = vpop.f32.mrb[0].mxu0
  %v4280 = vpop.f32.mrb[0].mxu0
  %v4281 = vpop.f32.mrb[0].mxu0
  %4282 = vdwg.mxu0
  %v4283 = vld [vmem:[%s7] sm:$0xf]
  %v4285 = vsel %vm4070, %v3774, 0
  %v4288 = vsel %vm4070, %v3775, 0
  %v4291 = vsel %vm4070, %v3776, 0
  %v4294 = vsel %vm4070, %v3777, 0
  %v4297 = vsel %vm4070, %v3778, 0
  %v4300 = vsel %vm4070, %v3779, 0
  %v4303 = vsel %vm4070, %v3780, 0
  %v4306 = vsel %vm4070, %v3781, 0
  %v4309 = vsel %vm4070, %v3782, 0
  %v4312 = vsel %vm4070, %v3783, 0
  %v4315 = vsel %vm4070, %v3784, 0
  %v4318 = vsel %vm4070, %v3785, 0
  %v4321 = vsel %vm4070, %v3786, 0
  %v4324 = vsel %vm4070, %v3787, 0
  %v4327 = vsel %vm4070, %v3788, 0
  %v4330 = vsel %vm4070, %v3789, 0
  %v4333 = vsel %vm4070, %v3790, 0
  %v4336 = vsel %vm4070, %v3791, 0
  %v4339 = vsel %vm4070, %v3792, 0
  %v4342 = vsel %vm4070, %v3793, 0
  %v4345 = vsel %vm4070, %v3794, 0
  %v4348 = vsel %vm4070, %v3795, 0
  %v4351 = vsel %vm4070, %v3796, 0
  %v4354 = vsel %vm4070, %v3797, 0
  %v4357 = vsel %vm4070, %v3798, 0
  %v4360 = vsel %vm4070, %v3799, 0
  %v4363 = vsel %vm4070, %v3800, 0
  %v4366 = vsel %vm4070, %v3801, 0
  %v4369 = vsel %vm4070, %v3802, 0
  %v4372 = vsel %vm4070, %v3803, 0
  %v4375 = vsel %vm4070, %v3804, 0
  %v4378 = vsel %vm2474, %v4283, 0
  %4380 = vmatprep.subr.mxu0 0.0
  %4381 = vmatpush1.msra.mxu0 %v4378
  %4382 = vmatprep.subr.mxu0 0.0
  %4383 = vmatpush1.msra.mxu0 0.0
  %4384 = vmatprep.subr.mxu0 0.0
  %4385 = vmatpush1.msra.mxu0 0.0
  %4386 = vmatprep.subr.mxu0 0.0
  %4387 = vmatpush1.msra.mxu0 0.0
  %4388 = vmatprep.subr.mxu0 0.0
  %4389 = vmatpush1.msra.mxu0 0.0
  %4390 = vmatprep.subr.mxu0 0.0
  %4391 = vmatpush1.msra.mxu0 0.0
  %4392 = vmatprep.subr.mxu0 0.0
  %4393 = vmatpush1.msra.mxu0 0.0
  %4394 = vmatprep.subr.mxu0 0.0
  %4395 = vmatpush1.msra.mxu0 0.0
  %4396 = vmatprep.subr.mxu0 0.0
  %4397 = vmatpush1.msra.mxu0 0.0
  %4398 = vmatprep.subr.mxu0 0.0
  %4399 = vmatpush1.msra.mxu0 0.0
  %4400 = vmatprep.subr.mxu0 0.0
  %4401 = vmatpush1.msra.mxu0 0.0
  %4402 = vmatprep.subr.mxu0 0.0
  %4403 = vmatpush1.msra.mxu0 0.0
  %4404 = vmatprep.subr.mxu0 0.0
  %4405 = vmatpush1.msra.mxu0 0.0
  %4406 = vmatprep.subr.mxu0 0.0
  %4407 = vmatpush1.msra.mxu0 0.0
  %4408 = vmatprep.subr.mxu0 0.0
  %4409 = vmatpush1.msra.mxu0 0.0
  %4410 = vmatprep.subr.mxu0 0.0
  %4411 = vmatpush1.msra.mxu0 0.0
  %4412 = vmatprep.subr.mxu0 0.0
  %4413 = vmatpush1.msra.mxu0 0.0
  %4414 = vmatprep.subr.mxu0 0.0
  %4415 = vmatpush1.msra.mxu0 0.0
  %4416 = vmatprep.subr.mxu0 0.0
  %4417 = vmatpush1.msra.mxu0 0.0
  %4418 = vmatprep.subr.mxu0 0.0
  %4419 = vmatpush1.msra.mxu0 0.0
  %4420 = vmatprep.subr.mxu0 0.0
  %4421 = vmatpush1.msra.mxu0 0.0
  %4422 = vmatprep.subr.mxu0 0.0
  %4423 = vmatpush1.msra.mxu0 0.0
  %4424 = vmatprep.subr.mxu0 0.0
  %4425 = vmatpush1.msra.mxu0 0.0
  %4426 = vmatprep.subr.mxu0 0.0
  %4427 = vmatpush1.msra.mxu0 0.0
  %4428 = vmatprep.subr.mxu0 0.0
  %4429 = vmatpush1.msra.mxu0 0.0
  %4430 = vmatprep.subr.mxu0 0.0
  %4431 = vmatpush1.msra.mxu0 0.0
  %4432 = vmatprep.subr.mxu0 0.0
  %4433 = vmatpush1.msra.mxu0 0.0
  %4434 = vmatprep.subr.mxu0 0.0
  %4435 = vmatpush1.msra.mxu0 0.0
  %4436 = vmatprep.subr.mxu0 0.0
  %4437 = vmatpush1.msra.mxu0 0.0
  %4438 = vmatprep.subr.mxu0 0.0
  %4439 = vmatpush1.msra.mxu0 0.0
  %4440 = vmatprep.subr.mxu0 0.0
  %4441 = vmatpush1.msra.mxu0 0.0
  %4442 = vmatprep.subr.mxu0 0.0
  %4443 = vmatpush1.msra.mxu0 0.0
  %4444 = vmatprep.mubr.f32.mxu0 0.0
  %4445 = vmatmul.mubr.f32.gmra.mrb[0].mxu0 %v4285
  %v4446 = vpop.f32.mrb[0].mxu0
  %v4447 = vadd.f32 0.0, %v4446
  %v4448 = vpop.f32.mrb[0].mxu0
  %4449 = vmatprep.mubr.f32.mxu0 0.0
  %4450 = vmatmul.mubr.f32.gmra.mrb[0].mxu0 %v4288
  %v4451 = vpop.f32.mrb[0].mxu0
  %v4452 = vadd.f32 0.0, %v4451
  %v4453 = vpop.f32.mrb[0].mxu0
  %4454 = vmatprep.mubr.f32.mxu0 0.0
  %4455 = vmatmul.mubr.f32.gmra.mrb[0].mxu0 %v4291
  %v4456 = vpop.f32.mrb[0].mxu0
  %v4457 = vadd.f32 0.0, %v4456
  %v4458 = vpop.f32.mrb[0].mxu0
  %4459 = vmatprep.mubr.f32.mxu0 0.0
  %4460 = vmatmul.mubr.f32.gmra.mrb[0].mxu0 %v4294
  %v4461 = vpop.f32.mrb[0].mxu0
  %v4462 = vadd.f32 0.0, %v4461
  %v4463 = vpop.f32.mrb[0].mxu0
  %4464 = vmatprep.mubr.f32.mxu0 0.0
  %4465 = vmatmul.mubr.f32.gmra.mrb[0].mxu0 %v4297
  %v4466 = vpop.f32.mrb[0].mxu0
  %v4467 = vadd.f32 0.0, %v4466
  %v4468 = vpop.f32.mrb[0].mxu0
  %4469 = vmatprep.mubr.f32.mxu0 0.0
  %4470 = vmatmul.mubr.f32.gmra.mrb[0].mxu0 %v4300
  %v4471 = vpop.f32.mrb[0].mxu0
  %v4472 = vadd.f32 0.0, %v4471
  %v4473 = vpop.f32.mrb[0].mxu0
  %4474 = vmatprep.mubr.f32.mxu0 0.0
  %4475 = vmatmul.mubr.f32.gmra.mrb[0].mxu0 %v4303
  %v4476 = vpop.f32.mrb[0].mxu0
  %v4477 = vadd.f32 0.0, %v4476
  %v4478 = vpop.f32.mrb[0].mxu0
  %4479 = vmatprep.mubr.f32.mxu0 0.0
  %4480 = vmatmul.mubr.f32.gmra.mrb[0].mxu0 %v4306
  %v4481 = vpop.f32.mrb[0].mxu0
  %v4482 = vadd.f32 0.0, %v4481
  %v4483 = vpop.f32.mrb[0].mxu0
  %4484 = vmatprep.mubr.f32.mxu0 0.0
  %4485 = vmatmul.mubr.f32.gmra.mrb[0].mxu0 %v4309
  %v4486 = vpop.f32.mrb[0].mxu0
  %v4487 = vadd.f32 0.0, %v4486
  %v4488 = vpop.f32.mrb[0].mxu0
  %4489 = vmatprep.mubr.f32.mxu0 0.0
  %4490 = vmatmul.mubr.f32.gmra.mrb[0].mxu0 %v4312
  %v4491 = vpop.f32.mrb[0].mxu0
  %v4492 = vadd.f32 0.0, %v4491
  %v4493 = vpop.f32.mrb[0].mxu0
  %4494 = vmatprep.mubr.f32.mxu0 0.0
  %4495 = vmatmul.mubr.f32.gmra.mrb[0].mxu0 %v4315
  %v4496 = vpop.f32.mrb[0].mxu0
  %v4497 = vadd.f32 0.0, %v4496
  %v4498 = vpop.f32.mrb[0].mxu0
  %4499 = vmatprep.mubr.f32.mxu0 0.0
  %4500 = vmatmul.mubr.f32.gmra.mrb[0].mxu0 %v4318
  %v4501 = vpop.f32.mrb[0].mxu0
  %v4502 = vadd.f32 0.0, %v4501
  %v4503 = vpop.f32.mrb[0].mxu0
  %4504 = vmatprep.mubr.f32.mxu0 0.0
  %4505 = vmatmul.mubr.f32.gmra.mrb[0].mxu0 %v4321
  %v4506 = vpop.f32.mrb[0].mxu0
  %v4507 = vadd.f32 0.0, %v4506
  %v4508 = vpop.f32.mrb[0].mxu0
  %4509 = vmatprep.mubr.f32.mxu0 0.0
  %4510 = vmatmul.mubr.f32.gmra.mrb[0].mxu0 %v4324
  %v4511 = vpop.f32.mrb[0].mxu0
  %v4512 = vadd.f32 0.0, %v4511
  %v4513 = vpop.f32.mrb[0].mxu0
  %4514 = vmatprep.mubr.f32.mxu0 0.0
  %4515 = vmatmul.mubr.f32.gmra.mrb[0].mxu0 %v4327
  %v4516 = vpop.f32.mrb[0].mxu0
  %v4517 = vadd.f32 0.0, %v4516
  %v4518 = vpop.f32.mrb[0].mxu0
  %4519 = vmatprep.mubr.f32.mxu0 0.0
  %4520 = vmatmul.mubr.f32.gmra.mrb[0].mxu0 %v4330
  %v4521 = vpop.f32.mrb[0].mxu0
  %v4522 = vadd.f32 0.0, %v4521
  %v4523 = vpop.f32.mrb[0].mxu0
  %4524 = vmatprep.mubr.f32.mxu0 0.0
  %4525 = vmatmul.mubr.f32.gmra.mrb[0].mxu0 %v4333
  %v4526 = vpop.f32.mrb[0].mxu0
  %v4527 = vadd.f32 0.0, %v4526
  %v4528 = vpop.f32.mrb[0].mxu0
  %4529 = vmatprep.mubr.f32.mxu0 0.0
  %4530 = vmatmul.mubr.f32.gmra.mrb[0].mxu0 %v4336
  %v4531 = vpop.f32.mrb[0].mxu0
  %v4532 = vadd.f32 0.0, %v4531
  %v4533 = vpop.f32.mrb[0].mxu0
  %4534 = vmatprep.mubr.f32.mxu0 0.0
  %4535 = vmatmul.mubr.f32.gmra.mrb[0].mxu0 %v4339
  %v4536 = vpop.f32.mrb[0].mxu0
  %v4537 = vadd.f32 0.0, %v4536
  %v4538 = vpop.f32.mrb[0].mxu0
  %4539 = vmatprep.mubr.f32.mxu0 0.0
  %4540 = vmatmul.mubr.f32.gmra.mrb[0].mxu0 %v4342
  %v4541 = vpop.f32.mrb[0].mxu0
  %v4542 = vadd.f32 0.0, %v4541
  %v4543 = vpop.f32.mrb[0].mxu0
  %4544 = vmatprep.mubr.f32.mxu0 0.0
  %4545 = vmatmul.mubr.f32.gmra.mrb[0].mxu0 %v4345
  %v4546 = vpop.f32.mrb[0].mxu0
  %v4547 = vadd.f32 0.0, %v4546
  %v4548 = vpop.f32.mrb[0].mxu0
  %4549 = vmatprep.mubr.f32.mxu0 0.0
  %4550 = vmatmul.mubr.f32.gmra.mrb[0].mxu0 %v4348
  %v4551 = vpop.f32.mrb[0].mxu0
  %v4552 = vadd.f32 0.0, %v4551
  %v4553 = vpop.f32.mrb[0].mxu0
  %4554 = vmatprep.mubr.f32.mxu0 0.0
  %4555 = vmatmul.mubr.f32.gmra.mrb[0].mxu0 %v4351
  %v4556 = vpop.f32.mrb[0].mxu0
  %v4557 = vadd.f32 0.0, %v4556
  %v4558 = vpop.f32.mrb[0].mxu0
  %4559 = vmatprep.mubr.f32.mxu0 0.0
  %4560 = vmatmul.mubr.f32.gmra.mrb[0].mxu0 %v4354
  %v4561 = vpop.f32.mrb[0].mxu0
  %v4562 = vadd.f32 0.0, %v4561
  %v4563 = vpop.f32.mrb[0].mxu0
  %4564 = vmatprep.mubr.f32.mxu0 0.0
  %4565 = vmatmul.mubr.f32.gmra.mrb[0].mxu0 %v4357
  %v4566 = vpop.f32.mrb[0].mxu0
  %v4567 = vadd.f32 0.0, %v4566
  %v4568 = vpop.f32.mrb[0].mxu0
  %4569 = vmatprep.mubr.f32.mxu0 0.0
  %4570 = vmatmul.mubr.f32.gmra.mrb[0].mxu0 %v4360
  %v4571 = vpop.f32.mrb[0].mxu0
  %v4572 = vadd.f32 0.0, %v4571
  %v4573 = vpop.f32.mrb[0].mxu0
  %4574 = vmatprep.mubr.f32.mxu0 0.0
  %4575 = vmatmul.mubr.f32.gmra.mrb[0].mxu0 %v4363
  %v4576 = vpop.f32.mrb[0].mxu0
  %v4577 = vadd.f32 0.0, %v4576
  %v4578 = vpop.f32.mrb[0].mxu0
  %4579 = vmatprep.mubr.f32.mxu0 0.0
  %4580 = vmatmul.mubr.f32.gmra.mrb[0].mxu0 %v4366
  %v4581 = vpop.f32.mrb[0].mxu0
  %v4582 = vadd.f32 0.0, %v4581
  %v4583 = vpop.f32.mrb[0].mxu0
  %4584 = vmatprep.mubr.f32.mxu0 0.0
  %4585 = vmatmul.mubr.f32.gmra.mrb[0].mxu0 %v4369
  %v4586 = vpop.f32.mrb[0].mxu0
  %v4587 = vadd.f32 0.0, %v4586
  %v4588 = vpop.f32.mrb[0].mxu0
  %4589 = vmatprep.mubr.f32.mxu0 0.0
  %4590 = vmatmul.mubr.f32.gmra.mrb[0].mxu0 %v4372
  %v4591 = vpop.f32.mrb[0].mxu0
  %v4592 = vadd.f32 0.0, %v4591
  %v4593 = vpop.f32.mrb[0].mxu0
  %4594 = vmatprep.mubr.f32.mxu0 0.0
  %4595 = vmatmul.mubr.f32.gmra.mrb[0].mxu0 %v4375
  %v4596 = vpop.f32.mrb[0].mxu0
  %v4597 = vadd.f32 0.0, %v4596
  %v4598 = vpop.f32.mrb[0].mxu0
  %4599 = vdwg.mxu0
  %v4600 = vmul.f32 %v4158, %v4447
  %v4601 = vmul.f32 %v4161, %v4452
  %v4602 = vmul.f32 %v4166, %v4457
  %v4603 = vmul.f32 %v4169, %v4462
  %v4604 = vmul.f32 %v4174, %v4467
  %v4605 = vmul.f32 %v4177, %v4472
  %v4606 = vmul.f32 %v4182, %v4477
  %v4607 = vmul.f32 %v4185, %v4482
  %v4608 = vmul.f32 %v4190, %v4487
  %v4609 = vmul.f32 %v4193, %v4492
  %v4610 = vmul.f32 %v4198, %v4497
  %v4611 = vmul.f32 %v4201, %v4502
  %v4612 = vmul.f32 %v4206, %v4507
  %v4613 = vmul.f32 %v4209, %v4512
  %v4614 = vmul.f32 %v4214, %v4517
  %v4615 = vmul.f32 %v4217, %v4522
  %v4616 = vmul.f32 %v4222, %v4527
  %v4617 = vmul.f32 %v4225, %v4532
  %v4618 = vmul.f32 %v4230, %v4537
  %v4619 = vmul.f32 %v4233, %v4542
  %v4620 = vmul.f32 %v4238, %v4547
  %v4621 = vmul.f32 %v4241, %v4552
  %v4622 = vmul.f32 %v4246, %v4557
  %v4623 = vmul.f32 %v4249, %v4562
  %v4624 = vmul.f32 %v4254, %v4567
  %v4625 = vmul.f32 %v4257, %v4572
  %v4626 = vmul.f32 %v4262, %v4577
  %v4627 = vmul.f32 %v4265, %v4582
  %v4628 = vmul.f32 %v4270, %v4587
  %v4629 = vmul.f32 %v4273, %v4592
  %v4630 = vmul.f32 %v4278, %v4597
  %v4631 = vpack.c.bf16 %v4601, %v4600
  %v4632 = vpack.c.bf16 %v4603, %v4602
  %v4633 = vpack.c.bf16 %v4605, %v4604
  %v4634 = vpack.c.bf16 %v4607, %v4606
  %v4635 = vpack.c.bf16 %v4609, %v4608
  %v4636 = vpack.c.bf16 %v4611, %v4610
  %v4637 = vpack.c.bf16 %v4613, %v4612
  %v4638 = vpack.c.bf16 %v4615, %v4614
  %v4639 = vpack.c.bf16 %v4617, %v4616
  %v4640 = vpack.c.bf16 %v4619, %v4618
  %v4641 = vpack.c.bf16 %v4621, %v4620
  %v4642 = vpack.c.bf16 %v4623, %v4622
  %v4643 = vpack.c.bf16 %v4625, %v4624
  %v4644 = vpack.c.bf16 %v4627, %v4626
  %v4645 = vpack.c.bf16 %v4629, %v4628
  %v4646 = vpack.c.bf16 %v4630, %v4630
  %v4647 = vld [vmem:[%s8] sm:$0xf]
  %v4648 = vld [vmem:[%s8 + $0x4] sm:$0xf]
  %v4649 = vld [vmem:[%s8 + $0x8] sm:$0xf]
  %v4650 = vld [vmem:[%s8 + $0xc] sm:$0xf]
  %v4651 = vld [vmem:[%s8 + $0x10] sm:$0xf]
  %v4652 = vld [vmem:[%s8 + $0x14] sm:$0xf]
  %v4653 = vld [vmem:[%s8 + $0x18] sm:$0xf]
  %v4654 = vld [vmem:[%s8 + $0x1c] sm:$0xf]
  %v4655 = vld [vmem:[%s8 + $0x20] sm:$0xf]
  %v4656 = vld [vmem:[%s8 + $0x24] sm:$0xf]
  %v4657 = vld [vmem:[%s8 + $0x28] sm:$0xf]
  %v4658 = vld [vmem:[%s8 + $0x2c] sm:$0xf]
  %v4659 = vld [vmem:[%s8 + $0x30] sm:$0xf]
  %v4660 = vld [vmem:[%s8 + $0x34] sm:$0xf]
  %v4661 = vld [vmem:[%s8 + $0x38] sm:$0xf]
  %v4662 = vld [vmem:[%s8 + $0x3c] sm:$0xf]
  %v4679 = vunpack.c.l.b16 %v4647
  %v4680 = vunpack.c.l.b16 %v4648
  %v4681 = vunpack.c.l.b16 %v4649
  %v4682 = vunpack.c.l.b16 %v4650
  %v4683 = vunpack.c.l.b16 %v4651
  %v4684 = vunpack.c.l.b16 %v4652
  %v4685 = vunpack.c.l.b16 %v4653
  %v4686 = vunpack.c.l.b16 %v4654
  %v4687 = vunpack.c.l.b16 %v4655
  %v4688 = vunpack.c.l.b16 %v4656
  %v4689 = vunpack.c.l.b16 %v4657
  %v4690 = vunpack.c.l.b16 %v4658
  %v4691 = vunpack.c.l.b16 %v4659
  %v4692 = vunpack.c.l.b16 %v4660
  %v4693 = vunpack.c.l.b16 %v4661
  %v4694 = vunpack.c.l.b16 %v4662
  %v4695 = vpack.c.b16 %v4680, %v4679
  %v4696 = vpack.c.b16 %v4682, %v4681
  %v4697 = vpack.c.b16 %v4684, %v4683
  %v4698 = vpack.c.b16 %v4686, %v4685
  %v4699 = vpack.c.b16 %v4688, %v4687
  %v4700 = vpack.c.b16 %v4690, %v4689
  %v4701 = vpack.c.b16 %v4692, %v4691
  %v4702 = vpack.c.b16 %v4694, %v4693
  %4711 = vmatprep.subr.bf16.mxu0 0
  %4712 = vmatpush1.bf16.msra.mxu0 %v4695
  %4713 = vmatprep.subr.bf16.mxu0 0
  %4714 = vmatpush1.bf16.msra.mxu0 %v4696
  %4715 = vmatprep.subr.bf16.mxu0 0
  %4716 = vmatpush1.bf16.msra.mxu0 %v4697
  %4717 = vmatprep.subr.bf16.mxu0 0
  %4718 = vmatpush1.bf16.msra.mxu0 %v4698
  %4719 = vmatprep.subr.bf16.mxu0 0
  %4720 = vmatpush1.bf16.msra.mxu0 %v4699
  %4721 = vmatprep.subr.bf16.mxu0 0
  %4722 = vmatpush1.bf16.msra.mxu0 %v4700
  %4723 = vmatprep.subr.bf16.mxu0 0
  %4724 = vmatpush1.bf16.msra.mxu0 %v4701
  %4725 = vmatprep.subr.bf16.mxu0 0
  %4726 = vmatpush1.bf16.msra.mxu0 %v4702
  %4727 = vmatprep.subr.bf16.mxu0 0
  %4728 = vmatpush1.bf16.msra.mxu0 0
  %4729 = vmatprep.subr.bf16.mxu0 0
  %4730 = vmatpush1.bf16.msra.mxu0 0
  %4731 = vmatprep.subr.bf16.mxu0 0
  %4732 = vmatpush1.bf16.msra.mxu0 0
  %4733 = vmatprep.subr.bf16.mxu0 0
  %4734 = vmatpush1.bf16.msra.mxu0 0
  %4735 = vmatprep.subr.bf16.mxu0 0
  %4736 = vmatpush1.bf16.msra.mxu0 0
  %4737 = vmatprep.subr.bf16.mxu0 0
  %4738 = vmatpush1.bf16.msra.mxu0 0
  %4739 = vmatprep.subr.bf16.mxu0 0
  %4740 = vmatpush1.bf16.msra.mxu0 0
  %4741 = vmatprep.subr.bf16.mxu0 0
  %4742 = vmatpush1.bf16.msra.mxu0 0
  %4743 = vmatprep.mubr.bf16.mxu0 0
  %4744 = vmatmul.mubr.bf16.gmra.mrb[0].mxu0 %v4631
  %v4745 = vpop.f32.mrb[0].mxu0
  %v4746 = vadd.f32 0.0, %v4745
  %v4747 = vpop.f32.mrb[0].mxu0
  %v4748 = vpop.f32.mrb[0].mxu0
  %v4749 = vadd.f32 0.0, %v4748
  %v4750 = vpop.f32.mrb[0].mxu0
  %4751 = vmatprep.mubr.bf16.mxu0 0
  %4752 = vmatmul.mubr.bf16.gmra.mrb[0].mxu0 %v4632
  %v4753 = vpop.f32.mrb[0].mxu0
  %v4754 = vadd.f32 0.0, %v4753
  %v4755 = vpop.f32.mrb[0].mxu0
  %v4756 = vpop.f32.mrb[0].mxu0
  %v4757 = vadd.f32 0.0, %v4756
  %v4758 = vpop.f32.mrb[0].mxu0
  %4759 = vmatprep.mubr.bf16.mxu0 0
  %4760 = vmatmul.mubr.bf16.gmra.mrb[0].mxu0 %v4633
  %v4761 = vpop.f32.mrb[0].mxu0
  %v4762 = vadd.f32 0.0, %v4761
  %v4763 = vpop.f32.mrb[0].mxu0
  %v4764 = vpop.f32.mrb[0].mxu0
  %v4765 = vadd.f32 0.0, %v4764
  %v4766 = vpop.f32.mrb[0].mxu0
  %4767 = vmatprep.mubr.bf16.mxu0 0
  %4768 = vmatmul.mubr.bf16.gmra.mrb[0].mxu0 %v4634
  %v4769 = vpop.f32.mrb[0].mxu0
  %v4770 = vadd.f32 0.0, %v4769
  %v4771 = vpop.f32.mrb[0].mxu0
  %v4772 = vpop.f32.mrb[0].mxu0
  %v4773 = vadd.f32 0.0, %v4772
  %v4774 = vpop.f32.mrb[0].mxu0
  %4775 = vmatprep.mubr.bf16.mxu0 0
  %4776 = vmatmul.mubr.bf16.gmra.mrb[0].mxu0 %v4635
  %v4777 = vpop.f32.mrb[0].mxu0
  %v4778 = vadd.f32 0.0, %v4777
  %v4779 = vpop.f32.mrb[0].mxu0
  %v4780 = vpop.f32.mrb[0].mxu0
  %v4781 = vadd.f32 0.0, %v4780
  %v4782 = vpop.f32.mrb[0].mxu0
  %4783 = vmatprep.mubr.bf16.mxu0 0
  %4784 = vmatmul.mubr.bf16.gmra.mrb[0].mxu0 %v4636
  %v4785 = vpop.f32.mrb[0].mxu0
  %v4786 = vadd.f32 0.0, %v4785
  %v4787 = vpop.f32.mrb[0].mxu0
  %v4788 = vpop.f32.mrb[0].mxu0
  %v4789 = vadd.f32 0.0, %v4788
  %v4790 = vpop.f32.mrb[0].mxu0
  %4791 = vmatprep.mubr.bf16.mxu0 0
  %4792 = vmatmul.mubr.bf16.gmra.mrb[0].mxu0 %v4637
  %v4793 = vpop.f32.mrb[0].mxu0
  %v4794 = vadd.f32 0.0, %v4793
  %v4795 = vpop.f32.mrb[0].mxu0
  %v4796 = vpop.f32.mrb[0].mxu0
  %v4797 = vadd.f32 0.0, %v4796
  %v4798 = vpop.f32.mrb[0].mxu0
  %4799 = vmatprep.mubr.bf16.mxu0 0
  %4800 = vmatmul.mubr.bf16.gmra.mrb[0].mxu0 %v4638
  %v4801 = vpop.f32.mrb[0].mxu0
  %v4802 = vadd.f32 0.0, %v4801
  %v4803 = vpop.f32.mrb[0].mxu0
  %v4804 = vpop.f32.mrb[0].mxu0
  %v4805 = vadd.f32 0.0, %v4804
  %v4806 = vpop.f32.mrb[0].mxu0
  %4807 = vmatprep.mubr.bf16.mxu0 0
  %4808 = vmatmul.mubr.bf16.gmra.mrb[0].mxu0 %v4639
  %v4809 = vpop.f32.mrb[0].mxu0
  %v4810 = vadd.f32 0.0, %v4809
  %v4811 = vpop.f32.mrb[0].mxu0
  %v4812 = vpop.f32.mrb[0].mxu0
  %v4813 = vadd.f32 0.0, %v4812
  %v4814 = vpop.f32.mrb[0].mxu0
  %4815 = vmatprep.mubr.bf16.mxu0 0
  %4816 = vmatmul.mubr.bf16.gmra.mrb[0].mxu0 %v4640
  %v4817 = vpop.f32.mrb[0].mxu0
  %v4818 = vadd.f32 0.0, %v4817
  %v4819 = vpop.f32.mrb[0].mxu0
  %v4820 = vpop.f32.mrb[0].mxu0
  %v4821 = vadd.f32 0.0, %v4820
  %v4822 = vpop.f32.mrb[0].mxu0
  %4823 = vmatprep.mubr.bf16.mxu0 0
  %4824 = vmatmul.mubr.bf16.gmra.mrb[0].mxu0 %v4641
  %v4825 = vpop.f32.mrb[0].mxu0
  %v4826 = vadd.f32 0.0, %v4825
  %v4827 = vpop.f32.mrb[0].mxu0
  %v4828 = vpop.f32.mrb[0].mxu0
  %v4829 = vadd.f32 0.0, %v4828
  %v4830 = vpop.f32.mrb[0].mxu0
  %4831 = vmatprep.mubr.bf16.mxu0 0
  %4832 = vmatmul.mubr.bf16.gmra.mrb[0].mxu0 %v4642
  %v4833 = vpop.f32.mrb[0].mxu0
  %v4834 = vadd.f32 0.0, %v4833
  %v4835 = vpop.f32.mrb[0].mxu0
  %v4836 = vpop.f32.mrb[0].mxu0
  %v4837 = vadd.f32 0.0, %v4836
  %v4838 = vpop.f32.mrb[0].mxu0
  %4839 = vmatprep.mubr.bf16.mxu0 0
  %4840 = vmatmul.mubr.bf16.gmra.mrb[0].mxu0 %v4643
  %v4841 = vpop.f32.mrb[0].mxu0
  %v4842 = vadd.f32 0.0, %v4841
  %v4843 = vpop.f32.mrb[0].mxu0
  %v4844 = vpop.f32.mrb[0].mxu0
  %v4845 = vadd.f32 0.0, %v4844
  %v4846 = vpop.f32.mrb[0].mxu0
  %4847 = vmatprep.mubr.bf16.mxu0 0
  %4848 = vmatmul.mubr.bf16.gmra.mrb[0].mxu0 %v4644
  %v4849 = vpop.f32.mrb[0].mxu0
  %v4850 = vadd.f32 0.0, %v4849
  %v4851 = vpop.f32.mrb[0].mxu0
  %v4852 = vpop.f32.mrb[0].mxu0
  %v4853 = vadd.f32 0.0, %v4852
  %v4854 = vpop.f32.mrb[0].mxu0
  %4855 = vmatprep.mubr.bf16.mxu0 0
  %4856 = vmatmul.mubr.bf16.gmra.mrb[0].mxu0 %v4645
  %v4857 = vpop.f32.mrb[0].mxu0
  %v4858 = vadd.f32 0.0, %v4857
  %v4859 = vpop.f32.mrb[0].mxu0
  %v4860 = vpop.f32.mrb[0].mxu0
  %v4861 = vadd.f32 0.0, %v4860
  %v4862 = vpop.f32.mrb[0].mxu0
  %4863 = vmatprep.mubr.bf16.mxu0 0
  %4864 = vmatmul.mubr.bf16.gmra.mrb[0].mxu0 %v4646
  %v4865 = vpop.f32.mrb[0].mxu0
  %v4866 = vadd.f32 0.0, %v4865
  %v4867 = vpop.f32.mrb[0].mxu0
  %v4868 = vpop.f32.mrb[0].mxu0
  %v4869 = vpop.f32.mrb[0].mxu0
  %4870 = vdwg.mxu0
  %4871 = vst.msk [vmem:[%s18] sm:$0xff] %vm3400, %v4746
  %4872 = vst.msk [vmem:[%s18 + $0x8] sm:$0xff] %vm3400, %v4749
  %4873 = vst.msk [vmem:[%s18 + $0x10] sm:$0xff] %vm3400, %v4754
  %4874 = vst.msk [vmem:[%s18 + $0x18] sm:$0xff] %vm3400, %v4757
  %4875 = vst.msk [vmem:[%s18 + $0x20] sm:$0xff] %vm3400, %v4762
  %4876 = vst.msk [vmem:[%s18 + $0x28] sm:$0xff] %vm3400, %v4765
  %4877 = vst.msk [vmem:[%s18 + $0x30] sm:$0xff] %vm3400, %v4770
  %4878 = vst.msk [vmem:[%s18 + $0x38] sm:$0xff] %vm3400, %v4773
  %4879 = vst.msk [vmem:[%s18 + $0x40] sm:$0xff] %vm3400, %v4778
  %4880 = vst.msk [vmem:[%s18 + $0x48] sm:$0xff] %vm3400, %v4781
  %4881 = vst.msk [vmem:[%s18 + $0x50] sm:$0xff] %vm3400, %v4786
  %4882 = vst.msk [vmem:[%s18 + $0x58] sm:$0xff] %vm3400, %v4789
  %4883 = vst.msk [vmem:[%s18 + $0x60] sm:$0xff] %vm3400, %v4794
  %4884 = vst.msk [vmem:[%s18 + $0x68] sm:$0xff] %vm3400, %v4797
  %4885 = vst.msk [vmem:[%s18 + $0x70] sm:$0xff] %vm3400, %v4802
  %4886 = vst.msk [vmem:[%s18 + $0x78] sm:$0xff] %vm3400, %v4805
  %4887 = vst.msk [vmem:[%s18 + $0x80] sm:$0xff] %vm3400, %v4810
  %4888 = vst.msk [vmem:[%s18 + $0x88] sm:$0xff] %vm3400, %v4813
  %4889 = vst.msk [vmem:[%s18 + $0x90] sm:$0xff] %vm3400, %v4818
  %4890 = vst.msk [vmem:[%s18 + $0x98] sm:$0xff] %vm3400, %v4821
  %4891 = vst.msk [vmem:[%s18 + $0xa0] sm:$0xff] %vm3400, %v4826
  %4892 = vst.msk [vmem:[%s18 + $0xa8] sm:$0xff] %vm3400, %v4829
  %4893 = vst.msk [vmem:[%s18 + $0xb0] sm:$0xff] %vm3400, %v4834
  %4894 = vst.msk [vmem:[%s18 + $0xb8] sm:$0xff] %vm3400, %v4837
  %4895 = vst.msk [vmem:[%s18 + $0xc0] sm:$0xff] %vm3400, %v4842
  %4896 = vst.msk [vmem:[%s18 + $0xc8] sm:$0xff] %vm3400, %v4845
  %4897 = vst.msk [vmem:[%s18 + $0xd0] sm:$0xff] %vm3400, %v4850
  %4898 = vst.msk [vmem:[%s18 + $0xd8] sm:$0xff] %vm3400, %v4853
  %4899 = vst.msk [vmem:[%s18 + $0xe0] sm:$0xff] %vm3400, %v4858
  %4900 = vst.msk [vmem:[%s18 + $0xe8] sm:$0xff] %vm3400, %v4861
  %4901 = vst.msk [vmem:[%s18 + $0xf0] sm:$0x1f] %vm3431, %v4866
  %v4902 = vld [vmem:[%s13] sm:$0x1f]
  %v4903 = vld [vmem:[%s14] sm:$0x1]
  %v4905 = vlaneseq
  %v4906 = vshrl.u32 %v4905, 7
  %v4907 = vsub.s32 0, %v4906
  %v4908 = vrot.slane %v4903, %v4907
  %v4910 = vmul.f32 %v4902, %v4908
  %vm4911 = vcmask 12288
  %4912 = vst.msk [vmem:[%s19] sm:$0x1f] %vm4911, %v4910
  %vm4913 = vcmask 4096
  %4914 = vst.msk [vmem:[%s20] sm:$0x1f] %vm4913, 0.9999092
  // Predicated region
  $region62: #{_first_frame_pipeline.1} parent=0 // pred_check
    _
  $region63: #{_first_frame_pipeline.1} parent=0 // pred_check_branch
    %4916 = sbr.rel (0) target = $region65
  $region64: #{_first_frame_pipeline.1} parent=0 // pred_region
    _
  $region65: #{_first_frame_pipeline.1} parent=0 // pred_fallthru
    _
  // Predicated region
  $region66: #{_first_frame_pipeline.1} parent=0 // pred_check
    _
  $region67: #{_first_frame_pipeline.1} parent=0 // pred_check_branch
    %4918 = sbr.rel (0) target = $region69
  $region68: #{_first_frame_pipeline.1} parent=0 // pred_region
    _
  $region69: #{_first_frame_pipeline.1} parent=0 // pred_fallthru
    _
  // Predicated region
  $region70: #{_first_frame_pipeline.1} parent=0 // pred_check
    _
  $region71: #{_first_frame_pipeline.1} parent=0 // pred_check_branch
    %4920 = sbr.rel (0) target = $region73
  $region72: #{_first_frame_pipeline.1} parent=0 // pred_region
    _
  $region73: #{_first_frame_pipeline.1} parent=0 // pred_fallthru
    _
  // Predicated region
  $region74: #{_first_frame_pipeline.1} parent=0 // pred_check
    _
  $region75: #{_first_frame_pipeline.1} parent=0 // pred_check_branch
    %4922 = sbr.rel (0) target = $region77
  $region76: #{_first_frame_pipeline.1} parent=0 // pred_region
    _
  $region77: #{_first_frame_pipeline.1} parent=0 // pred_fallthru
    _
  // Predicated region
  $region78: #{_first_frame_pipeline.1} parent=0 // pred_check
    _
  $region79: #{_first_frame_pipeline.1} parent=0 // pred_check_branch
    %4924 = sbr.rel (0) target = $region81
  $region80: #{_first_frame_pipeline.1} parent=0 // pred_region
    _
  $region81: #{_first_frame_pipeline.1} parent=0 // pred_fallthru
    _
  // Predicated region
  $region82: #{_first_frame_pipeline.1} parent=0 // pred_check
    _
  $region83: #{_first_frame_pipeline.1} parent=0 // pred_check_branch
    %4926 = sbr.rel (0) target = $region85
  $region84: #{_first_frame_pipeline.1} parent=0 // pred_region
    _
  $region85: #{_first_frame_pipeline.1} parent=0 // pred_fallthru
    _
  // Predicated region
  $region86: #{_first_frame_pipeline.1} parent=0 // pred_check
    _
  $region87: #{_first_frame_pipeline.1} parent=0 // pred_check_branch
    %4928 = sbr.rel (0) target = $region89
  $region88: #{_first_frame_pipeline.1} parent=0 // pred_region
    _
  $region89: #{_first_frame_pipeline.1} parent=0 // pred_fallthru
    _
  // Predicated region
  $region90: #{_first_frame_pipeline.1} parent=0 // pred_check
    _
  $region91: #{_first_frame_pipeline.1} parent=0 // pred_check_branch
    %4930 = sbr.rel (0) target = $region93
  $region92: #{_first_frame_pipeline.1} parent=0 // pred_region
    _
  $region93: #{_first_frame_pipeline.1} parent=0 // pred_fallthru
    _
  // Predicated region
  $region94: #{_first_frame_pipeline.1} parent=0 // pred_check
    _
  $region95: #{_first_frame_pipeline.1} parent=0 // pred_check_branch
    %4932 = sbr.rel (0) target = $region97
  $region96: #{_first_frame_pipeline.1} parent=0 // pred_region
    _
  $region97: #{_first_frame_pipeline.1} parent=0 // pred_fallthru
    _
  // Predicated region
  $region98: #{_first_frame_pipeline.1} parent=0 // pred_check
    _
  $region99: #{_first_frame_pipeline.1} parent=0 // pred_check_branch
    %4934 = sbr.rel (0) target = $region101
  $region100: #{_first_frame_pipeline.1} parent=0 // pred_region
    _
  $region101: #{_first_frame_pipeline.1} parent=0 // pred_fallthru
    _
  // Predicated region
  $region102: #{_first_frame_pipeline.1} parent=0 // pred_check
    _
  $region103: #{_first_frame_pipeline.1} parent=0 // pred_check_branch
    %4936 = sbr.rel (0) target = $region105
  $region104: #{_first_frame_pipeline.1} parent=0 // pred_region
    _
  $region105: #{_first_frame_pipeline.1} parent=0 // pred_fallthru
    _
  // Predicated region
  $region106: #{_first_frame_pipeline.1} parent=0 // pred_check
    _
  $region107: #{_first_frame_pipeline.1} parent=0 // pred_check_branch
    %4938 = sbr.rel (0) target = $region109
  $region108: #{_first_frame_pipeline.1} parent=0 // pred_region
    _
  $region109: #{_first_frame_pipeline.1} parent=0 // pred_fallthru
    _

</llo_original>
